<compile_context>
chip_gen: v7x
topology: tpu7x:2x2x1
jax: 0.10.0
libtpu: 0.0.40
codegen_flags: <defaults>
</compile_context>

<pallas_src>
import jax
import jax.numpy as jnp
from jax.experimental import pallas as pl
from jax.experimental.pallas import tpu as pltpu

# Fixed ConvModel geometry (32x32x3 input, implied by fc1 = Linear(32*8*8, 128)).
H1, W1 = 32, 32            # conv1 spatial
C_IN, C1, C2 = 3, 16, 32   # channel counts (real, no padding to 128)
H2, W2 = 16, 16            # after pool1
H3, W3 = 8, 8              # after pool2
K1 = 32                    # conv1 packed-K (9*3 = 27 real taps*cin, padded to 32 lanes)
K2 = 9 * C1                # conv2 packed-K = 144 (built in-kernel)
HALO = 24                  # zero rows above/below the flat pooled-conv1 scratch
FC_K = H3 * W3 * C2        # 2048 real fc1 contraction size
FC_H = 128                 # fc1 width
FC_OUT = 10


# ----------------------------------------------------------------------------
# Fused conv1 -> relu -> pool -> conv2 -> relu -> pool   (one image per grid step)
# ----------------------------------------------------------------------------
def _fused_conv_kernel(p1_ref, w1_ref, b1_ref, w2_ref, b2_ref, o_ref,
                       pool1_s, a1_s, pool2_s):
    """p1_ref : (1, 1024, 32)  pre-packed conv1 im2col, lanes = (dy, dx, cin), 27 real
       w1_ref : (32, 16)       conv1 weight, rows = (dy, dx, cin)
       b1_ref : (1, 16)
       w2_ref : (144, 32)      conv2 weight, rows = (dy, dx, cin)
       b2_ref : (1, 32)
       o_ref  : (1, 64, 32)    pooled conv2 output, rows = 8*h + w, lanes = cout
       pool1_s: (512, 16) VMEM  pool1 horizontal-pair staging
       a1_s   : (304, 16) VMEM  flat pooled conv1 activation with 24 zero halo rows
       pool2_s: (128, 32) VMEM  pool2 horizontal-pair staging
    """
    # ---- conv1 + bias + ReLU: a single packed-K matmul on the MXU ----
    y1 = jnp.dot(p1_ref[0], w1_ref[...], preferred_element_type=jnp.float32)
    y1 = jnp.maximum(y1 + b1_ref[...], 0.0)                       # (1024, 16)

    # ---- 2x2 max pool, stride 2: vertical pairs via reshape, horizontal pairs via
    #      stride-2 VMEM reads of the staging scratch. ----
    y1v = y1.reshape(H2, 2, W1, C1)
    pool1_s[...] = jnp.maximum(y1v[:, 0], y1v[:, 1]).reshape(H2 * W1, C1)
    a1 = jnp.maximum(pool1_s[pl.ds(0, H2 * W2, stride=2)],
                     pool1_s[pl.ds(1, H2 * W2, stride=2)])        # (256, 16), rows 16h+w

    # ---- stage a1 into the zero-halo flat scratch (halo rows = conv2 vertical padding) ----
    a1_s[pl.ds(0, HALO), :] = jnp.zeros((HALO, C1), jnp.float32)
    a1_s[pl.ds(HALO + H2 * W2, HALO), :] = jnp.zeros((HALO, C1), jnp.float32)
    a1_s[pl.ds(HALO, H2 * W2), :] = a1

    # ---- conv2: build the packed (256, 144) im2col patch in-VMEM, one MXU matmul ----
    col = jax.lax.broadcasted_iota(jnp.int32, (H2 * W2, 1), 0) % W2
    not_left, not_right = col > 0, col < (W2 - 1)
    taps = []
    for k in range(9):
        dy, dx = k // 3, k % 3
        d = W2 * (dy - 1) + (dx - 1)                  # flat row shift of this tap
        t = a1_s[pl.ds(HALO + d, H2 * W2), :]         # (256, 16) sublane-shifted view
        if dx == 0:                                   # horizontal zero-padding masks
            t = jnp.where(not_left, t, 0.0)
        elif dx == 2:
            t = jnp.where(not_right, t, 0.0)
        taps.append(t)
    p2 = jnp.concatenate(taps, axis=-1)               # (256, 144)
    y2 = jnp.dot(p2, w2_ref[...], preferred_element_type=jnp.float32)
    y2 = jnp.maximum(y2 + b2_ref[...], 0.0)           # (256, 32)

    # ---- pool2 -> (64, 32), rows = 8*h + w ----
    y2v = y2.reshape(H3, 2, W2, C2)
    pool2_s[...] = jnp.maximum(y2v[:, 0], y2v[:, 1]).reshape(H3 * W2, C2)
    a2 = jnp.maximum(pool2_s[pl.ds(0, H3 * W3, stride=2)],
                     pool2_s[pl.ds(1, H3 * W3, stride=2)])        # (64, 32)
    o_ref[...] = a2.reshape(1, H3 * W3, C2)


def fused_convs(p1, c1w, c1b, c2w, c2b):
    n = p1.shape[0]
    return pl.pallas_call(
        _fused_conv_kernel,
        out_shape=jax.ShapeDtypeStruct((n, H3 * W3, C2), jnp.float32),
        grid_spec=pltpu.PrefetchScalarGridSpec(
            num_scalar_prefetch=0,
            grid=(n,),
            in_specs=[
                pl.BlockSpec((1, H1 * W1, K1), lambda i: (i, 0, 0)),
                pl.BlockSpec((K1, C1), lambda i: (0, 0)),   # weights: constant index map,
                pl.BlockSpec((1, C1), lambda i: (0, 0)),    # VMEM-resident across steps
                pl.BlockSpec((K2, C2), lambda i: (0, 0)),
                pl.BlockSpec((1, C2), lambda i: (0, 0)),
            ],
            out_specs=pl.BlockSpec((1, H3 * W3, C2), lambda i: (i, 0, 0)),
            scratch_shapes=[
                pltpu.VMEM((H2 * W1, C1), jnp.float32),
                pltpu.VMEM((H2 * W2 + 2 * HALO, C1), jnp.float32),
                pltpu.VMEM((H3 * W2, C2), jnp.float32),
            ],
        ),
        compiler_params=pltpu.CompilerParams(
            dimension_semantics=("parallel",)),   # v7x: one image per TensorCore
    )(p1, c1w, c1b, c2w, c2b)


# ----------------------------------------------------------------------------
# Fused fc1(+ReLU) + fc2  (whole batch at once, weights fully VMEM resident)
# ----------------------------------------------------------------------------
def _mlp_kernel(x_ref, w1_ref, b1_ref, w2_ref, b2_ref, o_ref):
    h = jnp.dot(x_ref[...], w1_ref[...], preferred_element_type=jnp.float32)
    h = jnp.maximum(h + b1_ref[...], 0.0)
    o_ref[...] = jnp.dot(h, w2_ref[...], preferred_element_type=jnp.float32) + b2_ref[...]


def mlp_head(x, w1, b1, w2, b2):
    n, k = x.shape
    return pl.pallas_call(
        _mlp_kernel,
        out_shape=jax.ShapeDtypeStruct((n, FC_H), jnp.float32),
        grid_spec=pltpu.PrefetchScalarGridSpec(
            num_scalar_prefetch=0,
            grid=(1,),
            in_specs=[
                pl.BlockSpec((n, k), lambda i: (0, 0)),
                pl.BlockSpec((k, FC_H), lambda i: (0, 0)),
                pl.BlockSpec((1, FC_H), lambda i: (0, 0)),
                pl.BlockSpec((FC_H, FC_H), lambda i: (0, 0)),
                pl.BlockSpec((1, FC_H), lambda i: (0, 0)),
            ],
            out_specs=pl.BlockSpec((n, FC_H), lambda i: (0, 0)),
        ),
        compiler_params=pltpu.CompilerParams(
            dimension_semantics=("arbitrary",)),
    )(x, w1, b1, w2, b2)


# ----------------------------------------------------------------------------
# Parameters (PyTorch-equivalent layout) and one-time kernel-friendly re-layout
# ----------------------------------------------------------------------------
def init_params(key):
    ks = jax.random.split(key, 8)
    return {
        "conv1_w": jax.random.normal(ks[0], (16, 3, 3, 3), jnp.float32) * 0.1,
        "conv1_b": jax.random.normal(ks[1], (16,), jnp.float32) * 0.01,
        "conv2_w": jax.random.normal(ks[2], (32, 16, 3, 3), jnp.float32) * 0.05,
        "conv2_b": jax.random.normal(ks[3], (32,), jnp.float32) * 0.01,
        # fc weights stored in "x @ W" layout; fc1 rows follow PyTorch's NCHW flatten order.
        "fc1_w":   jax.random.normal(ks[4], (32 * 8 * 8, 128), jnp.float32) * 0.02,
        "fc1_b":   jax.random.normal(ks[5], (128,), jnp.float32) * 0.01,
        "fc2_w":   jax.random.normal(ks[6], (128, 10), jnp.float32) * 0.05,
        "fc2_b":   jax.random.normal(ks[7], (10,), jnp.float32) * 0.01,
    }


def prepare_params(p):
    """One-time re-layout of the weights into the packed-K kernel form."""
    def pack_conv(w_oihw, k_pad):
        cout, cin = w_oihw.shape[0], w_oihw.shape[1]
        w = jnp.transpose(w_oihw, (2, 3, 1, 0)).reshape(9 * cin, cout)  # rows = (dy, dx, ci)
        return jnp.pad(w, ((0, k_pad - 9 * cin), (0, 0)))

    # fc1 rows are (c, h, w) in PyTorch's NCHW flatten; the conv kernel emits (h, w, c).
    f1w = p["fc1_w"].reshape(C2, H3, W3, FC_H)
    f1w = jnp.transpose(f1w, (1, 2, 0, 3)).reshape(FC_K, FC_H)          # (2048, 128)

    return {
        "c1w": pack_conv(p["conv1_w"], K1),               # (32, 16)
        "c1b": p["conv1_b"].reshape(1, C1),
        "c2w": pack_conv(p["conv2_w"], K2),               # (144, 32)
        "c2b": p["conv2_b"].reshape(1, C2),
        "f1w": f1w,
        "f1b": p["fc1_b"].reshape(1, FC_H),
        # fc2 output padded to a full 128-lane store; sliced to 10 outside the kernel.
        "f2w": jnp.pad(p["fc2_w"], ((0, 0), (0, FC_H - FC_OUT))),
        "f2b": jnp.pad(p["fc2_b"], (0, FC_H - FC_OUT)).reshape(1, FC_H),
    }


@jax.jit
def conv_model_forward(x_nchw, prep):
    n = x_nchw.shape[0]
    x = jnp.transpose(x_nchw, (0, 2, 3, 1)).astype(jnp.float32)         # (N, 32, 32, 3)
    xp = jnp.pad(x, ((0, 0), (1, 1), (1, 1), (0, 0)))                   # conv1 halo
    # Pre-packed conv1 im2col: lanes ordered (dy, dx, cin), 27 real -> padded to 32.
    taps = [xp[:, dy:dy + H1, dx:dx + W1, :] for dy in range(3) for dx in range(3)]
    p1 = jnp.concatenate(taps, axis=-1).reshape(n, H1 * W1, 9 * C_IN)
    p1 = jnp.pad(p1, ((0, 0), (0, 0), (0, K1 - 9 * C_IN)))              # (N, 1024, 32)

    a2 = fused_convs(p1, prep["c1w"], prep["c1b"], prep["c2w"], prep["c2b"])  # (N, 64, 32)
    flat = a2.reshape(n, FC_K)                       # contiguous == (h, w, c) flatten, free
    logits = mlp_head(flat, prep["f1w"], prep["f1b"], prep["f2w"], prep["f2b"])
    return logits[:, :FC_OUT]


# ----------------------------------------------------------------------------
# Pure-JAX reference (sanity check only)
# ----------------------------------------------------------------------------
def reference_forward(x_nchw, params):
    hp = jax.lax.Precision.HIGHEST

    def conv(x, w, b):
        y = jax.lax.conv_general_dilated(
            x, w, window_strides=(1, 1), padding="SAME",
            dimension_numbers=("NCHW", "OIHW", "NCHW"), precision=hp)
        return jax.nn.relu(y + b[None, :, None, None])

    def pool(x):
        return jax.lax.reduce_window(
            x, -jnp.inf, jax.lax.max, (1, 1, 2, 2), (1, 1, 2, 2), "VALID")

    x = pool(conv(x_nchw, params["conv1_w"], params["conv1_b"]))
    x = pool(conv(x, params["conv2_w"], params["conv2_b"]))
    x = x.reshape(x.shape[0], -1)
    x = jax.nn.relu(jnp.dot(x, params["fc1_w"], precision=hp) + params["fc1_b"])
    return jnp.dot(x, params["fc2_w"], precision=hp) + params["fc2_b"]


if __name__ == "__main__":
    key = jax.random.PRNGKey(0)
    k_x, k_p = jax.random.split(key)

    # Input consistent with fc1 = Linear(32*8*8, 128): batch=2, 3 channels, 32x32 (NCHW).
    x = jax.random.normal(k_x, (2, 3, 32, 32), jnp.float32)
    params = init_params(k_p)
    prep = prepare_params(params)

    out = jax.block_until_ready(conv_model_forward(x, prep))
    assert out.shape == (2, 10), out.shape

    ref = reference_forward(x, params)
    max_err = float(jnp.max(jnp.abs(out - ref)))
    assert jnp.allclose(out, ref, atol=2e-3, rtol=2e-3), max_err

    print("KERNEL_OK")
</pallas_src>

<mosaic_0001>
module attributes {stable_mosaic.version = 11 : i64} {
  func.func @_fused_conv_kernel(%arg0: i32, %arg1: memref<1x1024x32xf32, #tpu.memory_space<vmem>>, %arg2: memref<32x16xf32, #tpu.memory_space<vmem>>, %arg3: memref<1x16xf32, #tpu.memory_space<vmem>>, %arg4: memref<144x32xf32, #tpu.memory_space<vmem>>, %arg5: memref<1x32xf32, #tpu.memory_space<vmem>>, %arg6: memref<1x64x32xf32, #tpu.memory_space<vmem>>, %arg7: memref<512x16xf32, #tpu.memory_space<vmem>>, %arg8: memref<304x16xf32, #tpu.memory_space<vmem>>, %arg9: memref<128x32xf32, #tpu.memory_space<vmem>>) attributes {dimension_semantics = [#tpu.dimension_semantics<parallel>], iteration_bounds = array<i64: 2>, scalar_prefetch = 0 : i64, scratch_operands = 3 : i64, tpu.core_type = #tpu.core_type<tc>, window_params = [{transform_indices = @transform_0, window_bounds = array<i64: 1, 1024, 32>}, {pipeline_mode = #tpu.pipeline_mode<synchronous>, transform_indices = @transform_1, window_bounds = array<i64: 32, 16>}, {pipeline_mode = #tpu.pipeline_mode<synchronous>, transform_indices = @transform_2, window_bounds = array<i64: 1, 16>}, {pipeline_mode = #tpu.pipeline_mode<synchronous>, transform_indices = @transform_3, window_bounds = array<i64: 144, 32>}, {pipeline_mode = #tpu.pipeline_mode<synchronous>, transform_indices = @transform_4, window_bounds = array<i64: 1, 32>}, {transform_indices = @transform_5, window_bounds = array<i64: 1, 64, 32>}]} {
    %c0 = arith.constant 0 : index
    %c0_0 = arith.constant 0 : index
    %c0_1 = arith.constant 0 : index
    %0 = vector.load %arg1[%c0, %c0_0, %c0_1] : memref<1x1024x32xf32, #tpu.memory_space<vmem>>, vector<1x1024x32xf32>
    %1 = vector.shape_cast %0 : vector<1x1024x32xf32> to vector<1024x32xf32>
    %c0_2 = arith.constant 0 : index
    %c0_3 = arith.constant 0 : index
    %2 = vector.load %arg2[%c0_2, %c0_3] : memref<32x16xf32, #tpu.memory_space<vmem>>, vector<32x16xf32>
    %cst = arith.constant dense<0.000000e+00> : vector<1024x16xf32>
    %3 = tpu.matmul %1, %2, %cst {dimension_numbers = #tpu.dot_dimension_numbers<[1], [0], [0], [1], [0, 0, 1, 1], [], []>} : vector<1024x32xf32>, vector<32x16xf32>, vector<1024x16xf32> -> vector<1024x16xf32>
    %c0_4 = arith.constant 0 : index
    %c0_5 = arith.constant 0 : index
    %4 = vector.load %arg3[%c0_4, %c0_5] : memref<1x16xf32, #tpu.memory_space<vmem>>, vector<1x16xf32>
    %5 = vector.broadcast %4 : vector<1x16xf32> to vector<1024x16xf32>
    %6 = arith.addf %3, %5 : vector<1024x16xf32>
    %cst_6 = arith.constant 0.000000e+00 : f32
    %7 = vector.broadcast %cst_6 : f32 to vector<1024x16xf32>
    %8 = arith.maximumf %6, %7 : vector<1024x16xf32>
    %9 = vector.shape_cast %8 : vector<1024x16xf32> to vector<16x2x32x16xf32>
    %10 = vector.extract_strided_slice %9 {offsets = [0, 0, 0, 0], sizes = [16, 1, 32, 16], strides = [1, 1, 1, 1]} : vector<16x2x32x16xf32> to vector<16x1x32x16xf32>
    %11 = vector.shape_cast %10 : vector<16x1x32x16xf32> to vector<16x32x16xf32>
    %12 = vector.extract_strided_slice %9 {offsets = [0, 1, 0, 0], sizes = [16, 1, 32, 16], strides = [1, 1, 1, 1]} : vector<16x2x32x16xf32> to vector<16x1x32x16xf32>
    %13 = vector.shape_cast %12 : vector<16x1x32x16xf32> to vector<16x32x16xf32>
    %14 = arith.maximumf %11, %13 : vector<16x32x16xf32>
    %15 = vector.shape_cast %14 : vector<16x32x16xf32> to vector<512x16xf32>
    %c0_7 = arith.constant 0 : index
    %c0_8 = arith.constant 0 : index
    %16 = vector.load %arg7[%c0_7, %c0_8] : memref<512x16xf32, #tpu.memory_space<vmem>>, vector<512x16xf32>
    tpu.vector_store %arg7[%c0_7, %c0_8], %15 {strides = array<i32>} : memref<512x16xf32, #tpu.memory_space<vmem>>, vector<512x16xf32>,
    %c0_9 = arith.constant 0 : index
    %c0_10 = arith.constant 0 : index
    %17 = tpu.strided_load %arg7[%c0_9, %c0_10] {strides = array<i32: 2, 1>} : memref<512x16xf32, #tpu.memory_space<vmem>>, vector<256x16xf32>
    %c1 = arith.constant 1 : index
    %c0_11 = arith.constant 0 : index
    %18 = tpu.strided_load %arg7[%c1, %c0_11] {strides = array<i32: 2, 1>} : memref<512x16xf32, #tpu.memory_space<vmem>>, vector<256x16xf32>
    %19 = arith.maximumf %17, %18 : vector<256x16xf32>
    %cst_12 = arith.constant 0.000000e+00 : f32
    %20 = vector.broadcast %cst_12 : f32 to vector<24x16xf32>
    %c0_13 = arith.constant 0 : index
    %c0_14 = arith.constant 0 : index
    %21 = vector.load %arg8[%c0_13, %c0_14] : memref<304x16xf32, #tpu.memory_space<vmem>>, vector<24x16xf32>
    tpu.vector_store %arg8[%c0_13, %c0_14], %20 {strides = array<i32>} : memref<304x16xf32, #tpu.memory_space<vmem>>, vector<24x16xf32>,
    %cst_15 = arith.constant 0.000000e+00 : f32
    %22 = vector.broadcast %cst_15 : f32 to vector<24x16xf32>
    %c280 = arith.constant 280 : index
    %c0_16 = arith.constant 0 : index
    %23 = vector.load %arg8[%c280, %c0_16] : memref<304x16xf32, #tpu.memory_space<vmem>>, vector<24x16xf32>
    tpu.vector_store %arg8[%c280, %c0_16], %22 {strides = array<i32>} : memref<304x16xf32, #tpu.memory_space<vmem>>, vector<24x16xf32>,
    %c24 = arith.constant 24 : index
    %c0_17 = arith.constant 0 : index
    %24 = vector.load %arg8[%c24, %c0_17] : memref<304x16xf32, #tpu.memory_space<vmem>>, vector<256x16xf32>
    tpu.vector_store %arg8[%c24, %c0_17], %19 {strides = array<i32>} : memref<304x16xf32, #tpu.memory_space<vmem>>, vector<256x16xf32>,
    %25 = tpu.iota {dimensions = array<i32: 0>} : vector<256x1xi32>
    %c16_i32 = arith.constant 16 : i32
    %c0_i32 = arith.constant 0 : i32
    %26 = arith.cmpi eq, %c16_i32, %c0_i32 : i32
    %c1_i32 = arith.constant 1 : i32
    %27 = arith.select %26, %c1_i32, %c16_i32 : i32
    %28 = vector.broadcast %27 : i32 to vector<256x1xi32>
    %29 = arith.remsi %25, %28 : vector<256x1xi32>
    %c0_i32_18 = arith.constant 0 : i32
    %30 = vector.broadcast %c0_i32_18 : i32 to vector<256x1xi32>
    %31 = arith.cmpi ne, %29, %30 : vector<256x1xi32>
    %c0_i32_19 = arith.constant 0 : i32
    %32 = vector.broadcast %c0_i32_19 : i32 to vector<256x1xi32>
    %33 = arith.cmpi slt, %29, %32 : vector<256x1xi32>
    %c0_i32_20 = arith.constant 0 : i32
    %34 = arith.cmpi slt, %27, %c0_i32_20 : i32
    %35 = vector.broadcast %34 : i1 to vector<256x1xi1>
    %36 = vector.broadcast %35 : vector<256x1xi1> to vector<256x1xi1>
    %37 = arith.xori %33, %36 : vector<256x1xi1>
    %38 = arith.andi %37, %31 : vector<256x1xi1>
    %39 = vector.broadcast %27 : i32 to vector<256x1xi32>
    %40 = arith.addi %29, %39 : vector<256x1xi32>
    %41 = arith.select %38, %40, %29 : vector<256x1xi1>, vector<256x1xi32>
    %c0_i32_21 = arith.constant 0 : i32
    %42 = vector.broadcast %c0_i32_21 : i32 to vector<256x1xi32>
    %43 = arith.cmpi sgt, %41, %42 : vector<256x1xi32>
    %c15_i32 = arith.constant 15 : i32
    %44 = vector.broadcast %c15_i32 : i32 to vector<256x1xi32>
    %45 = arith.cmpi slt, %41, %44 : vector<256x1xi32>
    %c7 = arith.constant 7 : index
    %c0_22 = arith.constant 0 : index
    %46 = vector.load %arg8[%c7, %c0_22] : memref<304x16xf32, #tpu.memory_space<vmem>>, vector<256x16xf32>
    %cst_23 = arith.constant 0.000000e+00 : f32
    %47 = vector.shape_cast %43 : vector<256x1xi1> to vector<256x1xi1>
    %48 = vector.broadcast %47 : vector<256x1xi1> to vector<256x16xi1>
    %49 = vector.broadcast %cst_23 : f32 to vector<256x16xf32>
    %50 = arith.select %48, %46, %49 : vector<256x16xi1>, vector<256x16xf32>
    %c8 = arith.constant 8 : index
    %c0_24 = arith.constant 0 : index
    %51 = vector.load %arg8[%c8, %c0_24] : memref<304x16xf32, #tpu.memory_space<vmem>>, vector<256x16xf32>
    %c9 = arith.constant 9 : index
    %c0_25 = arith.constant 0 : index
    %52 = vector.load %arg8[%c9, %c0_25] : memref<304x16xf32, #tpu.memory_space<vmem>>, vector<256x16xf32>
    %cst_26 = arith.constant 0.000000e+00 : f32
    %53 = vector.shape_cast %45 : vector<256x1xi1> to vector<256x1xi1>
    %54 = vector.broadcast %53 : vector<256x1xi1> to vector<256x16xi1>
    %55 = vector.broadcast %cst_26 : f32 to vector<256x16xf32>
    %56 = arith.select %54, %52, %55 : vector<256x16xi1>, vector<256x16xf32>
    %c23 = arith.constant 23 : index
    %c0_27 = arith.constant 0 : index
    %57 = vector.load %arg8[%c23, %c0_27] : memref<304x16xf32, #tpu.memory_space<vmem>>, vector<256x16xf32>
    %cst_28 = arith.constant 0.000000e+00 : f32
    %58 = vector.shape_cast %43 : vector<256x1xi1> to vector<256x1xi1>
    %59 = vector.broadcast %58 : vector<256x1xi1> to vector<256x16xi1>
    %60 = vector.broadcast %cst_28 : f32 to vector<256x16xf32>
    %61 = arith.select %59, %57, %60 : vector<256x16xi1>, vector<256x16xf32>
    %c24_29 = arith.constant 24 : index
    %c0_30 = arith.constant 0 : index
    %62 = vector.load %arg8[%c24_29, %c0_30] : memref<304x16xf32, #tpu.memory_space<vmem>>, vector<256x16xf32>
    %c25 = arith.constant 25 : index
    %c0_31 = arith.constant 0 : index
    %63 = vector.load %arg8[%c25, %c0_31] : memref<304x16xf32, #tpu.memory_space<vmem>>, vector<256x16xf32>
    %cst_32 = arith.constant 0.000000e+00 : f32
    %64 = vector.shape_cast %45 : vector<256x1xi1> to vector<256x1xi1>
    %65 = vector.broadcast %64 : vector<256x1xi1> to vector<256x16xi1>
    %66 = vector.broadcast %cst_32 : f32 to vector<256x16xf32>
    %67 = arith.select %65, %63, %66 : vector<256x16xi1>, vector<256x16xf32>
    %c39 = arith.constant 39 : index
    %c0_33 = arith.constant 0 : index
    %68 = vector.load %arg8[%c39, %c0_33] : memref<304x16xf32, #tpu.memory_space<vmem>>, vector<256x16xf32>
    %cst_34 = arith.constant 0.000000e+00 : f32
    %69 = vector.shape_cast %43 : vector<256x1xi1> to vector<256x1xi1>
    %70 = vector.broadcast %69 : vector<256x1xi1> to vector<256x16xi1>
    %71 = vector.broadcast %cst_34 : f32 to vector<256x16xf32>
    %72 = arith.select %70, %68, %71 : vector<256x16xi1>, vector<256x16xf32>
    %c40 = arith.constant 40 : index
    %c0_35 = arith.constant 0 : index
    %73 = vector.load %arg8[%c40, %c0_35] : memref<304x16xf32, #tpu.memory_space<vmem>>, vector<256x16xf32>
    %c41 = arith.constant 41 : index
    %c0_36 = arith.constant 0 : index
    %74 = vector.load %arg8[%c41, %c0_36] : memref<304x16xf32, #tpu.memory_space<vmem>>, vector<256x16xf32>
    %cst_37 = arith.constant 0.000000e+00 : f32
    %75 = vector.shape_cast %45 : vector<256x1xi1> to vector<256x1xi1>
    %76 = vector.broadcast %75 : vector<256x1xi1> to vector<256x16xi1>
    %77 = vector.broadcast %cst_37 : f32 to vector<256x16xf32>
    %78 = arith.select %76, %74, %77 : vector<256x16xi1>, vector<256x16xf32>
    %79 = tpu.concatenate %50, %51, %56, %61, %62, %67, %72, %73, %78 in 1 : vector<256x16xf32>, vector<256x16xf32>, vector<256x16xf32>, vector<256x16xf32>, vector<256x16xf32>, vector<256x16xf32>, vector<256x16xf32>, vector<256x16xf32>, vector<256x16xf32> -> vector<256x144xf32>
    %c0_38 = arith.constant 0 : index
    %c0_39 = arith.constant 0 : index
    %80 = vector.load %arg4[%c0_38, %c0_39] : memref<144x32xf32, #tpu.memory_space<vmem>>, vector<144x32xf32>
    %cst_40 = arith.constant dense<0.000000e+00> : vector<256x32xf32>
    %81 = tpu.matmul %79, %80, %cst_40 {dimension_numbers = #tpu.dot_dimension_numbers<[1], [0], [0], [1], [0, 0, 1, 1], [], []>} : vector<256x144xf32>, vector<144x32xf32>, vector<256x32xf32> -> vector<256x32xf32>
    %c0_41 = arith.constant 0 : index
    %c0_42 = arith.constant 0 : index
    %82 = vector.load %arg5[%c0_41, %c0_42] : memref<1x32xf32, #tpu.memory_space<vmem>>, vector<1x32xf32>
    %83 = vector.broadcast %82 : vector<1x32xf32> to vector<256x32xf32>
    %84 = arith.addf %81, %83 : vector<256x32xf32>
    %cst_43 = arith.constant 0.000000e+00 : f32
    %85 = vector.broadcast %cst_43 : f32 to vector<256x32xf32>
    %86 = arith.maximumf %84, %85 : vector<256x32xf32>
    %87 = vector.shape_cast %86 : vector<256x32xf32> to vector<8x2x16x32xf32>
    %88 = vector.extract_strided_slice %87 {offsets = [0, 0, 0, 0], sizes = [8, 1, 16, 32], strides = [1, 1, 1, 1]} : vector<8x2x16x32xf32> to vector<8x1x16x32xf32>
    %89 = vector.shape_cast %88 : vector<8x1x16x32xf32> to vector<8x16x32xf32>
    %90 = vector.extract_strided_slice %87 {offsets = [0, 1, 0, 0], sizes = [8, 1, 16, 32], strides = [1, 1, 1, 1]} : vector<8x2x16x32xf32> to vector<8x1x16x32xf32>
    %91 = vector.shape_cast %90 : vector<8x1x16x32xf32> to vector<8x16x32xf32>
    %92 = arith.maximumf %89, %91 : vector<8x16x32xf32>
    %93 = vector.shape_cast %92 : vector<8x16x32xf32> to vector<128x32xf32>
    %c0_44 = arith.constant 0 : index
    %c0_45 = arith.constant 0 : index
    %94 = vector.load %arg9[%c0_44, %c0_45] : memref<128x32xf32, #tpu.memory_space<vmem>>, vector<128x32xf32>
    tpu.vector_store %arg9[%c0_44, %c0_45], %93 {strides = array<i32>} : memref<128x32xf32, #tpu.memory_space<vmem>>, vector<128x32xf32>,
    %c0_46 = arith.constant 0 : index
    %c0_47 = arith.constant 0 : index
    %95 = tpu.strided_load %arg9[%c0_46, %c0_47] {strides = array<i32: 2, 1>} : memref<128x32xf32, #tpu.memory_space<vmem>>, vector<64x32xf32>
    %c1_48 = arith.constant 1 : index
    %c0_49 = arith.constant 0 : index
    %96 = tpu.strided_load %arg9[%c1_48, %c0_49] {strides = array<i32: 2, 1>} : memref<128x32xf32, #tpu.memory_space<vmem>>, vector<64x32xf32>
    %97 = arith.maximumf %95, %96 : vector<64x32xf32>
    %98 = vector.shape_cast %97 : vector<64x32xf32> to vector<1x64x32xf32>
    %c0_50 = arith.constant 0 : index
    %c0_51 = arith.constant 0 : index
    %c0_52 = arith.constant 0 : index
    %99 = vector.load %arg6[%c0_50, %c0_51, %c0_52] : memref<1x64x32xf32, #tpu.memory_space<vmem>>, vector<1x64x32xf32>
    tpu.vector_store %arg6[%c0_50, %c0_51, %c0_52], %98 {strides = array<i32>} : memref<1x64x32xf32, #tpu.memory_space<vmem>>, vector<1x64x32xf32>,
    return
  }
  func.func @transform_0(%arg0: i32) -> (i32, i32, i32) {
    %c0_i32 = arith.constant 0 : i32
    %c0_i32_0 = arith.constant 0 : i32
    %c0_i32_1 = arith.constant 0 : i32
    return %arg0, %c0_i32, %c0_i32_0 : i32, i32, i32
  }
  func.func @transform_1(%arg0: i32) -> (i32, i32) {
    %c0_i32 = arith.constant 0 : i32
    %c0_i32_0 = arith.constant 0 : i32
    %c0_i32_1 = arith.constant 0 : i32
    return %c0_i32, %c0_i32_0 : i32, i32
  }
  func.func @transform_2(%arg0: i32) -> (i32, i32) {
    %c0_i32 = arith.constant 0 : i32
    %c0_i32_0 = arith.constant 0 : i32
    %c0_i32_1 = arith.constant 0 : i32
    return %c0_i32, %c0_i32_0 : i32, i32
  }
  func.func @transform_3(%arg0: i32) -> (i32, i32) {
    %c0_i32 = arith.constant 0 : i32
    %c0_i32_0 = arith.constant 0 : i32
    %c0_i32_1 = arith.constant 0 : i32
    return %c0_i32, %c0_i32_0 : i32, i32
  }
  func.func @transform_4(%arg0: i32) -> (i32, i32) {
    %c0_i32 = arith.constant 0 : i32
    %c0_i32_0 = arith.constant 0 : i32
    %c0_i32_1 = arith.constant 0 : i32
    return %c0_i32, %c0_i32_0 : i32, i32
  }
  func.func @transform_5(%arg0: i32) -> (i32, i32, i32) {
    %c0_i32 = arith.constant 0 : i32
    %c0_i32_0 = arith.constant 0 : i32
    %c0_i32_1 = arith.constant 0 : i32
    return %arg0, %c0_i32, %c0_i32_0 : i32, i32, i32
  }
}

module attributes {stable_mosaic.version = 11 : i64} {
  func.func @_mlp_kernel(%arg0: i32, %arg1: memref<2x2048xf32, #tpu.memory_space<vmem>>, %arg2: memref<2048x128xf32, #tpu.memory_space<vmem>>, %arg3: memref<1x128xf32, #tpu.memory_space<vmem>>, %arg4: memref<128x128xf32, #tpu.memory_space<vmem>>, %arg5: memref<1x128xf32, #tpu.memory_space<vmem>>, %arg6: memref<2x128xf32, #tpu.memory_space<vmem>>) attributes {dimension_semantics = [#tpu.dimension_semantics<arbitrary>], iteration_bounds = array<i64: 1>, scalar_prefetch = 0 : i64, scratch_operands = 0 : i64, tpu.core_type = #tpu.core_type<tc>, window_params = [{pipeline_mode = #tpu.pipeline_mode<synchronous>, transform_indices = @transform_0, window_bounds = array<i64: 2, 2048>}, {pipeline_mode = #tpu.pipeline_mode<synchronous>, transform_indices = @transform_1, window_bounds = array<i64: 2048, 128>}, {pipeline_mode = #tpu.pipeline_mode<synchronous>, transform_indices = @transform_2, window_bounds = array<i64: 1, 128>}, {pipeline_mode = #tpu.pipeline_mode<synchronous>, transform_indices = @transform_3, window_bounds = array<i64: 128, 128>}, {pipeline_mode = #tpu.pipeline_mode<synchronous>, transform_indices = @transform_4, window_bounds = array<i64: 1, 128>}, {pipeline_mode = #tpu.pipeline_mode<synchronous>, transform_indices = @transform_5, window_bounds = array<i64: 2, 128>}]} {
    %c0 = arith.constant 0 : index
    %c0_0 = arith.constant 0 : index
    %0 = vector.load %arg1[%c0, %c0_0] : memref<2x2048xf32, #tpu.memory_space<vmem>>, vector<2x2048xf32>
    %c0_1 = arith.constant 0 : index
    %c0_2 = arith.constant 0 : index
    %1 = vector.load %arg2[%c0_1, %c0_2] : memref<2048x128xf32, #tpu.memory_space<vmem>>, vector<2048x128xf32>
    %cst = arith.constant dense<0.000000e+00> : vector<2x128xf32>
    %2 = tpu.matmul %0, %1, %cst {dimension_numbers = #tpu.dot_dimension_numbers<[1], [0], [0], [1], [0, 0, 1, 1], [], []>} : vector<2x2048xf32>, vector<2048x128xf32>, vector<2x128xf32> -> vector<2x128xf32>
    %c0_3 = arith.constant 0 : index
    %c0_4 = arith.constant 0 : index
    %3 = vector.load %arg3[%c0_3, %c0_4] : memref<1x128xf32, #tpu.memory_space<vmem>>, vector<1x128xf32>
    %4 = vector.broadcast %3 : vector<1x128xf32> to vector<2x128xf32>
    %5 = arith.addf %2, %4 : vector<2x128xf32>
    %cst_5 = arith.constant 0.000000e+00 : f32
    %6 = vector.broadcast %cst_5 : f32 to vector<2x128xf32>
    %7 = arith.maximumf %5, %6 : vector<2x128xf32>
    %c0_6 = arith.constant 0 : index
    %c0_7 = arith.constant 0 : index
    %8 = vector.load %arg4[%c0_6, %c0_7] : memref<128x128xf32, #tpu.memory_space<vmem>>, vector<128x128xf32>
    %cst_8 = arith.constant dense<0.000000e+00> : vector<2x128xf32>
    %9 = tpu.matmul %7, %8, %cst_8 {dimension_numbers = #tpu.dot_dimension_numbers<[1], [0], [0], [1], [0, 0, 1, 1], [], []>} : vector<2x128xf32>, vector<128x128xf32>, vector<2x128xf32> -> vector<2x128xf32>
    %c0_9 = arith.constant 0 : index
    %c0_10 = arith.constant 0 : index
    %10 = vector.load %arg5[%c0_9, %c0_10] : memref<1x128xf32, #tpu.memory_space<vmem>>, vector<1x128xf32>
    %11 = vector.broadcast %10 : vector<1x128xf32> to vector<2x128xf32>
    %12 = arith.addf %9, %11 : vector<2x128xf32>
    %c0_11 = arith.constant 0 : index
    %c0_12 = arith.constant 0 : index
    %13 = vector.load %arg6[%c0_11, %c0_12] : memref<2x128xf32, #tpu.memory_space<vmem>>, vector<2x128xf32>
    tpu.vector_store %arg6[%c0_11, %c0_12], %12 {strides = array<i32>} : memref<2x128xf32, #tpu.memory_space<vmem>>, vector<2x128xf32>,
    return
  }
  func.func @transform_0(%arg0: i32) -> (i32, i32) {
    %c0_i32 = arith.constant 0 : i32
    %c0_i32_0 = arith.constant 0 : i32
    %c0_i32_1 = arith.constant 0 : i32
    return %c0_i32, %c0_i32_0 : i32, i32
  }
  func.func @transform_1(%arg0: i32) -> (i32, i32) {
    %c0_i32 = arith.constant 0 : i32
    %c0_i32_0 = arith.constant 0 : i32
    %c0_i32_1 = arith.constant 0 : i32
    return %c0_i32, %c0_i32_0 : i32, i32
  }
  func.func @transform_2(%arg0: i32) -> (i32, i32) {
    %c0_i32 = arith.constant 0 : i32
    %c0_i32_0 = arith.constant 0 : i32
    %c0_i32_1 = arith.constant 0 : i32
    return %c0_i32, %c0_i32_0 : i32, i32
  }
  func.func @transform_3(%arg0: i32) -> (i32, i32) {
    %c0_i32 = arith.constant 0 : i32
    %c0_i32_0 = arith.constant 0 : i32
    %c0_i32_1 = arith.constant 0 : i32
    return %c0_i32, %c0_i32_0 : i32, i32
  }
  func.func @transform_4(%arg0: i32) -> (i32, i32) {
    %c0_i32 = arith.constant 0 : i32
    %c0_i32_0 = arith.constant 0 : i32
    %c0_i32_1 = arith.constant 0 : i32
    return %c0_i32, %c0_i32_0 : i32, i32
  }
  func.func @transform_5(%arg0: i32) -> (i32, i32) {
    %c0_i32 = arith.constant 0 : i32
    %c0_i32_0 = arith.constant 0 : i32
    %c0_i32_1 = arith.constant 0 : i32
    return %c0_i32, %c0_i32_0 : i32, i32
  }
}

</mosaic_0001>

<llo_original>
// kernel: conv_model_forward.3
$region0: #{conv_model_forward.3}
  #allocation0 [shape = 'u32[]', space=smem, size = 0x4, offset = 0x4, fixed_abs, tag = 'smem constant byte address 0x4 - core index']
  #allocation1 [shape = 'u32[144,128]{1,0:T(1,128)}', space=vmem, size = 0x12000, scoped, tag = 'internal scratch']
  %s0 = inlined_call_operand.vmem [shape: f32[2,2048], index: 0, kind: input, shape index: {}]
  %s1 = inlined_call_operand.vmem [shape: f32[2048,128], index: 1, kind: input, shape index: {}]
  %s2 = inlined_call_operand.vmem [shape: f32[1,128], index: 2, kind: input, shape index: {}]
  %s3 = inlined_call_operand.vmem [shape: f32[128,128], index: 3, kind: input, shape index: {}]
  %s4 = inlined_call_operand.vmem [shape: f32[1,128], index: 4, kind: input, shape index: {}]
  %s5 = inlined_call_operand.hbm [shape: f32[2,128], index: 5, kind: output, shape index: {}]
  %s6 = sld [smem:[#allocation0]]
  $region30: #{conv_model_forward.3} parent=0
    _
  %s8 = ssub.s32 1, %s6
  %s9 = scalar_select 0, %s8, %s6
  $region1: #{conv_model_forward.3} parent=0
    #allocation2 [shape = 'u8[1024]{0}', space=vmem, size = 0x400, scoped, tag = 'output window, operand 0, single buffered']
    #allocation3 [shape = 's32[1]{0}', space=sflag, size = 0x4, scoped, tag = 'scoped memory for conv_model_forward.3']
    %10 = vsyncpa [#allocation3], 0
    // Predicated region
    $region2: #{conv_model_forward.3} parent=1 // pred_check
      _
    $region3: #{conv_model_forward.3} parent=1 // pred_check_branch
      %12 = sbr.rel (0) target = $region5
    $region4: #{conv_model_forward.3} parent=1 // pred_region
      _
    $region5: #{conv_model_forward.3} parent=1 // pred_fallthru
      _
    // Predicated region
    $region6: #{conv_model_forward.3} parent=1 // pred_check
      _
    $region7: #{conv_model_forward.3} parent=1 // pred_check_branch
      %14 = sbr.rel (0) target = $region9
    $region8: #{conv_model_forward.3} parent=1 // pred_region
      _
    $region9: #{conv_model_forward.3} parent=1 // pred_fallthru
      _
    // Predicated region
    $region10: #{conv_model_forward.3} parent=1 // pred_check
      _
    $region11: #{conv_model_forward.3} parent=1 // pred_check_branch
      %16 = sbr.rel (0) target = $region13
    $region12: #{conv_model_forward.3} parent=1 // pred_region
      _
    $region13: #{conv_model_forward.3} parent=1 // pred_fallthru
      _
    // Predicated region
    $region14: #{conv_model_forward.3} parent=1 // pred_check
      _
    $region15: #{conv_model_forward.3} parent=1 // pred_check_branch
      %18 = sbr.rel (0) target = $region17
    $region16: #{conv_model_forward.3} parent=1 // pred_region
      _
    $region17: #{conv_model_forward.3} parent=1 // pred_fallthru
      _
    // Predicated region
    $region18: #{conv_model_forward.3} parent=1 // pred_check
      _
    $region19: #{conv_model_forward.3} parent=1 // pred_check_branch
      %20 = sbr.rel (0) target = $region21
    $region20: #{conv_model_forward.3} parent=1 // pred_region
      _
    $region21: #{conv_model_forward.3} parent=1 // pred_fallthru
      _
    %v21 = vld [vmem:[%s0] sm:$0xff]
    %v22 = vld [vmem:[%s0 + $0x8] sm:$0xff]
    %v23 = vld [vmem:[%s0 + $0x10] sm:$0xff]
    %v24 = vld [vmem:[%s0 + $0x18] sm:$0xff]
    %v25 = vld [vmem:[%s1] sm:$0xff]
    %v26 = vld [vmem:[%s1 + $0x8] sm:$0xff]
    %v27 = vld [vmem:[%s1 + $0x10] sm:$0xff]
    %v28 = vld [vmem:[%s1 + $0x18] sm:$0xff]
    %v29 = vld [vmem:[%s1 + $0x20] sm:$0xff]
    %v30 = vld [vmem:[%s1 + $0x28] sm:$0xff]
    %v31 = vld [vmem:[%s1 + $0x30] sm:$0xff]
    %v32 = vld [vmem:[%s1 + $0x38] sm:$0xff]
    %v33 = vld [vmem:[%s1 + $0x40] sm:$0xff]
    %v34 = vld [vmem:[%s1 + $0x48] sm:$0xff]
    %v35 = vld [vmem:[%s1 + $0x50] sm:$0xff]
    %v36 = vld [vmem:[%s1 + $0x58] sm:$0xff]
    %v37 = vld [vmem:[%s1 + $0x60] sm:$0xff]
    %v38 = vld [vmem:[%s1 + $0x68] sm:$0xff]
    %v39 = vld [vmem:[%s1 + $0x70] sm:$0xff]
    %v40 = vld [vmem:[%s1 + $0x78] sm:$0xff]
    %v41 = vld [vmem:[%s1 + $0x80] sm:$0xff]
    %v42 = vld [vmem:[%s1 + $0x88] sm:$0xff]
    %v43 = vld [vmem:[%s1 + $0x90] sm:$0xff]
    %v44 = vld [vmem:[%s1 + $0x98] sm:$0xff]
    %v45 = vld [vmem:[%s1 + $0xa0] sm:$0xff]
    %v46 = vld [vmem:[%s1 + $0xa8] sm:$0xff]
    %v47 = vld [vmem:[%s1 + $0xb0] sm:$0xff]
    %v48 = vld [vmem:[%s1 + $0xb8] sm:$0xff]
    %v49 = vld [vmem:[%s1 + $0xc0] sm:$0xff]
    %v50 = vld [vmem:[%s1 + $0xc8] sm:$0xff]
    %v51 = vld [vmem:[%s1 + $0xd0] sm:$0xff]
    %v52 = vld [vmem:[%s1 + $0xd8] sm:$0xff]
    %v53 = vld [vmem:[%s1 + $0xe0] sm:$0xff]
    %v54 = vld [vmem:[%s1 + $0xe8] sm:$0xff]
    %v55 = vld [vmem:[%s1 + $0xf0] sm:$0xff]
    %v56 = vld [vmem:[%s1 + $0xf8] sm:$0xff]
    %v57 = vld [vmem:[%s1 + $0x100] sm:$0xff]
    %v58 = vld [vmem:[%s1 + $0x108] sm:$0xff]
    %v59 = vld [vmem:[%s1 + $0x110] sm:$0xff]
    %v60 = vld [vmem:[%s1 + $0x118] sm:$0xff]
    %v61 = vld [vmem:[%s1 + $0x120] sm:$0xff]
    %v62 = vld [vmem:[%s1 + $0x128] sm:$0xff]
    %v63 = vld [vmem:[%s1 + $0x130] sm:$0xff]
    %v64 = vld [vmem:[%s1 + $0x138] sm:$0xff]
    %v65 = vld [vmem:[%s1 + $0x140] sm:$0xff]
    %v66 = vld [vmem:[%s1 + $0x148] sm:$0xff]
    %v67 = vld [vmem:[%s1 + $0x150] sm:$0xff]
    %v68 = vld [vmem:[%s1 + $0x158] sm:$0xff]
    %v69 = vld [vmem:[%s1 + $0x160] sm:$0xff]
    %v70 = vld [vmem:[%s1 + $0x168] sm:$0xff]
    %v71 = vld [vmem:[%s1 + $0x170] sm:$0xff]
    %v72 = vld [vmem:[%s1 + $0x178] sm:$0xff]
    %v73 = vld [vmem:[%s1 + $0x180] sm:$0xff]
    %v74 = vld [vmem:[%s1 + $0x188] sm:$0xff]
    %v75 = vld [vmem:[%s1 + $0x190] sm:$0xff]
    %v76 = vld [vmem:[%s1 + $0x198] sm:$0xff]
    %v77 = vld [vmem:[%s1 + $0x1a0] sm:$0xff]
    %v78 = vld [vmem:[%s1 + $0x1a8] sm:$0xff]
    %v79 = vld [vmem:[%s1 + $0x1b0] sm:$0xff]
    %v80 = vld [vmem:[%s1 + $0x1b8] sm:$0xff]
    %v81 = vld [vmem:[%s1 + $0x1c0] sm:$0xff]
    %v82 = vld [vmem:[%s1 + $0x1c8] sm:$0xff]
    %v83 = vld [vmem:[%s1 + $0x1d0] sm:$0xff]
    %v84 = vld [vmem:[%s1 + $0x1d8] sm:$0xff]
    %v85 = vld [vmem:[%s1 + $0x1e0] sm:$0xff]
    %v86 = vld [vmem:[%s1 + $0x1e8] sm:$0xff]
    %v87 = vld [vmem:[%s1 + $0x1f0] sm:$0xff]
    %v88 = vld [vmem:[%s1 + $0x1f8] sm:$0xff]
    %v89 = vld [vmem:[%s1 + $0x200] sm:$0xff]
    %v90 = vld [vmem:[%s1 + $0x208] sm:$0xff]
    %v91 = vld [vmem:[%s1 + $0x210] sm:$0xff]
    %v92 = vld [vmem:[%s1 + $0x218] sm:$0xff]
    %v93 = vld [vmem:[%s1 + $0x220] sm:$0xff]
    %v94 = vld [vmem:[%s1 + $0x228] sm:$0xff]
    %v95 = vld [vmem:[%s1 + $0x230] sm:$0xff]
    %v96 = vld [vmem:[%s1 + $0x238] sm:$0xff]
    %v97 = vld [vmem:[%s1 + $0x240] sm:$0xff]
    %v98 = vld [vmem:[%s1 + $0x248] sm:$0xff]
    %v99 = vld [vmem:[%s1 + $0x250] sm:$0xff]
    %v100 = vld [vmem:[%s1 + $0x258] sm:$0xff]
    %v101 = vld [vmem:[%s1 + $0x260] sm:$0xff]
    %v102 = vld [vmem:[%s1 + $0x268] sm:$0xff]
    %v103 = vld [vmem:[%s1 + $0x270] sm:$0xff]
    %v104 = vld [vmem:[%s1 + $0x278] sm:$0xff]
    %v105 = vld [vmem:[%s1 + $0x280] sm:$0xff]
    %v106 = vld [vmem:[%s1 + $0x288] sm:$0xff]
    %v107 = vld [vmem:[%s1 + $0x290] sm:$0xff]
    %v108 = vld [vmem:[%s1 + $0x298] sm:$0xff]
    %v109 = vld [vmem:[%s1 + $0x2a0] sm:$0xff]
    %v110 = vld [vmem:[%s1 + $0x2a8] sm:$0xff]
    %v111 = vld [vmem:[%s1 + $0x2b0] sm:$0xff]
    %v112 = vld [vmem:[%s1 + $0x2b8] sm:$0xff]
    %v113 = vld [vmem:[%s1 + $0x2c0] sm:$0xff]
    %v114 = vld [vmem:[%s1 + $0x2c8] sm:$0xff]
    %v115 = vld [vmem:[%s1 + $0x2d0] sm:$0xff]
    %v116 = vld [vmem:[%s1 + $0x2d8] sm:$0xff]
    %v117 = vld [vmem:[%s1 + $0x2e0] sm:$0xff]
    %v118 = vld [vmem:[%s1 + $0x2e8] sm:$0xff]
    %v119 = vld [vmem:[%s1 + $0x2f0] sm:$0xff]
    %v120 = vld [vmem:[%s1 + $0x2f8] sm:$0xff]
    %v121 = vld [vmem:[%s1 + $0x300] sm:$0xff]
    %v122 = vld [vmem:[%s1 + $0x308] sm:$0xff]
    %v123 = vld [vmem:[%s1 + $0x310] sm:$0xff]
    %v124 = vld [vmem:[%s1 + $0x318] sm:$0xff]
    %v125 = vld [vmem:[%s1 + $0x320] sm:$0xff]
    %v126 = vld [vmem:[%s1 + $0x328] sm:$0xff]
    %v127 = vld [vmem:[%s1 + $0x330] sm:$0xff]
    %v128 = vld [vmem:[%s1 + $0x338] sm:$0xff]
    %v129 = vld [vmem:[%s1 + $0x340] sm:$0xff]
    %v130 = vld [vmem:[%s1 + $0x348] sm:$0xff]
    %v131 = vld [vmem:[%s1 + $0x350] sm:$0xff]
    %v132 = vld [vmem:[%s1 + $0x358] sm:$0xff]
    %v133 = vld [vmem:[%s1 + $0x360] sm:$0xff]
    %v134 = vld [vmem:[%s1 + $0x368] sm:$0xff]
    %v135 = vld [vmem:[%s1 + $0x370] sm:$0xff]
    %v136 = vld [vmem:[%s1 + $0x378] sm:$0xff]
    %v137 = vld [vmem:[%s1 + $0x380] sm:$0xff]
    %v138 = vld [vmem:[%s1 + $0x388] sm:$0xff]
    %v139 = vld [vmem:[%s1 + $0x390] sm:$0xff]
    %v140 = vld [vmem:[%s1 + $0x398] sm:$0xff]
    %v141 = vld [vmem:[%s1 + $0x3a0] sm:$0xff]
    %v142 = vld [vmem:[%s1 + $0x3a8] sm:$0xff]
    %v143 = vld [vmem:[%s1 + $0x3b0] sm:$0xff]
    %v144 = vld [vmem:[%s1 + $0x3b8] sm:$0xff]
    %v145 = vld [vmem:[%s1 + $0x3c0] sm:$0xff]
    %v146 = vld [vmem:[%s1 + $0x3c8] sm:$0xff]
    %v147 = vld [vmem:[%s1 + $0x3d0] sm:$0xff]
    %v148 = vld [vmem:[%s1 + $0x3d8] sm:$0xff]
    %v149 = vld [vmem:[%s1 + $0x3e0] sm:$0xff]
    %v150 = vld [vmem:[%s1 + $0x3e8] sm:$0xff]
    %v151 = vld [vmem:[%s1 + $0x3f0] sm:$0xff]
    %v152 = vld [vmem:[%s1 + $0x3f8] sm:$0xff]
    %v153 = vld [vmem:[%s1 + $0x400] sm:$0xff]
    %v154 = vld [vmem:[%s1 + $0x408] sm:$0xff]
    %v155 = vld [vmem:[%s1 + $0x410] sm:$0xff]
    %v156 = vld [vmem:[%s1 + $0x418] sm:$0xff]
    %v157 = vld [vmem:[%s1 + $0x420] sm:$0xff]
    %v158 = vld [vmem:[%s1 + $0x428] sm:$0xff]
    %v159 = vld [vmem:[%s1 + $0x430] sm:$0xff]
    %v160 = vld [vmem:[%s1 + $0x438] sm:$0xff]
    %v161 = vld [vmem:[%s1 + $0x440] sm:$0xff]
    %v162 = vld [vmem:[%s1 + $0x448] sm:$0xff]
    %v163 = vld [vmem:[%s1 + $0x450] sm:$0xff]
    %v164 = vld [vmem:[%s1 + $0x458] sm:$0xff]
    %v165 = vld [vmem:[%s1 + $0x460] sm:$0xff]
    %v166 = vld [vmem:[%s1 + $0x468] sm:$0xff]
    %v167 = vld [vmem:[%s1 + $0x470] sm:$0xff]
    %v168 = vld [vmem:[%s1 + $0x478] sm:$0xff]
    %v169 = vld [vmem:[%s1 + $0x480] sm:$0xff]
    %v170 = vld [vmem:[%s1 + $0x488] sm:$0xff]
    %v171 = vld [vmem:[%s1 + $0x490] sm:$0xff]
    %v172 = vld [vmem:[%s1 + $0x498] sm:$0xff]
    %v173 = vld [vmem:[%s1 + $0x4a0] sm:$0xff]
    %v174 = vld [vmem:[%s1 + $0x4a8] sm:$0xff]
    %v175 = vld [vmem:[%s1 + $0x4b0] sm:$0xff]
    %v176 = vld [vmem:[%s1 + $0x4b8] sm:$0xff]
    %v177 = vld [vmem:[%s1 + $0x4c0] sm:$0xff]
    %v178 = vld [vmem:[%s1 + $0x4c8] sm:$0xff]
    %v179 = vld [vmem:[%s1 + $0x4d0] sm:$0xff]
    %v180 = vld [vmem:[%s1 + $0x4d8] sm:$0xff]
    %v181 = vld [vmem:[%s1 + $0x4e0] sm:$0xff]
    %v182 = vld [vmem:[%s1 + $0x4e8] sm:$0xff]
    %v183 = vld [vmem:[%s1 + $0x4f0] sm:$0xff]
    %v184 = vld [vmem:[%s1 + $0x4f8] sm:$0xff]
    %v185 = vld [vmem:[%s1 + $0x500] sm:$0xff]
    %v186 = vld [vmem:[%s1 + $0x508] sm:$0xff]
    %v187 = vld [vmem:[%s1 + $0x510] sm:$0xff]
    %v188 = vld [vmem:[%s1 + $0x518] sm:$0xff]
    %v189 = vld [vmem:[%s1 + $0x520] sm:$0xff]
    %v190 = vld [vmem:[%s1 + $0x528] sm:$0xff]
    %v191 = vld [vmem:[%s1 + $0x530] sm:$0xff]
    %v192 = vld [vmem:[%s1 + $0x538] sm:$0xff]
    %v193 = vld [vmem:[%s1 + $0x540] sm:$0xff]
    %v194 = vld [vmem:[%s1 + $0x548] sm:$0xff]
    %v195 = vld [vmem:[%s1 + $0x550] sm:$0xff]
    %v196 = vld [vmem:[%s1 + $0x558] sm:$0xff]
    %v197 = vld [vmem:[%s1 + $0x560] sm:$0xff]
    %v198 = vld [vmem:[%s1 + $0x568] sm:$0xff]
    %v199 = vld [vmem:[%s1 + $0x570] sm:$0xff]
    %v200 = vld [vmem:[%s1 + $0x578] sm:$0xff]
    %v201 = vld [vmem:[%s1 + $0x580] sm:$0xff]
    %v202 = vld [vmem:[%s1 + $0x588] sm:$0xff]
    %v203 = vld [vmem:[%s1 + $0x590] sm:$0xff]
    %v204 = vld [vmem:[%s1 + $0x598] sm:$0xff]
    %v205 = vld [vmem:[%s1 + $0x5a0] sm:$0xff]
    %v206 = vld [vmem:[%s1 + $0x5a8] sm:$0xff]
    %v207 = vld [vmem:[%s1 + $0x5b0] sm:$0xff]
    %v208 = vld [vmem:[%s1 + $0x5b8] sm:$0xff]
    %v209 = vld [vmem:[%s1 + $0x5c0] sm:$0xff]
    %v210 = vld [vmem:[%s1 + $0x5c8] sm:$0xff]
    %v211 = vld [vmem:[%s1 + $0x5d0] sm:$0xff]
    %v212 = vld [vmem:[%s1 + $0x5d8] sm:$0xff]
    %v213 = vld [vmem:[%s1 + $0x5e0] sm:$0xff]
    %v214 = vld [vmem:[%s1 + $0x5e8] sm:$0xff]
    %v215 = vld [vmem:[%s1 + $0x5f0] sm:$0xff]
    %v216 = vld [vmem:[%s1 + $0x5f8] sm:$0xff]
    %v217 = vld [vmem:[%s1 + $0x600] sm:$0xff]
    %v218 = vld [vmem:[%s1 + $0x608] sm:$0xff]
    %v219 = vld [vmem:[%s1 + $0x610] sm:$0xff]
    %v220 = vld [vmem:[%s1 + $0x618] sm:$0xff]
    %v221 = vld [vmem:[%s1 + $0x620] sm:$0xff]
    %v222 = vld [vmem:[%s1 + $0x628] sm:$0xff]
    %v223 = vld [vmem:[%s1 + $0x630] sm:$0xff]
    %v224 = vld [vmem:[%s1 + $0x638] sm:$0xff]
    %v225 = vld [vmem:[%s1 + $0x640] sm:$0xff]
    %v226 = vld [vmem:[%s1 + $0x648] sm:$0xff]
    %v227 = vld [vmem:[%s1 + $0x650] sm:$0xff]
    %v228 = vld [vmem:[%s1 + $0x658] sm:$0xff]
    %v229 = vld [vmem:[%s1 + $0x660] sm:$0xff]
    %v230 = vld [vmem:[%s1 + $0x668] sm:$0xff]
    %v231 = vld [vmem:[%s1 + $0x670] sm:$0xff]
    %v232 = vld [vmem:[%s1 + $0x678] sm:$0xff]
    %v233 = vld [vmem:[%s1 + $0x680] sm:$0xff]
    %v234 = vld [vmem:[%s1 + $0x688] sm:$0xff]
    %v235 = vld [vmem:[%s1 + $0x690] sm:$0xff]
    %v236 = vld [vmem:[%s1 + $0x698] sm:$0xff]
    %v237 = vld [vmem:[%s1 + $0x6a0] sm:$0xff]
    %v238 = vld [vmem:[%s1 + $0x6a8] sm:$0xff]
    %v239 = vld [vmem:[%s1 + $0x6b0] sm:$0xff]
    %v240 = vld [vmem:[%s1 + $0x6b8] sm:$0xff]
    %v241 = vld [vmem:[%s1 + $0x6c0] sm:$0xff]
    %v242 = vld [vmem:[%s1 + $0x6c8] sm:$0xff]
    %v243 = vld [vmem:[%s1 + $0x6d0] sm:$0xff]
    %v244 = vld [vmem:[%s1 + $0x6d8] sm:$0xff]
    %v245 = vld [vmem:[%s1 + $0x6e0] sm:$0xff]
    %v246 = vld [vmem:[%s1 + $0x6e8] sm:$0xff]
    %v247 = vld [vmem:[%s1 + $0x6f0] sm:$0xff]
    %v248 = vld [vmem:[%s1 + $0x6f8] sm:$0xff]
    %v249 = vld [vmem:[%s1 + $0x700] sm:$0xff]
    %v250 = vld [vmem:[%s1 + $0x708] sm:$0xff]
    %v251 = vld [vmem:[%s1 + $0x710] sm:$0xff]
    %v252 = vld [vmem:[%s1 + $0x718] sm:$0xff]
    %v253 = vld [vmem:[%s1 + $0x720] sm:$0xff]
    %v254 = vld [vmem:[%s1 + $0x728] sm:$0xff]
    %v255 = vld [vmem:[%s1 + $0x730] sm:$0xff]
    %v256 = vld [vmem:[%s1 + $0x738] sm:$0xff]
    %v257 = vld [vmem:[%s1 + $0x740] sm:$0xff]
    %v258 = vld [vmem:[%s1 + $0x748] sm:$0xff]
    %v259 = vld [vmem:[%s1 + $0x750] sm:$0xff]
    %v260 = vld [vmem:[%s1 + $0x758] sm:$0xff]
    %v261 = vld [vmem:[%s1 + $0x760] sm:$0xff]
    %v262 = vld [vmem:[%s1 + $0x768] sm:$0xff]
    %v263 = vld [vmem:[%s1 + $0x770] sm:$0xff]
    %v264 = vld [vmem:[%s1 + $0x778] sm:$0xff]
    %v265 = vld [vmem:[%s1 + $0x780] sm:$0xff]
    %v266 = vld [vmem:[%s1 + $0x788] sm:$0xff]
    %v267 = vld [vmem:[%s1 + $0x790] sm:$0xff]
    %v268 = vld [vmem:[%s1 + $0x798] sm:$0xff]
    %v269 = vld [vmem:[%s1 + $0x7a0] sm:$0xff]
    %v270 = vld [vmem:[%s1 + $0x7a8] sm:$0xff]
    %v271 = vld [vmem:[%s1 + $0x7b0] sm:$0xff]
    %v272 = vld [vmem:[%s1 + $0x7b8] sm:$0xff]
    %v273 = vld [vmem:[%s1 + $0x7c0] sm:$0xff]
    %v274 = vld [vmem:[%s1 + $0x7c8] sm:$0xff]
    %v275 = vld [vmem:[%s1 + $0x7d0] sm:$0xff]
    %v276 = vld [vmem:[%s1 + $0x7d8] sm:$0xff]
    %v277 = vld [vmem:[%s1 + $0x7e0] sm:$0xff]
    %v278 = vld [vmem:[%s1 + $0x7e8] sm:$0xff]
    %v279 = vld [vmem:[%s1 + $0x7f0] sm:$0xff]
    %v280 = vld [vmem:[%s1 + $0x7f8] sm:$0xff]
    %v281 = vld [vmem:[%s2] sm:$0x1]
    %v283 = vlaneseq
    %v284 = vshrl.u32 %v283, 7
    %v285 = vsub.s32 0, %v284
    %v286 = vrot.slane %v281, %v285
    %v292 = vcombine.high %v21, %v21
    %v294 = vunpack.c.l.s4 1983009808
    %v295 = vunpack.c.0.s8 %v294
    %v296 = vlaneseq
    %v297 = vshrl.u32 %v296, 7
    %v298 = vsub.s32 %v295, %v297
    %v299 = vrot.slane %v21, %v298
    %v301 = vunpack.c.l.s4 1983009808
    %v302 = vunpack.c.0.s8 %v301
    %v303 = vlaneseq
    %v304 = vshrl.u32 %v303, 7
    %v305 = vsub.s32 %v302, %v304
    %v306 = vrot.slane %v292, %v305
    %v307 = vcombine.high %v299, %v299
    %v308 = vcombine.high %v306, %v306
    %v309 = vcombine.high %v22, %v22
    %v311 = vunpack.c.l.s4 1983009808
    %v312 = vunpack.c.0.s8 %v311
    %v313 = vlaneseq
    %v314 = vshrl.u32 %v313, 7
    %v315 = vsub.s32 %v312, %v314
    %v316 = vrot.slane %v22, %v315
    %v318 = vunpack.c.l.s4 1983009808
    %v319 = vunpack.c.0.s8 %v318
    %v320 = vlaneseq
    %v321 = vshrl.u32 %v320, 7
    %v322 = vsub.s32 %v319, %v321
    %v323 = vrot.slane %v309, %v322
    %v324 = vcombine.high %v316, %v316
    %v325 = vcombine.high %v323, %v323
    %v326 = vcombine.high %v23, %v23
    %v328 = vunpack.c.l.s4 1983009808
    %v329 = vunpack.c.0.s8 %v328
    %v330 = vlaneseq
    %v331 = vshrl.u32 %v330, 7
    %v332 = vsub.s32 %v329, %v331
    %v333 = vrot.slane %v23, %v332
    %v335 = vunpack.c.l.s4 1983009808
    %v336 = vunpack.c.0.s8 %v335
    %v337 = vlaneseq
    %v338 = vshrl.u32 %v337, 7
    %v339 = vsub.s32 %v336, %v338
    %v340 = vrot.slane %v326, %v339
    %v341 = vcombine.high %v333, %v333
    %v342 = vcombine.high %v340, %v340
    %v343 = vcombine.high %v24, %v24
    %v345 = vunpack.c.l.s4 1983009808
    %v346 = vunpack.c.0.s8 %v345
    %v347 = vlaneseq
    %v348 = vshrl.u32 %v347, 7
    %v349 = vsub.s32 %v346, %v348
    %v350 = vrot.slane %v24, %v349
    %v352 = vunpack.c.l.s4 1983009808
    %v353 = vunpack.c.0.s8 %v352
    %v354 = vlaneseq
    %v355 = vshrl.u32 %v354, 7
    %v356 = vsub.s32 %v353, %v355
    %v357 = vrot.slane %v343, %v356
    %v358 = vcombine.high %v350, %v350
    %v359 = vcombine.high %v357, %v357
    %376 = vmatprep.subr.mxu0 0.0
    %377 = vmatpush1.msra.mxu0 %v25
    %378 = vmatprep.subr.mxu0 0.0
    %379 = vmatpush1.msra.mxu0 %v26
    %380 = vmatprep.subr.mxu0 0.0
    %381 = vmatpush1.msra.mxu0 %v27
    %382 = vmatprep.subr.mxu0 0.0
    %383 = vmatpush1.msra.mxu0 %v28
    %384 = vmatprep.subr.mxu0 0.0
    %385 = vmatpush1.msra.mxu0 %v29
    %386 = vmatprep.subr.mxu0 0.0
    %387 = vmatpush1.msra.mxu0 %v30
    %388 = vmatprep.subr.mxu0 0.0
    %389 = vmatpush1.msra.mxu0 %v31
    %390 = vmatprep.subr.mxu0 0.0
    %391 = vmatpush1.msra.mxu0 %v32
    %392 = vmatprep.subr.mxu0 0.0
    %393 = vmatpush1.msra.mxu0 %v33
    %394 = vmatprep.subr.mxu0 0.0
    %395 = vmatpush1.msra.mxu0 %v34
    %396 = vmatprep.subr.mxu0 0.0
    %397 = vmatpush1.msra.mxu0 %v35
    %398 = vmatprep.subr.mxu0 0.0
    %399 = vmatpush1.msra.mxu0 %v36
    %400 = vmatprep.subr.mxu0 0.0
    %401 = vmatpush1.msra.mxu0 %v37
    %402 = vmatprep.subr.mxu0 0.0
    %403 = vmatpush1.msra.mxu0 %v38
    %404 = vmatprep.subr.mxu0 0.0
    %405 = vmatpush1.msra.mxu0 %v39
    %406 = vmatprep.subr.mxu0 0.0
    %407 = vmatpush1.msra.mxu0 %v40
    %408 = vmatprep.subr.mxu0 0.0
    %409 = vmatpush1.msra.mxu0 %v41
    %410 = vmatprep.subr.mxu0 0.0
    %411 = vmatpush1.msra.mxu0 %v42
    %412 = vmatprep.subr.mxu0 0.0
    %413 = vmatpush1.msra.mxu0 %v43
    %414 = vmatprep.subr.mxu0 0.0
    %415 = vmatpush1.msra.mxu0 %v44
    %416 = vmatprep.subr.mxu0 0.0
    %417 = vmatpush1.msra.mxu0 %v45
    %418 = vmatprep.subr.mxu0 0.0
    %419 = vmatpush1.msra.mxu0 %v46
    %420 = vmatprep.subr.mxu0 0.0
    %421 = vmatpush1.msra.mxu0 %v47
    %422 = vmatprep.subr.mxu0 0.0
    %423 = vmatpush1.msra.mxu0 %v48
    %424 = vmatprep.subr.mxu0 0.0
    %425 = vmatpush1.msra.mxu0 %v49
    %426 = vmatprep.subr.mxu0 0.0
    %427 = vmatpush1.msra.mxu0 %v50
    %428 = vmatprep.subr.mxu0 0.0
    %429 = vmatpush1.msra.mxu0 %v51
    %430 = vmatprep.subr.mxu0 0.0
    %431 = vmatpush1.msra.mxu0 %v52
    %432 = vmatprep.subr.mxu0 0.0
    %433 = vmatpush1.msra.mxu0 %v53
    %434 = vmatprep.subr.mxu0 0.0
    %435 = vmatpush1.msra.mxu0 %v54
    %436 = vmatprep.subr.mxu0 0.0
    %437 = vmatpush1.msra.mxu0 %v55
    %438 = vmatprep.subr.mxu0 0.0
    %439 = vmatpush1.msra.mxu0 %v56
    %440 = vmatprep.mubr.f32.mxu0 %v307
    %441 = vmatmul.mubr.f32.gmra.mrb[0].mxu0 %v299
    %v442 = vpop.f32.mrb[0].mxu0
    %v443 = vadd.f32 %v286, %v442
    %v444 = vpop.f32.mrb[0].mxu0
    %445 = vdwg.mxu0
    %446 = vmatprep.subr.mxu0 0.0
    %447 = vmatpush1.msra.mxu0 %v57
    %448 = vmatprep.subr.mxu0 0.0
    %449 = vmatpush1.msra.mxu0 %v58
    %450 = vmatprep.subr.mxu0 0.0
    %451 = vmatpush1.msra.mxu0 %v59
    %452 = vmatprep.subr.mxu0 0.0
    %453 = vmatpush1.msra.mxu0 %v60
    %454 = vmatprep.subr.mxu0 0.0
    %455 = vmatpush1.msra.mxu0 %v61
    %456 = vmatprep.subr.mxu0 0.0
    %457 = vmatpush1.msra.mxu0 %v62
    %458 = vmatprep.subr.mxu0 0.0
    %459 = vmatpush1.msra.mxu0 %v63
    %460 = vmatprep.subr.mxu0 0.0
    %461 = vmatpush1.msra.mxu0 %v64
    %462 = vmatprep.subr.mxu0 0.0
    %463 = vmatpush1.msra.mxu0 %v65
    %464 = vmatprep.subr.mxu0 0.0
    %465 = vmatpush1.msra.mxu0 %v66
    %466 = vmatprep.subr.mxu0 0.0
    %467 = vmatpush1.msra.mxu0 %v67
    %468 = vmatprep.subr.mxu0 0.0
    %469 = vmatpush1.msra.mxu0 %v68
    %470 = vmatprep.subr.mxu0 0.0
    %471 = vmatpush1.msra.mxu0 %v69
    %472 = vmatprep.subr.mxu0 0.0
    %473 = vmatpush1.msra.mxu0 %v70
    %474 = vmatprep.subr.mxu0 0.0
    %475 = vmatpush1.msra.mxu0 %v71
    %476 = vmatprep.subr.mxu0 0.0
    %477 = vmatpush1.msra.mxu0 %v72
    %478 = vmatprep.subr.mxu0 0.0
    %479 = vmatpush1.msra.mxu0 %v73
    %480 = vmatprep.subr.mxu0 0.0
    %481 = vmatpush1.msra.mxu0 %v74
    %482 = vmatprep.subr.mxu0 0.0
    %483 = vmatpush1.msra.mxu0 %v75
    %484 = vmatprep.subr.mxu0 0.0
    %485 = vmatpush1.msra.mxu0 %v76
    %486 = vmatprep.subr.mxu0 0.0
    %487 = vmatpush1.msra.mxu0 %v77
    %488 = vmatprep.subr.mxu0 0.0
    %489 = vmatpush1.msra.mxu0 %v78
    %490 = vmatprep.subr.mxu0 0.0
    %491 = vmatpush1.msra.mxu0 %v79
    %492 = vmatprep.subr.mxu0 0.0
    %493 = vmatpush1.msra.mxu0 %v80
    %494 = vmatprep.subr.mxu0 0.0
    %495 = vmatpush1.msra.mxu0 %v81
    %496 = vmatprep.subr.mxu0 0.0
    %497 = vmatpush1.msra.mxu0 %v82
    %498 = vmatprep.subr.mxu0 0.0
    %499 = vmatpush1.msra.mxu0 %v83
    %500 = vmatprep.subr.mxu0 0.0
    %501 = vmatpush1.msra.mxu0 %v84
    %502 = vmatprep.subr.mxu0 0.0
    %503 = vmatpush1.msra.mxu0 %v85
    %504 = vmatprep.subr.mxu0 0.0
    %505 = vmatpush1.msra.mxu0 %v86
    %506 = vmatprep.subr.mxu0 0.0
    %507 = vmatpush1.msra.mxu0 %v87
    %508 = vmatprep.subr.mxu0 0.0
    %509 = vmatpush1.msra.mxu0 %v88
    %510 = vmatprep.mubr.f32.mxu0 %v308
    %511 = vmatmul.mubr.f32.gmra.mrb[0].mxu0 %v306
    %v512 = vpop.f32.mrb[0].mxu0
    %v513 = vadd.f32 %v443, %v512
    %v514 = vpop.f32.mrb[0].mxu0
    %515 = vdwg.mxu0
    %516 = vmatprep.subr.mxu0 0.0
    %517 = vmatpush1.msra.mxu0 %v89
    %518 = vmatprep.subr.mxu0 0.0
    %519 = vmatpush1.msra.mxu0 %v90
    %520 = vmatprep.subr.mxu0 0.0
    %521 = vmatpush1.msra.mxu0 %v91
    %522 = vmatprep.subr.mxu0 0.0
    %523 = vmatpush1.msra.mxu0 %v92
    %524 = vmatprep.subr.mxu0 0.0
    %525 = vmatpush1.msra.mxu0 %v93
    %526 = vmatprep.subr.mxu0 0.0
    %527 = vmatpush1.msra.mxu0 %v94
    %528 = vmatprep.subr.mxu0 0.0
    %529 = vmatpush1.msra.mxu0 %v95
    %530 = vmatprep.subr.mxu0 0.0
    %531 = vmatpush1.msra.mxu0 %v96
    %532 = vmatprep.subr.mxu0 0.0
    %533 = vmatpush1.msra.mxu0 %v97
    %534 = vmatprep.subr.mxu0 0.0
    %535 = vmatpush1.msra.mxu0 %v98
    %536 = vmatprep.subr.mxu0 0.0
    %537 = vmatpush1.msra.mxu0 %v99
    %538 = vmatprep.subr.mxu0 0.0
    %539 = vmatpush1.msra.mxu0 %v100
    %540 = vmatprep.subr.mxu0 0.0
    %541 = vmatpush1.msra.mxu0 %v101
    %542 = vmatprep.subr.mxu0 0.0
    %543 = vmatpush1.msra.mxu0 %v102
    %544 = vmatprep.subr.mxu0 0.0
    %545 = vmatpush1.msra.mxu0 %v103
    %546 = vmatprep.subr.mxu0 0.0
    %547 = vmatpush1.msra.mxu0 %v104
    %548 = vmatprep.subr.mxu0 0.0
    %549 = vmatpush1.msra.mxu0 %v105
    %550 = vmatprep.subr.mxu0 0.0
    %551 = vmatpush1.msra.mxu0 %v106
    %552 = vmatprep.subr.mxu0 0.0
    %553 = vmatpush1.msra.mxu0 %v107
    %554 = vmatprep.subr.mxu0 0.0
    %555 = vmatpush1.msra.mxu0 %v108
    %556 = vmatprep.subr.mxu0 0.0
    %557 = vmatpush1.msra.mxu0 %v109
    %558 = vmatprep.subr.mxu0 0.0
    %559 = vmatpush1.msra.mxu0 %v110
    %560 = vmatprep.subr.mxu0 0.0
    %561 = vmatpush1.msra.mxu0 %v111
    %562 = vmatprep.subr.mxu0 0.0
    %563 = vmatpush1.msra.mxu0 %v112
    %564 = vmatprep.subr.mxu0 0.0
    %565 = vmatpush1.msra.mxu0 %v113
    %566 = vmatprep.subr.mxu0 0.0
    %567 = vmatpush1.msra.mxu0 %v114
    %568 = vmatprep.subr.mxu0 0.0
    %569 = vmatpush1.msra.mxu0 %v115
    %570 = vmatprep.subr.mxu0 0.0
    %571 = vmatpush1.msra.mxu0 %v116
    %572 = vmatprep.subr.mxu0 0.0
    %573 = vmatpush1.msra.mxu0 %v117
    %574 = vmatprep.subr.mxu0 0.0
    %575 = vmatpush1.msra.mxu0 %v118
    %576 = vmatprep.subr.mxu0 0.0
    %577 = vmatpush1.msra.mxu0 %v119
    %578 = vmatprep.subr.mxu0 0.0
    %579 = vmatpush1.msra.mxu0 %v120
    %580 = vmatprep.mubr.f32.mxu0 %v324
    %581 = vmatmul.mubr.f32.gmra.mrb[0].mxu0 %v316
    %v582 = vpop.f32.mrb[0].mxu0
    %v583 = vadd.f32 %v513, %v582
    %v584 = vpop.f32.mrb[0].mxu0
    %585 = vdwg.mxu0
    %586 = vmatprep.subr.mxu0 0.0
    %587 = vmatpush1.msra.mxu0 %v121
    %588 = vmatprep.subr.mxu0 0.0
    %589 = vmatpush1.msra.mxu0 %v122
    %590 = vmatprep.subr.mxu0 0.0
    %591 = vmatpush1.msra.mxu0 %v123
    %592 = vmatprep.subr.mxu0 0.0
    %593 = vmatpush1.msra.mxu0 %v124
    %594 = vmatprep.subr.mxu0 0.0
    %595 = vmatpush1.msra.mxu0 %v125
    %596 = vmatprep.subr.mxu0 0.0
    %597 = vmatpush1.msra.mxu0 %v126
    %598 = vmatprep.subr.mxu0 0.0
    %599 = vmatpush1.msra.mxu0 %v127
    %600 = vmatprep.subr.mxu0 0.0
    %601 = vmatpush1.msra.mxu0 %v128
    %602 = vmatprep.subr.mxu0 0.0
    %603 = vmatpush1.msra.mxu0 %v129
    %604 = vmatprep.subr.mxu0 0.0
    %605 = vmatpush1.msra.mxu0 %v130
    %606 = vmatprep.subr.mxu0 0.0
    %607 = vmatpush1.msra.mxu0 %v131
    %608 = vmatprep.subr.mxu0 0.0
    %609 = vmatpush1.msra.mxu0 %v132
    %610 = vmatprep.subr.mxu0 0.0
    %611 = vmatpush1.msra.mxu0 %v133
    %612 = vmatprep.subr.mxu0 0.0
    %613 = vmatpush1.msra.mxu0 %v134
    %614 = vmatprep.subr.mxu0 0.0
    %615 = vmatpush1.msra.mxu0 %v135
    %616 = vmatprep.subr.mxu0 0.0
    %617 = vmatpush1.msra.mxu0 %v136
    %618 = vmatprep.subr.mxu0 0.0
    %619 = vmatpush1.msra.mxu0 %v137
    %620 = vmatprep.subr.mxu0 0.0
    %621 = vmatpush1.msra.mxu0 %v138
    %622 = vmatprep.subr.mxu0 0.0
    %623 = vmatpush1.msra.mxu0 %v139
    %624 = vmatprep.subr.mxu0 0.0
    %625 = vmatpush1.msra.mxu0 %v140
    %626 = vmatprep.subr.mxu0 0.0
    %627 = vmatpush1.msra.mxu0 %v141
    %628 = vmatprep.subr.mxu0 0.0
    %629 = vmatpush1.msra.mxu0 %v142
    %630 = vmatprep.subr.mxu0 0.0
    %631 = vmatpush1.msra.mxu0 %v143
    %632 = vmatprep.subr.mxu0 0.0
    %633 = vmatpush1.msra.mxu0 %v144
    %634 = vmatprep.subr.mxu0 0.0
    %635 = vmatpush1.msra.mxu0 %v145
    %636 = vmatprep.subr.mxu0 0.0
    %637 = vmatpush1.msra.mxu0 %v146
    %638 = vmatprep.subr.mxu0 0.0
    %639 = vmatpush1.msra.mxu0 %v147
    %640 = vmatprep.subr.mxu0 0.0
    %641 = vmatpush1.msra.mxu0 %v148
    %642 = vmatprep.subr.mxu0 0.0
    %643 = vmatpush1.msra.mxu0 %v149
    %644 = vmatprep.subr.mxu0 0.0
    %645 = vmatpush1.msra.mxu0 %v150
    %646 = vmatprep.subr.mxu0 0.0
    %647 = vmatpush1.msra.mxu0 %v151
    %648 = vmatprep.subr.mxu0 0.0
    %649 = vmatpush1.msra.mxu0 %v152
    %650 = vmatprep.mubr.f32.mxu0 %v325
    %651 = vmatmul.mubr.f32.gmra.mrb[0].mxu0 %v323
    %v652 = vpop.f32.mrb[0].mxu0
    %v653 = vadd.f32 %v583, %v652
    %v654 = vpop.f32.mrb[0].mxu0
    %655 = vdwg.mxu0
    %656 = vmatprep.subr.mxu0 0.0
    %657 = vmatpush1.msra.mxu0 %v153
    %658 = vmatprep.subr.mxu0 0.0
    %659 = vmatpush1.msra.mxu0 %v154
    %660 = vmatprep.subr.mxu0 0.0
    %661 = vmatpush1.msra.mxu0 %v155
    %662 = vmatprep.subr.mxu0 0.0
    %663 = vmatpush1.msra.mxu0 %v156
    %664 = vmatprep.subr.mxu0 0.0
    %665 = vmatpush1.msra.mxu0 %v157
    %666 = vmatprep.subr.mxu0 0.0
    %667 = vmatpush1.msra.mxu0 %v158
    %668 = vmatprep.subr.mxu0 0.0
    %669 = vmatpush1.msra.mxu0 %v159
    %670 = vmatprep.subr.mxu0 0.0
    %671 = vmatpush1.msra.mxu0 %v160
    %672 = vmatprep.subr.mxu0 0.0
    %673 = vmatpush1.msra.mxu0 %v161
    %674 = vmatprep.subr.mxu0 0.0
    %675 = vmatpush1.msra.mxu0 %v162
    %676 = vmatprep.subr.mxu0 0.0
    %677 = vmatpush1.msra.mxu0 %v163
    %678 = vmatprep.subr.mxu0 0.0
    %679 = vmatpush1.msra.mxu0 %v164
    %680 = vmatprep.subr.mxu0 0.0
    %681 = vmatpush1.msra.mxu0 %v165
    %682 = vmatprep.subr.mxu0 0.0
    %683 = vmatpush1.msra.mxu0 %v166
    %684 = vmatprep.subr.mxu0 0.0
    %685 = vmatpush1.msra.mxu0 %v167
    %686 = vmatprep.subr.mxu0 0.0
    %687 = vmatpush1.msra.mxu0 %v168
    %688 = vmatprep.subr.mxu0 0.0
    %689 = vmatpush1.msra.mxu0 %v169
    %690 = vmatprep.subr.mxu0 0.0
    %691 = vmatpush1.msra.mxu0 %v170
    %692 = vmatprep.subr.mxu0 0.0
    %693 = vmatpush1.msra.mxu0 %v171
    %694 = vmatprep.subr.mxu0 0.0
    %695 = vmatpush1.msra.mxu0 %v172
    %696 = vmatprep.subr.mxu0 0.0
    %697 = vmatpush1.msra.mxu0 %v173
    %698 = vmatprep.subr.mxu0 0.0
    %699 = vmatpush1.msra.mxu0 %v174
    %700 = vmatprep.subr.mxu0 0.0
    %701 = vmatpush1.msra.mxu0 %v175
    %702 = vmatprep.subr.mxu0 0.0
    %703 = vmatpush1.msra.mxu0 %v176
    %704 = vmatprep.subr.mxu0 0.0
    %705 = vmatpush1.msra.mxu0 %v177
    %706 = vmatprep.subr.mxu0 0.0
    %707 = vmatpush1.msra.mxu0 %v178
    %708 = vmatprep.subr.mxu0 0.0
    %709 = vmatpush1.msra.mxu0 %v179
    %710 = vmatprep.subr.mxu0 0.0
    %711 = vmatpush1.msra.mxu0 %v180
    %712 = vmatprep.subr.mxu0 0.0
    %713 = vmatpush1.msra.mxu0 %v181
    %714 = vmatprep.subr.mxu0 0.0
    %715 = vmatpush1.msra.mxu0 %v182
    %716 = vmatprep.subr.mxu0 0.0
    %717 = vmatpush1.msra.mxu0 %v183
    %718 = vmatprep.subr.mxu0 0.0
    %719 = vmatpush1.msra.mxu0 %v184
    %720 = vmatprep.mubr.f32.mxu0 %v341
    %721 = vmatmul.mubr.f32.gmra.mrb[0].mxu0 %v333
    %v722 = vpop.f32.mrb[0].mxu0
    %v723 = vadd.f32 %v653, %v722
    %v724 = vpop.f32.mrb[0].mxu0
    %725 = vdwg.mxu0
    %726 = vmatprep.subr.mxu0 0.0
    %727 = vmatpush1.msra.mxu0 %v185
    %728 = vmatprep.subr.mxu0 0.0
    %729 = vmatpush1.msra.mxu0 %v186
    %730 = vmatprep.subr.mxu0 0.0
    %731 = vmatpush1.msra.mxu0 %v187
    %732 = vmatprep.subr.mxu0 0.0
    %733 = vmatpush1.msra.mxu0 %v188
    %734 = vmatprep.subr.mxu0 0.0
    %735 = vmatpush1.msra.mxu0 %v189
    %736 = vmatprep.subr.mxu0 0.0
    %737 = vmatpush1.msra.mxu0 %v190
    %738 = vmatprep.subr.mxu0 0.0
    %739 = vmatpush1.msra.mxu0 %v191
    %740 = vmatprep.subr.mxu0 0.0
    %741 = vmatpush1.msra.mxu0 %v192
    %742 = vmatprep.subr.mxu0 0.0
    %743 = vmatpush1.msra.mxu0 %v193
    %744 = vmatprep.subr.mxu0 0.0
    %745 = vmatpush1.msra.mxu0 %v194
    %746 = vmatprep.subr.mxu0 0.0
    %747 = vmatpush1.msra.mxu0 %v195
    %748 = vmatprep.subr.mxu0 0.0
    %749 = vmatpush1.msra.mxu0 %v196
    %750 = vmatprep.subr.mxu0 0.0
    %751 = vmatpush1.msra.mxu0 %v197
    %752 = vmatprep.subr.mxu0 0.0
    %753 = vmatpush1.msra.mxu0 %v198
    %754 = vmatprep.subr.mxu0 0.0
    %755 = vmatpush1.msra.mxu0 %v199
    %756 = vmatprep.subr.mxu0 0.0
    %757 = vmatpush1.msra.mxu0 %v200
    %758 = vmatprep.subr.mxu0 0.0
    %759 = vmatpush1.msra.mxu0 %v201
    %760 = vmatprep.subr.mxu0 0.0
    %761 = vmatpush1.msra.mxu0 %v202
    %762 = vmatprep.subr.mxu0 0.0
    %763 = vmatpush1.msra.mxu0 %v203
    %764 = vmatprep.subr.mxu0 0.0
    %765 = vmatpush1.msra.mxu0 %v204
    %766 = vmatprep.subr.mxu0 0.0
    %767 = vmatpush1.msra.mxu0 %v205
    %768 = vmatprep.subr.mxu0 0.0
    %769 = vmatpush1.msra.mxu0 %v206
    %770 = vmatprep.subr.mxu0 0.0
    %771 = vmatpush1.msra.mxu0 %v207
    %772 = vmatprep.subr.mxu0 0.0
    %773 = vmatpush1.msra.mxu0 %v208
    %774 = vmatprep.subr.mxu0 0.0
    %775 = vmatpush1.msra.mxu0 %v209
    %776 = vmatprep.subr.mxu0 0.0
    %777 = vmatpush1.msra.mxu0 %v210
    %778 = vmatprep.subr.mxu0 0.0
    %779 = vmatpush1.msra.mxu0 %v211
    %780 = vmatprep.subr.mxu0 0.0
    %781 = vmatpush1.msra.mxu0 %v212
    %782 = vmatprep.subr.mxu0 0.0
    %783 = vmatpush1.msra.mxu0 %v213
    %784 = vmatprep.subr.mxu0 0.0
    %785 = vmatpush1.msra.mxu0 %v214
    %786 = vmatprep.subr.mxu0 0.0
    %787 = vmatpush1.msra.mxu0 %v215
    %788 = vmatprep.subr.mxu0 0.0
    %789 = vmatpush1.msra.mxu0 %v216
    %790 = vmatprep.mubr.f32.mxu0 %v342
    %791 = vmatmul.mubr.f32.gmra.mrb[0].mxu0 %v340
    %v792 = vpop.f32.mrb[0].mxu0
    %v793 = vadd.f32 %v723, %v792
    %v794 = vpop.f32.mrb[0].mxu0
    %795 = vdwg.mxu0
    %796 = vmatprep.subr.mxu0 0.0
    %797 = vmatpush1.msra.mxu0 %v217
    %798 = vmatprep.subr.mxu0 0.0
    %799 = vmatpush1.msra.mxu0 %v218
    %800 = vmatprep.subr.mxu0 0.0
    %801 = vmatpush1.msra.mxu0 %v219
    %802 = vmatprep.subr.mxu0 0.0
    %803 = vmatpush1.msra.mxu0 %v220
    %804 = vmatprep.subr.mxu0 0.0
    %805 = vmatpush1.msra.mxu0 %v221
    %806 = vmatprep.subr.mxu0 0.0
    %807 = vmatpush1.msra.mxu0 %v222
    %808 = vmatprep.subr.mxu0 0.0
    %809 = vmatpush1.msra.mxu0 %v223
    %810 = vmatprep.subr.mxu0 0.0
    %811 = vmatpush1.msra.mxu0 %v224
    %812 = vmatprep.subr.mxu0 0.0
    %813 = vmatpush1.msra.mxu0 %v225
    %814 = vmatprep.subr.mxu0 0.0
    %815 = vmatpush1.msra.mxu0 %v226
    %816 = vmatprep.subr.mxu0 0.0
    %817 = vmatpush1.msra.mxu0 %v227
    %818 = vmatprep.subr.mxu0 0.0
    %819 = vmatpush1.msra.mxu0 %v228
    %820 = vmatprep.subr.mxu0 0.0
    %821 = vmatpush1.msra.mxu0 %v229
    %822 = vmatprep.subr.mxu0 0.0
    %823 = vmatpush1.msra.mxu0 %v230
    %824 = vmatprep.subr.mxu0 0.0
    %825 = vmatpush1.msra.mxu0 %v231
    %826 = vmatprep.subr.mxu0 0.0
    %827 = vmatpush1.msra.mxu0 %v232
    %828 = vmatprep.subr.mxu0 0.0
    %829 = vmatpush1.msra.mxu0 %v233
    %830 = vmatprep.subr.mxu0 0.0
    %831 = vmatpush1.msra.mxu0 %v234
    %832 = vmatprep.subr.mxu0 0.0
    %833 = vmatpush1.msra.mxu0 %v235
    %834 = vmatprep.subr.mxu0 0.0
    %835 = vmatpush1.msra.mxu0 %v236
    %836 = vmatprep.subr.mxu0 0.0
    %837 = vmatpush1.msra.mxu0 %v237
    %838 = vmatprep.subr.mxu0 0.0
    %839 = vmatpush1.msra.mxu0 %v238
    %840 = vmatprep.subr.mxu0 0.0
    %841 = vmatpush1.msra.mxu0 %v239
    %842 = vmatprep.subr.mxu0 0.0
    %843 = vmatpush1.msra.mxu0 %v240
    %844 = vmatprep.subr.mxu0 0.0
    %845 = vmatpush1.msra.mxu0 %v241
    %846 = vmatprep.subr.mxu0 0.0
    %847 = vmatpush1.msra.mxu0 %v242
    %848 = vmatprep.subr.mxu0 0.0
    %849 = vmatpush1.msra.mxu0 %v243
    %850 = vmatprep.subr.mxu0 0.0
    %851 = vmatpush1.msra.mxu0 %v244
    %852 = vmatprep.subr.mxu0 0.0
    %853 = vmatpush1.msra.mxu0 %v245
    %854 = vmatprep.subr.mxu0 0.0
    %855 = vmatpush1.msra.mxu0 %v246
    %856 = vmatprep.subr.mxu0 0.0
    %857 = vmatpush1.msra.mxu0 %v247
    %858 = vmatprep.subr.mxu0 0.0
    %859 = vmatpush1.msra.mxu0 %v248
    %860 = vmatprep.mubr.f32.mxu0 %v358
    %861 = vmatmul.mubr.f32.gmra.mrb[0].mxu0 %v350
    %v862 = vpop.f32.mrb[0].mxu0
    %v863 = vadd.f32 %v793, %v862
    %v864 = vpop.f32.mrb[0].mxu0
    %865 = vdwg.mxu0
    %866 = vmatprep.subr.mxu0 0.0
    %867 = vmatpush1.msra.mxu0 %v249
    %868 = vmatprep.subr.mxu0 0.0
    %869 = vmatpush1.msra.mxu0 %v250
    %870 = vmatprep.subr.mxu0 0.0
    %871 = vmatpush1.msra.mxu0 %v251
    %872 = vmatprep.subr.mxu0 0.0
    %873 = vmatpush1.msra.mxu0 %v252
    %874 = vmatprep.subr.mxu0 0.0
    %875 = vmatpush1.msra.mxu0 %v253
    %876 = vmatprep.subr.mxu0 0.0
    %877 = vmatpush1.msra.mxu0 %v254
    %878 = vmatprep.subr.mxu0 0.0
    %879 = vmatpush1.msra.mxu0 %v255
    %880 = vmatprep.subr.mxu0 0.0
    %881 = vmatpush1.msra.mxu0 %v256
    %882 = vmatprep.subr.mxu0 0.0
    %883 = vmatpush1.msra.mxu0 %v257
    %884 = vmatprep.subr.mxu0 0.0
    %885 = vmatpush1.msra.mxu0 %v258
    %886 = vmatprep.subr.mxu0 0.0
    %887 = vmatpush1.msra.mxu0 %v259
    %888 = vmatprep.subr.mxu0 0.0
    %889 = vmatpush1.msra.mxu0 %v260
    %890 = vmatprep.subr.mxu0 0.0
    %891 = vmatpush1.msra.mxu0 %v261
    %892 = vmatprep.subr.mxu0 0.0
    %893 = vmatpush1.msra.mxu0 %v262
    %894 = vmatprep.subr.mxu0 0.0
    %895 = vmatpush1.msra.mxu0 %v263
    %896 = vmatprep.subr.mxu0 0.0
    %897 = vmatpush1.msra.mxu0 %v264
    %898 = vmatprep.subr.mxu0 0.0
    %899 = vmatpush1.msra.mxu0 %v265
    %900 = vmatprep.subr.mxu0 0.0
    %901 = vmatpush1.msra.mxu0 %v266
    %902 = vmatprep.subr.mxu0 0.0
    %903 = vmatpush1.msra.mxu0 %v267
    %904 = vmatprep.subr.mxu0 0.0
    %905 = vmatpush1.msra.mxu0 %v268
    %906 = vmatprep.subr.mxu0 0.0
    %907 = vmatpush1.msra.mxu0 %v269
    %908 = vmatprep.subr.mxu0 0.0
    %909 = vmatpush1.msra.mxu0 %v270
    %910 = vmatprep.subr.mxu0 0.0
    %911 = vmatpush1.msra.mxu0 %v271
    %912 = vmatprep.subr.mxu0 0.0
    %913 = vmatpush1.msra.mxu0 %v272
    %914 = vmatprep.subr.mxu0 0.0
    %915 = vmatpush1.msra.mxu0 %v273
    %916 = vmatprep.subr.mxu0 0.0
    %917 = vmatpush1.msra.mxu0 %v274
    %918 = vmatprep.subr.mxu0 0.0
    %919 = vmatpush1.msra.mxu0 %v275
    %920 = vmatprep.subr.mxu0 0.0
    %921 = vmatpush1.msra.mxu0 %v276
    %922 = vmatprep.subr.mxu0 0.0
    %923 = vmatpush1.msra.mxu0 %v277
    %924 = vmatprep.subr.mxu0 0.0
    %925 = vmatpush1.msra.mxu0 %v278
    %926 = vmatprep.subr.mxu0 0.0
    %927 = vmatpush1.msra.mxu0 %v279
    %928 = vmatprep.subr.mxu0 0.0
    %929 = vmatpush1.msra.mxu0 %v280
    %930 = vmatprep.mubr.f32.mxu0 %v359
    %931 = vmatmul.mubr.f32.gmra.mrb[0].mxu0 %v357
    %v932 = vpop.f32.mrb[0].mxu0
    %v933 = vadd.f32 %v863, %v932
    %v934 = vpop.f32.mrb[0].mxu0
    %935 = vdwg.mxu0
    %v936 = vmax.f32 %v933, 0.0
    %v937 = vld [vmem:[%s3] sm:$0xff]
    %v938 = vld [vmem:[%s3 + $0x8] sm:$0xff]
    %v939 = vld [vmem:[%s3 + $0x10] sm:$0xff]
    %v940 = vld [vmem:[%s3 + $0x18] sm:$0xff]
    %v941 = vld [vmem:[%s3 + $0x20] sm:$0xff]
    %v942 = vld [vmem:[%s3 + $0x28] sm:$0xff]
    %v943 = vld [vmem:[%s3 + $0x30] sm:$0xff]
    %v944 = vld [vmem:[%s3 + $0x38] sm:$0xff]
    %v945 = vld [vmem:[%s3 + $0x40] sm:$0xff]
    %v946 = vld [vmem:[%s3 + $0x48] sm:$0xff]
    %v947 = vld [vmem:[%s3 + $0x50] sm:$0xff]
    %v948 = vld [vmem:[%s3 + $0x58] sm:$0xff]
    %v949 = vld [vmem:[%s3 + $0x60] sm:$0xff]
    %v950 = vld [vmem:[%s3 + $0x68] sm:$0xff]
    %v951 = vld [vmem:[%s3 + $0x70] sm:$0xff]
    %v952 = vld [vmem:[%s3 + $0x78] sm:$0xff]
    %v953 = vld [vmem:[%s4] sm:$0x1]
    %v955 = vlaneseq
    %v956 = vshrl.u32 %v955, 7
    %v957 = vsub.s32 0, %v956
    %v958 = vrot.slane %v953, %v957
    %960 = vmatprep.subr.mxu0 0.0
    %961 = vmatpush1.msra.mxu0 %v937
    %962 = vmatprep.subr.mxu0 0.0
    %963 = vmatpush1.msra.mxu0 %v938
    %964 = vmatprep.subr.mxu0 0.0
    %965 = vmatpush1.msra.mxu0 %v939
    %966 = vmatprep.subr.mxu0 0.0
    %967 = vmatpush1.msra.mxu0 %v940
    %968 = vmatprep.subr.mxu0 0.0
    %969 = vmatpush1.msra.mxu0 %v941
    %970 = vmatprep.subr.mxu0 0.0
    %971 = vmatpush1.msra.mxu0 %v942
    %972 = vmatprep.subr.mxu0 0.0
    %973 = vmatpush1.msra.mxu0 %v943
    %974 = vmatprep.subr.mxu0 0.0
    %975 = vmatpush1.msra.mxu0 %v944
    %976 = vmatprep.subr.mxu0 0.0
    %977 = vmatpush1.msra.mxu0 %v945
    %978 = vmatprep.subr.mxu0 0.0
    %979 = vmatpush1.msra.mxu0 %v946
    %980 = vmatprep.subr.mxu0 0.0
    %981 = vmatpush1.msra.mxu0 %v947
    %982 = vmatprep.subr.mxu0 0.0
    %983 = vmatpush1.msra.mxu0 %v948
    %984 = vmatprep.subr.mxu0 0.0
    %985 = vmatpush1.msra.mxu0 %v949
    %986 = vmatprep.subr.mxu0 0.0
    %987 = vmatpush1.msra.mxu0 %v950
    %988 = vmatprep.subr.mxu0 0.0
    %989 = vmatpush1.msra.mxu0 %v951
    %990 = vmatprep.subr.mxu0 0.0
    %991 = vmatpush1.msra.mxu0 %v952
    %992 = vmatprep.subr.mxu0 0.0
    %993 = vmatpush1.msra.mxu0 0.0
    %994 = vmatprep.subr.mxu0 0.0
    %995 = vmatpush1.msra.mxu0 0.0
    %996 = vmatprep.subr.mxu0 0.0
    %997 = vmatpush1.msra.mxu0 0.0
    %998 = vmatprep.subr.mxu0 0.0
    %999 = vmatpush1.msra.mxu0 0.0
    %1000 = vmatprep.subr.mxu0 0.0
    %1001 = vmatpush1.msra.mxu0 0.0
    %1002 = vmatprep.subr.mxu0 0.0
    %1003 = vmatpush1.msra.mxu0 0.0
    %1004 = vmatprep.subr.mxu0 0.0
    %1005 = vmatpush1.msra.mxu0 0.0
    %1006 = vmatprep.subr.mxu0 0.0
    %1007 = vmatpush1.msra.mxu0 0.0
    %1008 = vmatprep.subr.mxu0 0.0
    %1009 = vmatpush1.msra.mxu0 0.0
    %1010 = vmatprep.subr.mxu0 0.0
    %1011 = vmatpush1.msra.mxu0 0.0
    %1012 = vmatprep.subr.mxu0 0.0
    %1013 = vmatpush1.msra.mxu0 0.0
    %1014 = vmatprep.subr.mxu0 0.0
    %1015 = vmatpush1.msra.mxu0 0.0
    %1016 = vmatprep.subr.mxu0 0.0
    %1017 = vmatpush1.msra.mxu0 0.0
    %1018 = vmatprep.subr.mxu0 0.0
    %1019 = vmatpush1.msra.mxu0 0.0
    %1020 = vmatprep.subr.mxu0 0.0
    %1021 = vmatpush1.msra.mxu0 0.0
    %1022 = vmatprep.subr.mxu0 0.0
    %1023 = vmatpush1.msra.mxu0 0.0
    %1024 = vmatprep.mubr.f32.mxu0 0.0
    %1025 = vmatmul.mubr.f32.gmra.mrb[0].mxu0 %v936
    %v1026 = vpop.f32.mrb[0].mxu0
    %v1027 = vadd.f32 %v958, %v1026
    %v1028 = vpop.f32.mrb[0].mxu0
    %1029 = vdwg.mxu0
    %1030 = vst [vmem:[#allocation2] sm:$0x3] %v1027
    // Predicated region
    $region22: #{conv_model_forward.3} parent=1 // pred_check
      _
    $region23: #{conv_model_forward.3} parent=1 // pred_check_branch
      %1032 = sbr.rel (0) target = $region25
    $region24: #{conv_model_forward.3} parent=1 // pred_region
      %s1034 = ssub.s32 32, 32
      %1035 = vsyncadd [#allocation3], %s1034
      %s1037 = sshll.u32 [#allocation2], 4
      %s1038 = int_to_ptr.vmem [resolvable:$true] %s1037
      %1040 = dma.vmem_to_hbm [thread:$0]  %s1038, 32, %s5, [#allocation3]
    $region25: #{conv_model_forward.3} parent=1 // pred_fallthru
      _
    // Predicated region
    $region26: #{conv_model_forward.3} parent=1 // pred_check
      _
    $region27: #{conv_model_forward.3} parent=1 // pred_check_branch
      %1042 = sbr.rel (0) target = $region29
    $region28: #{conv_model_forward.3} parent=1 // pred_region
      %1043 = dma.done [#allocation3], 32
    $region29: #{conv_model_forward.3} parent=1 // pred_fallthru
      _
    %1044 = vsyncpa [#allocation3], 1

// kernel: conv_model_forward.2
$region0: #{conv_model_forward.2}
  #allocation0 [shape = 'u32[]', space=smem, size = 0x4, offset = 0x4, fixed_abs, tag = 'smem constant byte address 0x4 - core index']
  #allocation1 [shape = 'u32[144,128]{1,0:T(1,128)}', space=vmem, size = 0x12000, scoped, tag = 'internal scratch']
  #allocation2 [shape = 'f32[512,16]{1,0:T(8,128)}', space=vmem, size = 0x40000, scoped, tag = 'scratch operand']
  #allocation3 [shape = 'f32[304,16]{1,0:T(8,128)}', space=vmem, size = 0x26000, scoped, tag = 'scratch operand']
  #allocation4 [shape = 'f32[128,32]{1,0:T(8,128)}', space=vmem, size = 0x10000, scoped, tag = 'scratch operand']
  %s0 = inlined_call_operand.vmem [shape: f32[2,1024,32], index: 0, kind: input, shape index: {}]
  %s1 = inlined_call_operand.vmem [shape: f32[32,16], index: 1, kind: input, shape index: {}]
  %s2 = inlined_call_operand.vmem [shape: f32[1,16], index: 2, kind: input, shape index: {}]
  %s3 = inlined_call_operand.vmem [shape: f32[144,32], index: 3, kind: input, shape index: {}]
  %s4 = inlined_call_operand.vmem [shape: f32[1,32], index: 4, kind: input, shape index: {}]
  %s5 = inlined_call_operand.vmem [shape: f32[2,64,32], index: 5, kind: output, shape index: {}]
  %s6 = sld [smem:[#allocation0]]
  $region53: #{conv_model_forward.2} parent=0
    _
  %s8 = ssub.s32 1, %s6
  %s9 = scalar_select 0, %s8, %s6
  loop: start=0, step=1, limit=4
  $region2: #{conv_model_forward.2} parent=0 // loop_pre_header
    _
  $region3: #{conv_model_forward.2} parent=0 // loop_header
    %s11 = sphi 0, %s15
    %p12 = scmp.ge.s32.totalorder %s11, 4
    %s21 = sphi 0, %s23
    %s24 = sphi 0, %s21
    %s25 = sphi 0, %s24
    %s41 = sphi 0, %s25
    %s45 = sphi 0, %s45
    %s47 = sphi 0, %s45
    %s48 = sphi 0, %s47
    %s62 = sphi 0, %s48
    %s66 = sphi 0, %s66
    %s68 = sphi 0, %s66
    %s69 = sphi 0, %s68
    %s83 = sphi 0, %s69
    %s87 = sphi 0, %s87
    %s89 = sphi 0, %s87
    %s90 = sphi 0, %s89
    %s104 = sphi 0, %s90
    %s108 = sphi 0, %s108
    %s110 = sphi 0, %s108
    %s111 = sphi 0, %s110
    %s125 = sphi 0, %s111
    %s131 = sphi 0, %s133
    %s134 = sphi 0, %s131
    %s135 = sphi 0, %s134
    %s151 = sphi 0, %s135
  $region4: #{conv_model_forward.2} parent=0 // loop_header_branch
    %14 = sbr.rel (%p12) target = $region8
  $region5: #{conv_model_forward.2} parent=0 // loop_body
    %s16 = ssub.s32 %s11, 1
    %s17 = ssub.s32 %s11, 2
    %s18 = sadd.s32 %s11, 1
    %s19 = ssub.s32 %s11, %s18
    %p20 = scmp.eq.s32.totalorder %s19, 0
    %s22 = sadd.s32 %s21, 1
    %s23 = scalar_select %p20, %s21, %s22
    %p26 = pneg %p20
    %p27 = scmp.eq.s32.totalorder %s11, 1
    %p28 = por %p26, %p27
    %p29 = scmp.ne.s32.totalorder %s21, %s24
    %p30 = scmp.eq.s32.totalorder %s11, 0
    %p31 = por %p29, %p30
    %p32 = scmp.ne.s32.totalorder %s21, %s24
    %p33 = scmp.eq.s32.totalorder %s16, 1
    %p34 = por %p32, %p33
    %p35 = scmp.ne.s32.totalorder %s24, %s25
    %p36 = scmp.eq.s32.totalorder %s16, 0
    %p37 = por %p35, %p36
    %p38 = scmp.ne.s32.totalorder %s24, %s25
    %p39 = scmp.eq.s32.totalorder %s17, 1
    %p40 = por %p38, %p39
    %p42 = scmp.ne.s32.totalorder %s25, %s41
    %p43 = scmp.eq.s32.totalorder %s17, 0
    %p44 = por %p42, %p43
    %s46 = sadd.s32 %s45, 1
    %p49 = scmp.eq.s32.totalorder %s11, 1
    %p50 = scmp.ne.s32.totalorder %s45, %s47
    %p51 = scmp.eq.s32.totalorder %s11, 0
    %p52 = por %p50, %p51
    %p53 = scmp.ne.s32.totalorder %s45, %s47
    %p54 = scmp.eq.s32.totalorder %s16, 1
    %p55 = por %p53, %p54
    %p56 = scmp.ne.s32.totalorder %s47, %s48
    %p57 = scmp.eq.s32.totalorder %s16, 0
    %p58 = por %p56, %p57
    %p59 = scmp.ne.s32.totalorder %s47, %s48
    %p60 = scmp.eq.s32.totalorder %s17, 1
    %p61 = por %p59, %p60
    %p63 = scmp.ne.s32.totalorder %s48, %s62
    %p64 = scmp.eq.s32.totalorder %s17, 0
    %p65 = por %p63, %p64
    %s67 = sadd.s32 %s66, 1
    %p70 = scmp.eq.s32.totalorder %s11, 1
    %p71 = scmp.ne.s32.totalorder %s66, %s68
    %p72 = scmp.eq.s32.totalorder %s11, 0
    %p73 = por %p71, %p72
    %p74 = scmp.ne.s32.totalorder %s66, %s68
    %p75 = scmp.eq.s32.totalorder %s16, 1
    %p76 = por %p74, %p75
    %p77 = scmp.ne.s32.totalorder %s68, %s69
    %p78 = scmp.eq.s32.totalorder %s16, 0
    %p79 = por %p77, %p78
    %p80 = scmp.ne.s32.totalorder %s68, %s69
    %p81 = scmp.eq.s32.totalorder %s17, 1
    %p82 = por %p80, %p81
    %p84 = scmp.ne.s32.totalorder %s69, %s83
    %p85 = scmp.eq.s32.totalorder %s17, 0
    %p86 = por %p84, %p85
    %s88 = sadd.s32 %s87, 1
    %p91 = scmp.eq.s32.totalorder %s11, 1
    %p92 = scmp.ne.s32.totalorder %s87, %s89
    %p93 = scmp.eq.s32.totalorder %s11, 0
    %p94 = por %p92, %p93
    %p95 = scmp.ne.s32.totalorder %s87, %s89
    %p96 = scmp.eq.s32.totalorder %s16, 1
    %p97 = por %p95, %p96
    %p98 = scmp.ne.s32.totalorder %s89, %s90
    %p99 = scmp.eq.s32.totalorder %s16, 0
    %p100 = por %p98, %p99
    %p101 = scmp.ne.s32.totalorder %s89, %s90
    %p102 = scmp.eq.s32.totalorder %s17, 1
    %p103 = por %p101, %p102
    %p105 = scmp.ne.s32.totalorder %s90, %s104
    %p106 = scmp.eq.s32.totalorder %s17, 0
    %p107 = por %p105, %p106
    %s109 = sadd.s32 %s108, 1
    %p112 = scmp.eq.s32.totalorder %s11, 1
    %p113 = scmp.ne.s32.totalorder %s108, %s110
    %p114 = scmp.eq.s32.totalorder %s11, 0
    %p115 = por %p113, %p114
    %p116 = scmp.ne.s32.totalorder %s108, %s110
    %p117 = scmp.eq.s32.totalorder %s16, 1
    %p118 = por %p116, %p117
    %p119 = scmp.ne.s32.totalorder %s110, %s111
    %p120 = scmp.eq.s32.totalorder %s16, 0
    %p121 = por %p119, %p120
    %p122 = scmp.ne.s32.totalorder %s110, %s111
    %p123 = scmp.eq.s32.totalorder %s17, 1
    %p124 = por %p122, %p123
    %p126 = scmp.ne.s32.totalorder %s111, %s125
    %p127 = scmp.eq.s32.totalorder %s17, 0
    %p128 = por %p126, %p127
    %s129 = ssub.s32 %s11, %s18
    %p130 = scmp.eq.s32.totalorder %s129, 0
    %s132 = sadd.s32 %s131, 1
    %s133 = scalar_select %p130, %s131, %s132
    %p136 = pneg %p130
    %p137 = scmp.eq.s32.totalorder %s11, 1
    %p138 = por %p136, %p137
    %p139 = scmp.ne.s32.totalorder %s131, %s134
    %p140 = scmp.eq.s32.totalorder %s11, 0
    %p141 = por %p139, %p140
    %p142 = scmp.ne.s32.totalorder %s131, %s134
    %p143 = scmp.eq.s32.totalorder %s16, 1
    %p144 = por %p142, %p143
    %p145 = scmp.ne.s32.totalorder %s134, %s135
    %p146 = scmp.eq.s32.totalorder %s16, 0
    %p147 = por %p145, %p146
    %p148 = scmp.ne.s32.totalorder %s134, %s135
    %p149 = scmp.eq.s32.totalorder %s17, 1
    %p150 = por %p148, %p149
    %p152 = scmp.ne.s32.totalorder %s135, %s151
    %p153 = scmp.eq.s32.totalorder %s17, 0
    %p154 = por %p152, %p153
    %p155 = scmp.le.s32.totalorder 1, %s11
    %p156 = scmp.lt.s32.totalorder %s11, 3
    %p157 = pnand %p155, %p156
    %p158 = pneg %p157
    // Predicated region
    $region9: #{conv_model_forward.2} parent=5 // pred_check
      _
    $region10: #{conv_model_forward.2} parent=5 // pred_check_branch
      %160 = sbr.rel (%p157) target = $region12
    $region11: #{conv_model_forward.2} parent=5 // pred_region
      %s161 = ssub.s32 %s11, 1
      // Predicated region
      $region13: #{conv_model_forward.2} parent=11 // pred_check
        %p162 = pneg %p58
      $region14: #{conv_model_forward.2} parent=11 // pred_check_branch
        %164 = sbr.rel (%p162) target = $region16
      $region15: #{conv_model_forward.2} parent=11 // pred_region
        _
      $region16: #{conv_model_forward.2} parent=11 // pred_fallthru
        _
      // Predicated region
      $region17: #{conv_model_forward.2} parent=11 // pred_check
        %p165 = pneg %p79
      $region18: #{conv_model_forward.2} parent=11 // pred_check_branch
        %167 = sbr.rel (%p165) target = $region20
      $region19: #{conv_model_forward.2} parent=11 // pred_region
        _
      $region20: #{conv_model_forward.2} parent=11 // pred_fallthru
        _
      // Predicated region
      $region21: #{conv_model_forward.2} parent=11 // pred_check
        %p168 = pneg %p100
      $region22: #{conv_model_forward.2} parent=11 // pred_check_branch
        %170 = sbr.rel (%p168) target = $region24
      $region23: #{conv_model_forward.2} parent=11 // pred_region
        _
      $region24: #{conv_model_forward.2} parent=11 // pred_fallthru
        _
      // Predicated region
      $region25: #{conv_model_forward.2} parent=11 // pred_check
        %p171 = pneg %p121
      $region26: #{conv_model_forward.2} parent=11 // pred_check_branch
        %173 = sbr.rel (%p171) target = $region28
      $region27: #{conv_model_forward.2} parent=11 // pred_region
        _
      $region28: #{conv_model_forward.2} parent=11 // pred_fallthru
        _
    $region12: #{conv_model_forward.2} parent=5 // pred_fallthru
      _
    %p174 = scmp.lt.s32.totalorder %s11, 2
    // Predicated region
    $region29: #{conv_model_forward.2} parent=5 // pred_check
      %p175 = pneg %p174
    $region30: #{conv_model_forward.2} parent=5 // pred_check_branch
      %177 = sbr.rel (%p175) target = $region32
    $region31: #{conv_model_forward.2} parent=5 // pred_region
      // Predicated region
      $region33: #{conv_model_forward.2} parent=31 // pred_check
        %p178 = pneg %p31
      $region34: #{conv_model_forward.2} parent=31 // pred_check_branch
        %180 = sbr.rel (%p178) target = $region36
      $region35: #{conv_model_forward.2} parent=31 // pred_region
        %p181 = scmp.lt.s32.totalorder %s11, 1
        %s182 = scalar_select %p181, %s11, 1
        %s183 = smul.addr %s182, 128
        %s184 = smul.addr %s183, 8
        %s185 = scalar_lea.vmem %s0, %s184
      $region36: #{conv_model_forward.2} parent=31 // pred_fallthru
        _
    $region32: #{conv_model_forward.2} parent=5 // pred_fallthru
      _
    %p186 = scmp.le.s32.totalorder 1, %s11
    %p187 = scmp.lt.s32.totalorder %s11, 3
    %p188 = pnand %p186, %p187
    %p189 = pneg %p188
    // Predicated region
    $region37: #{conv_model_forward.2} parent=5 // pred_check
      _
    $region38: #{conv_model_forward.2} parent=5 // pred_check_branch
      %191 = sbr.rel (%p188) target = $region40
    $region39: #{conv_model_forward.2} parent=5 // pred_region
      %s192 = ssub.s32 %s11, 1
      %p193 = scmp.lt.s32.totalorder %s16, 1
      %s194 = scalar_select %p193, %s16, 1
      %s195 = smul.addr %s194, 128
      %s196 = smul.addr %s195, 8
      %s197 = scalar_lea.vmem %s0, %s196
      %p198 = pneg %p37
      %p199 = pneg %p34
      %p200 = pneg %p58
      %p201 = pneg %p55
      %p202 = pneg %p79
      %p203 = pneg %p76
      %p204 = pneg %p100
      %p205 = pneg %p97
      %p206 = pneg %p121
      %p207 = pneg %p118
      %p208 = pneg %p147
      %p209 = pneg %p144
      %p210 = scmp.lt.s32.totalorder %s16, 1
      %s211 = scalar_select %p210, %s16, 1
      %s212 = smul.addr %s211, 8
      %s213 = smul.addr %s212, 8
      %s214 = scalar_lea.vmem %s5, %s213
      %p215 = scmp.lt.s32.totalorder %s16, 1
      %s216 = scalar_select %p215, %s16, 1
      %s217 = smul.addr %s216, 128
      %s218 = smul.addr %s217, 8
      %s219 = scalar_lea.vmem %s0, %s218
      %p220 = scmp.lt.s32.totalorder %s16, 1
      %s221 = scalar_select %p220, %s16, 1
      %s222 = smul.addr %s221, 8
      %s223 = smul.addr %s222, 8
      %s224 = scalar_lea.vmem %s5, %s223
      %v225 = vld [vmem:[%s219] sm:$0xff]
      %v226 = vld [vmem:[%s219 + $0x8] sm:$0xff]
      %v227 = vld [vmem:[%s219 + $0x10] sm:$0xff]
      %v228 = vld [vmem:[%s219 + $0x18] sm:$0xff]
      %v229 = vld [vmem:[%s219 + $0x20] sm:$0xff]
      %v230 = vld [vmem:[%s219 + $0x28] sm:$0xff]
      %v231 = vld [vmem:[%s219 + $0x30] sm:$0xff]
      %v232 = vld [vmem:[%s219 + $0x38] sm:$0xff]
      %v233 = vld [vmem:[%s219 + $0x40] sm:$0xff]
      %v234 = vld [vmem:[%s219 + $0x48] sm:$0xff]
      %v235 = vld [vmem:[%s219 + $0x50] sm:$0xff]
      %v236 = vld [vmem:[%s219 + $0x58] sm:$0xff]
      %v237 = vld [vmem:[%s219 + $0x60] sm:$0xff]
      %v238 = vld [vmem:[%s219 + $0x68] sm:$0xff]
      %v239 = vld [vmem:[%s219 + $0x70] sm:$0xff]
      %v240 = vld [vmem:[%s219 + $0x78] sm:$0xff]
      %v241 = vld [vmem:[%s219 + $0x80] sm:$0xff]
      %v242 = vld [vmem:[%s219 + $0x88] sm:$0xff]
      %v243 = vld [vmem:[%s219 + $0x90] sm:$0xff]
      %v244 = vld [vmem:[%s219 + $0x98] sm:$0xff]
      %v245 = vld [vmem:[%s219 + $0xa0] sm:$0xff]
      %v246 = vld [vmem:[%s219 + $0xa8] sm:$0xff]
      %v247 = vld [vmem:[%s219 + $0xb0] sm:$0xff]
      %v248 = vld [vmem:[%s219 + $0xb8] sm:$0xff]
      %v249 = vld [vmem:[%s219 + $0xc0] sm:$0xff]
      %v250 = vld [vmem:[%s219 + $0xc8] sm:$0xff]
      %v251 = vld [vmem:[%s219 + $0xd0] sm:$0xff]
      %v252 = vld [vmem:[%s219 + $0xd8] sm:$0xff]
      %v253 = vld [vmem:[%s219 + $0xe0] sm:$0xff]
      %v254 = vld [vmem:[%s219 + $0xe8] sm:$0xff]
      %v255 = vld [vmem:[%s219 + $0xf0] sm:$0xff]
      %v256 = vld [vmem:[%s219 + $0xf8] sm:$0xff]
      %v257 = vld [vmem:[%s219 + $0x100] sm:$0xff]
      %v258 = vld [vmem:[%s219 + $0x108] sm:$0xff]
      %v259 = vld [vmem:[%s219 + $0x110] sm:$0xff]
      %v260 = vld [vmem:[%s219 + $0x118] sm:$0xff]
      %v261 = vld [vmem:[%s219 + $0x120] sm:$0xff]
      %v262 = vld [vmem:[%s219 + $0x128] sm:$0xff]
      %v263 = vld [vmem:[%s219 + $0x130] sm:$0xff]
      %v264 = vld [vmem:[%s219 + $0x138] sm:$0xff]
      %v265 = vld [vmem:[%s219 + $0x140] sm:$0xff]
      %v266 = vld [vmem:[%s219 + $0x148] sm:$0xff]
      %v267 = vld [vmem:[%s219 + $0x150] sm:$0xff]
      %v268 = vld [vmem:[%s219 + $0x158] sm:$0xff]
      %v269 = vld [vmem:[%s219 + $0x160] sm:$0xff]
      %v270 = vld [vmem:[%s219 + $0x168] sm:$0xff]
      %v271 = vld [vmem:[%s219 + $0x170] sm:$0xff]
      %v272 = vld [vmem:[%s219 + $0x178] sm:$0xff]
      %v273 = vld [vmem:[%s219 + $0x180] sm:$0xff]
      %v274 = vld [vmem:[%s219 + $0x188] sm:$0xff]
      %v275 = vld [vmem:[%s219 + $0x190] sm:$0xff]
      %v276 = vld [vmem:[%s219 + $0x198] sm:$0xff]
      %v277 = vld [vmem:[%s219 + $0x1a0] sm:$0xff]
      %v278 = vld [vmem:[%s219 + $0x1a8] sm:$0xff]
      %v279 = vld [vmem:[%s219 + $0x1b0] sm:$0xff]
      %v280 = vld [vmem:[%s219 + $0x1b8] sm:$0xff]
      %v281 = vld [vmem:[%s219 + $0x1c0] sm:$0xff]
      %v282 = vld [vmem:[%s219 + $0x1c8] sm:$0xff]
      %v283 = vld [vmem:[%s219 + $0x1d0] sm:$0xff]
      %v284 = vld [vmem:[%s219 + $0x1d8] sm:$0xff]
      %v285 = vld [vmem:[%s219 + $0x1e0] sm:$0xff]
      %v286 = vld [vmem:[%s219 + $0x1e8] sm:$0xff]
      %v287 = vld [vmem:[%s219 + $0x1f0] sm:$0xff]
      %v288 = vld [vmem:[%s219 + $0x1f8] sm:$0xff]
      %v289 = vld [vmem:[%s219 + $0x200] sm:$0xff]
      %v290 = vld [vmem:[%s219 + $0x208] sm:$0xff]
      %v291 = vld [vmem:[%s219 + $0x210] sm:$0xff]
      %v292 = vld [vmem:[%s219 + $0x218] sm:$0xff]
      %v293 = vld [vmem:[%s219 + $0x220] sm:$0xff]
      %v294 = vld [vmem:[%s219 + $0x228] sm:$0xff]
      %v295 = vld [vmem:[%s219 + $0x230] sm:$0xff]
      %v296 = vld [vmem:[%s219 + $0x238] sm:$0xff]
      %v297 = vld [vmem:[%s219 + $0x240] sm:$0xff]
      %v298 = vld [vmem:[%s219 + $0x248] sm:$0xff]
      %v299 = vld [vmem:[%s219 + $0x250] sm:$0xff]
      %v300 = vld [vmem:[%s219 + $0x258] sm:$0xff]
      %v301 = vld [vmem:[%s219 + $0x260] sm:$0xff]
      %v302 = vld [vmem:[%s219 + $0x268] sm:$0xff]
      %v303 = vld [vmem:[%s219 + $0x270] sm:$0xff]
      %v304 = vld [vmem:[%s219 + $0x278] sm:$0xff]
      %v305 = vld [vmem:[%s219 + $0x280] sm:$0xff]
      %v306 = vld [vmem:[%s219 + $0x288] sm:$0xff]
      %v307 = vld [vmem:[%s219 + $0x290] sm:$0xff]
      %v308 = vld [vmem:[%s219 + $0x298] sm:$0xff]
      %v309 = vld [vmem:[%s219 + $0x2a0] sm:$0xff]
      %v310 = vld [vmem:[%s219 + $0x2a8] sm:$0xff]
      %v311 = vld [vmem:[%s219 + $0x2b0] sm:$0xff]
      %v312 = vld [vmem:[%s219 + $0x2b8] sm:$0xff]
      %v313 = vld [vmem:[%s219 + $0x2c0] sm:$0xff]
      %v314 = vld [vmem:[%s219 + $0x2c8] sm:$0xff]
      %v315 = vld [vmem:[%s219 + $0x2d0] sm:$0xff]
      %v316 = vld [vmem:[%s219 + $0x2d8] sm:$0xff]
      %v317 = vld [vmem:[%s219 + $0x2e0] sm:$0xff]
      %v318 = vld [vmem:[%s219 + $0x2e8] sm:$0xff]
      %v319 = vld [vmem:[%s219 + $0x2f0] sm:$0xff]
      %v320 = vld [vmem:[%s219 + $0x2f8] sm:$0xff]
      %v321 = vld [vmem:[%s219 + $0x300] sm:$0xff]
      %v322 = vld [vmem:[%s219 + $0x308] sm:$0xff]
      %v323 = vld [vmem:[%s219 + $0x310] sm:$0xff]
      %v324 = vld [vmem:[%s219 + $0x318] sm:$0xff]
      %v325 = vld [vmem:[%s219 + $0x320] sm:$0xff]
      %v326 = vld [vmem:[%s219 + $0x328] sm:$0xff]
      %v327 = vld [vmem:[%s219 + $0x330] sm:$0xff]
      %v328 = vld [vmem:[%s219 + $0x338] sm:$0xff]
      %v329 = vld [vmem:[%s219 + $0x340] sm:$0xff]
      %v330 = vld [vmem:[%s219 + $0x348] sm:$0xff]
      %v331 = vld [vmem:[%s219 + $0x350] sm:$0xff]
      %v332 = vld [vmem:[%s219 + $0x358] sm:$0xff]
      %v333 = vld [vmem:[%s219 + $0x360] sm:$0xff]
      %v334 = vld [vmem:[%s219 + $0x368] sm:$0xff]
      %v335 = vld [vmem:[%s219 + $0x370] sm:$0xff]
      %v336 = vld [vmem:[%s219 + $0x378] sm:$0xff]
      %v337 = vld [vmem:[%s219 + $0x380] sm:$0xff]
      %v338 = vld [vmem:[%s219 + $0x388] sm:$0xff]
      %v339 = vld [vmem:[%s219 + $0x390] sm:$0xff]
      %v340 = vld [vmem:[%s219 + $0x398] sm:$0xff]
      %v341 = vld [vmem:[%s219 + $0x3a0] sm:$0xff]
      %v342 = vld [vmem:[%s219 + $0x3a8] sm:$0xff]
      %v343 = vld [vmem:[%s219 + $0x3b0] sm:$0xff]
      %v344 = vld [vmem:[%s219 + $0x3b8] sm:$0xff]
      %v345 = vld [vmem:[%s219 + $0x3c0] sm:$0xff]
      %v346 = vld [vmem:[%s219 + $0x3c8] sm:$0xff]
      %v347 = vld [vmem:[%s219 + $0x3d0] sm:$0xff]
      %v348 = vld [vmem:[%s219 + $0x3d8] sm:$0xff]
      %v349 = vld [vmem:[%s219 + $0x3e0] sm:$0xff]
      %v350 = vld [vmem:[%s219 + $0x3e8] sm:$0xff]
      %v351 = vld [vmem:[%s219 + $0x3f0] sm:$0xff]
      %v352 = vld [vmem:[%s219 + $0x3f8] sm:$0xff]
      %v353 = vld [vmem:[%s1] sm:$0xff]
      %v354 = vld [vmem:[%s1 + $0x8] sm:$0xff]
      %v355 = vld [vmem:[%s1 + $0x10] sm:$0xff]
      %v356 = vld [vmem:[%s1 + $0x18] sm:$0xff]
      %v357 = vld [vmem:[%s2] sm:$0x1]
      %v359 = vlaneseq
      %v360 = vshrl.u32 %v359, 7
      %v361 = vsub.s32 0, %v360
      %v362 = vrot.slane %v357, %v361
      %vm364 = vcmask 261120
      %v366 = vsel %vm364, %v225, 0
      %v369 = vsel %vm364, %v226, 0
      %v372 = vsel %vm364, %v227, 0
      %v375 = vsel %vm364, %v228, 0
      %v378 = vsel %vm364, %v229, 0
      %v381 = vsel %vm364, %v230, 0
      %v384 = vsel %vm364, %v231, 0
      %v387 = vsel %vm364, %v232, 0
      %v390 = vsel %vm364, %v233, 0
      %v393 = vsel %vm364, %v234, 0
      %v396 = vsel %vm364, %v235, 0
      %v399 = vsel %vm364, %v236, 0
      %v402 = vsel %vm364, %v237, 0
      %v405 = vsel %vm364, %v238, 0
      %v408 = vsel %vm364, %v239, 0
      %v411 = vsel %vm364, %v240, 0
      %v414 = vsel %vm364, %v241, 0
      %v417 = vsel %vm364, %v242, 0
      %v420 = vsel %vm364, %v243, 0
      %v423 = vsel %vm364, %v244, 0
      %v426 = vsel %vm364, %v245, 0
      %v429 = vsel %vm364, %v246, 0
      %v432 = vsel %vm364, %v247, 0
      %v435 = vsel %vm364, %v248, 0
      %v438 = vsel %vm364, %v249, 0
      %v441 = vsel %vm364, %v250, 0
      %v444 = vsel %vm364, %v251, 0
      %v447 = vsel %vm364, %v252, 0
      %v450 = vsel %vm364, %v253, 0
      %v453 = vsel %vm364, %v254, 0
      %v456 = vsel %vm364, %v255, 0
      %v459 = vsel %vm364, %v256, 0
      %v462 = vsel %vm364, %v257, 0
      %v465 = vsel %vm364, %v258, 0
      %v468 = vsel %vm364, %v259, 0
      %v471 = vsel %vm364, %v260, 0
      %v474 = vsel %vm364, %v261, 0
      %v477 = vsel %vm364, %v262, 0
      %v480 = vsel %vm364, %v263, 0
      %v483 = vsel %vm364, %v264, 0
      %v486 = vsel %vm364, %v265, 0
      %v489 = vsel %vm364, %v266, 0
      %v492 = vsel %vm364, %v267, 0
      %v495 = vsel %vm364, %v268, 0
      %v498 = vsel %vm364, %v269, 0
      %v501 = vsel %vm364, %v270, 0
      %v504 = vsel %vm364, %v271, 0
      %v507 = vsel %vm364, %v272, 0
      %v510 = vsel %vm364, %v273, 0
      %v513 = vsel %vm364, %v274, 0
      %v516 = vsel %vm364, %v275, 0
      %v519 = vsel %vm364, %v276, 0
      %v522 = vsel %vm364, %v277, 0
      %v525 = vsel %vm364, %v278, 0
      %v528 = vsel %vm364, %v279, 0
      %v531 = vsel %vm364, %v280, 0
      %v534 = vsel %vm364, %v281, 0
      %v537 = vsel %vm364, %v282, 0
      %v540 = vsel %vm364, %v283, 0
      %v543 = vsel %vm364, %v284, 0
      %v546 = vsel %vm364, %v285, 0
      %v549 = vsel %vm364, %v286, 0
      %v552 = vsel %vm364, %v287, 0
      %v555 = vsel %vm364, %v288, 0
      %v558 = vsel %vm364, %v289, 0
      %v561 = vsel %vm364, %v290, 0
      %v564 = vsel %vm364, %v291, 0
      %v567 = vsel %vm364, %v292, 0
      %v570 = vsel %vm364, %v293, 0
      %v573 = vsel %vm364, %v294, 0
      %v576 = vsel %vm364, %v295, 0
      %v579 = vsel %vm364, %v296, 0
      %v582 = vsel %vm364, %v297, 0
      %v585 = vsel %vm364, %v298, 0
      %v588 = vsel %vm364, %v299, 0
      %v591 = vsel %vm364, %v300, 0
      %v594 = vsel %vm364, %v301, 0
      %v597 = vsel %vm364, %v302, 0
      %v600 = vsel %vm364, %v303, 0
      %v603 = vsel %vm364, %v304, 0
      %v606 = vsel %vm364, %v305, 0
      %v609 = vsel %vm364, %v306, 0
      %v612 = vsel %vm364, %v307, 0
      %v615 = vsel %vm364, %v308, 0
      %v618 = vsel %vm364, %v309, 0
      %v621 = vsel %vm364, %v310, 0
      %v624 = vsel %vm364, %v311, 0
      %v627 = vsel %vm364, %v312, 0
      %v630 = vsel %vm364, %v313, 0
      %v633 = vsel %vm364, %v314, 0
      %v636 = vsel %vm364, %v315, 0
      %v639 = vsel %vm364, %v316, 0
      %v642 = vsel %vm364, %v317, 0
      %v645 = vsel %vm364, %v318, 0
      %v648 = vsel %vm364, %v319, 0
      %v651 = vsel %vm364, %v320, 0
      %v654 = vsel %vm364, %v321, 0
      %v657 = vsel %vm364, %v322, 0
      %v660 = vsel %vm364, %v323, 0
      %v663 = vsel %vm364, %v324, 0
      %v666 = vsel %vm364, %v325, 0
      %v669 = vsel %vm364, %v326, 0
      %v672 = vsel %vm364, %v327, 0
      %v675 = vsel %vm364, %v328, 0
      %v678 = vsel %vm364, %v329, 0
      %v681 = vsel %vm364, %v330, 0
      %v684 = vsel %vm364, %v331, 0
      %v687 = vsel %vm364, %v332, 0
      %v690 = vsel %vm364, %v333, 0
      %v693 = vsel %vm364, %v334, 0
      %v696 = vsel %vm364, %v335, 0
      %v699 = vsel %vm364, %v336, 0
      %v702 = vsel %vm364, %v337, 0
      %v705 = vsel %vm364, %v338, 0
      %v708 = vsel %vm364, %v339, 0
      %v711 = vsel %vm364, %v340, 0
      %v714 = vsel %vm364, %v341, 0
      %v717 = vsel %vm364, %v342, 0
      %v720 = vsel %vm364, %v343, 0
      %v723 = vsel %vm364, %v344, 0
      %v726 = vsel %vm364, %v345, 0
      %v729 = vsel %vm364, %v346, 0
      %v732 = vsel %vm364, %v347, 0
      %v735 = vsel %vm364, %v348, 0
      %v738 = vsel %vm364, %v349, 0
      %v741 = vsel %vm364, %v350, 0
      %v744 = vsel %vm364, %v351, 0
      %v747 = vsel %vm364, %v352, 0
      %749 = vmatprep.subr.mxu0 0.0
      %750 = vmatpush1.msra.mxu0 %v353
      %751 = vmatprep.subr.mxu0 0.0
      %752 = vmatpush1.msra.mxu0 %v354
      %753 = vmatprep.subr.mxu0 0.0
      %754 = vmatpush1.msra.mxu0 %v355
      %755 = vmatprep.subr.mxu0 0.0
      %756 = vmatpush1.msra.mxu0 %v356
      %757 = vmatprep.subr.mxu0 0.0
      %758 = vmatpush1.msra.mxu0 0.0
      %759 = vmatprep.subr.mxu0 0.0
      %760 = vmatpush1.msra.mxu0 0.0
      %761 = vmatprep.subr.mxu0 0.0
      %762 = vmatpush1.msra.mxu0 0.0
      %763 = vmatprep.subr.mxu0 0.0
      %764 = vmatpush1.msra.mxu0 0.0
      %765 = vmatprep.subr.mxu0 0.0
      %766 = vmatpush1.msra.mxu0 0.0
      %767 = vmatprep.subr.mxu0 0.0
      %768 = vmatpush1.msra.mxu0 0.0
      %769 = vmatprep.subr.mxu0 0.0
      %770 = vmatpush1.msra.mxu0 0.0
      %771 = vmatprep.subr.mxu0 0.0
      %772 = vmatpush1.msra.mxu0 0.0
      %773 = vmatprep.subr.mxu0 0.0
      %774 = vmatpush1.msra.mxu0 0.0
      %775 = vmatprep.subr.mxu0 0.0
      %776 = vmatpush1.msra.mxu0 0.0
      %777 = vmatprep.subr.mxu0 0.0
      %778 = vmatpush1.msra.mxu0 0.0
      %779 = vmatprep.subr.mxu0 0.0
      %780 = vmatpush1.msra.mxu0 0.0
      %781 = vmatprep.subr.mxu0 0.0
      %782 = vmatpush1.msra.mxu0 0.0
      %783 = vmatprep.subr.mxu0 0.0
      %784 = vmatpush1.msra.mxu0 0.0
      %785 = vmatprep.subr.mxu0 0.0
      %786 = vmatpush1.msra.mxu0 0.0
      %787 = vmatprep.subr.mxu0 0.0
      %788 = vmatpush1.msra.mxu0 0.0
      %789 = vmatprep.subr.mxu0 0.0
      %790 = vmatpush1.msra.mxu0 0.0
      %791 = vmatprep.subr.mxu0 0.0
      %792 = vmatpush1.msra.mxu0 0.0
      %793 = vmatprep.subr.mxu0 0.0
      %794 = vmatpush1.msra.mxu0 0.0
      %795 = vmatprep.subr.mxu0 0.0
      %796 = vmatpush1.msra.mxu0 0.0
      %797 = vmatprep.subr.mxu0 0.0
      %798 = vmatpush1.msra.mxu0 0.0
      %799 = vmatprep.subr.mxu0 0.0
      %800 = vmatpush1.msra.mxu0 0.0
      %801 = vmatprep.subr.mxu0 0.0
      %802 = vmatpush1.msra.mxu0 0.0
      %803 = vmatprep.subr.mxu0 0.0
      %804 = vmatpush1.msra.mxu0 0.0
      %805 = vmatprep.subr.mxu0 0.0
      %806 = vmatpush1.msra.mxu0 0.0
      %807 = vmatprep.subr.mxu0 0.0
      %808 = vmatpush1.msra.mxu0 0.0
      %809 = vmatprep.subr.mxu0 0.0
      %810 = vmatpush1.msra.mxu0 0.0
      %811 = vmatprep.subr.mxu0 0.0
      %812 = vmatpush1.msra.mxu0 0.0
      %813 = vmatprep.mubr.f32.mxu0 0.0
      %814 = vmatmul.mubr.f32.gmra.mrb[0].mxu0 %v366
      %v815 = vpop.f32.mrb[0].mxu0
      %v816 = vadd.f32 %v362, %v815
      %v817 = vpop.f32.mrb[0].mxu0
      %818 = vmatprep.mubr.f32.mxu0 0.0
      %819 = vmatmul.mubr.f32.gmra.mrb[0].mxu0 %v369
      %v820 = vpop.f32.mrb[0].mxu0
      %v821 = vadd.f32 %v362, %v820
      %v822 = vpop.f32.mrb[0].mxu0
      %823 = vmatprep.mubr.f32.mxu0 0.0
      %824 = vmatmul.mubr.f32.gmra.mrb[0].mxu0 %v372
      %v825 = vpop.f32.mrb[0].mxu0
      %v826 = vadd.f32 %v362, %v825
      %v827 = vpop.f32.mrb[0].mxu0
      %828 = vmatprep.mubr.f32.mxu0 0.0
      %829 = vmatmul.mubr.f32.gmra.mrb[0].mxu0 %v375
      %v830 = vpop.f32.mrb[0].mxu0
      %v831 = vadd.f32 %v362, %v830
      %v832 = vpop.f32.mrb[0].mxu0
      %833 = vmatprep.mubr.f32.mxu0 0.0
      %834 = vmatmul.mubr.f32.gmra.mrb[0].mxu0 %v378
      %v835 = vpop.f32.mrb[0].mxu0
      %v836 = vadd.f32 %v362, %v835
      %v837 = vpop.f32.mrb[0].mxu0
      %838 = vmatprep.mubr.f32.mxu0 0.0
      %839 = vmatmul.mubr.f32.gmra.mrb[0].mxu0 %v381
      %v840 = vpop.f32.mrb[0].mxu0
      %v841 = vadd.f32 %v362, %v840
      %v842 = vpop.f32.mrb[0].mxu0
      %843 = vmatprep.mubr.f32.mxu0 0.0
      %844 = vmatmul.mubr.f32.gmra.mrb[0].mxu0 %v384
      %v845 = vpop.f32.mrb[0].mxu0
      %v846 = vadd.f32 %v362, %v845
      %v847 = vpop.f32.mrb[0].mxu0
      %848 = vmatprep.mubr.f32.mxu0 0.0
      %849 = vmatmul.mubr.f32.gmra.mrb[0].mxu0 %v387
      %v850 = vpop.f32.mrb[0].mxu0
      %v851 = vadd.f32 %v362, %v850
      %v852 = vpop.f32.mrb[0].mxu0
      %853 = vmatprep.mubr.f32.mxu0 0.0
      %854 = vmatmul.mubr.f32.gmra.mrb[0].mxu0 %v390
      %v855 = vpop.f32.mrb[0].mxu0
      %v856 = vadd.f32 %v362, %v855
      %v857 = vpop.f32.mrb[0].mxu0
      %858 = vmatprep.mubr.f32.mxu0 0.0
      %859 = vmatmul.mubr.f32.gmra.mrb[0].mxu0 %v393
      %v860 = vpop.f32.mrb[0].mxu0
      %v861 = vadd.f32 %v362, %v860
      %v862 = vpop.f32.mrb[0].mxu0
      %863 = vmatprep.mubr.f32.mxu0 0.0
      %864 = vmatmul.mubr.f32.gmra.mrb[0].mxu0 %v396
      %v865 = vpop.f32.mrb[0].mxu0
      %v866 = vadd.f32 %v362, %v865
      %v867 = vpop.f32.mrb[0].mxu0
      %868 = vmatprep.mubr.f32.mxu0 0.0
      %869 = vmatmul.mubr.f32.gmra.mrb[0].mxu0 %v399
      %v870 = vpop.f32.mrb[0].mxu0
      %v871 = vadd.f32 %v362, %v870
      %v872 = vpop.f32.mrb[0].mxu0
      %873 = vmatprep.mubr.f32.mxu0 0.0
      %874 = vmatmul.mubr.f32.gmra.mrb[0].mxu0 %v402
      %v875 = vpop.f32.mrb[0].mxu0
      %v876 = vadd.f32 %v362, %v875
      %v877 = vpop.f32.mrb[0].mxu0
      %878 = vmatprep.mubr.f32.mxu0 0.0
      %879 = vmatmul.mubr.f32.gmra.mrb[0].mxu0 %v405
      %v880 = vpop.f32.mrb[0].mxu0
      %v881 = vadd.f32 %v362, %v880
      %v882 = vpop.f32.mrb[0].mxu0
      %883 = vmatprep.mubr.f32.mxu0 0.0
      %884 = vmatmul.mubr.f32.gmra.mrb[0].mxu0 %v408
      %v885 = vpop.f32.mrb[0].mxu0
      %v886 = vadd.f32 %v362, %v885
      %v887 = vpop.f32.mrb[0].mxu0
      %888 = vmatprep.mubr.f32.mxu0 0.0
      %889 = vmatmul.mubr.f32.gmra.mrb[0].mxu0 %v411
      %v890 = vpop.f32.mrb[0].mxu0
      %v891 = vadd.f32 %v362, %v890
      %v892 = vpop.f32.mrb[0].mxu0
      %893 = vmatprep.mubr.f32.mxu0 0.0
      %894 = vmatmul.mubr.f32.gmra.mrb[0].mxu0 %v414
      %v895 = vpop.f32.mrb[0].mxu0
      %v896 = vadd.f32 %v362, %v895
      %v897 = vpop.f32.mrb[0].mxu0
      %898 = vmatprep.mubr.f32.mxu0 0.0
      %899 = vmatmul.mubr.f32.gmra.mrb[0].mxu0 %v417
      %v900 = vpop.f32.mrb[0].mxu0
      %v901 = vadd.f32 %v362, %v900
      %v902 = vpop.f32.mrb[0].mxu0
      %903 = vmatprep.mubr.f32.mxu0 0.0
      %904 = vmatmul.mubr.f32.gmra.mrb[0].mxu0 %v420
      %v905 = vpop.f32.mrb[0].mxu0
      %v906 = vadd.f32 %v362, %v905
      %v907 = vpop.f32.mrb[0].mxu0
      %908 = vmatprep.mubr.f32.mxu0 0.0
      %909 = vmatmul.mubr.f32.gmra.mrb[0].mxu0 %v423
      %v910 = vpop.f32.mrb[0].mxu0
      %v911 = vadd.f32 %v362, %v910
      %v912 = vpop.f32.mrb[0].mxu0
      %913 = vmatprep.mubr.f32.mxu0 0.0
      %914 = vmatmul.mubr.f32.gmra.mrb[0].mxu0 %v426
      %v915 = vpop.f32.mrb[0].mxu0
      %v916 = vadd.f32 %v362, %v915
      %v917 = vpop.f32.mrb[0].mxu0
      %918 = vmatprep.mubr.f32.mxu0 0.0
      %919 = vmatmul.mubr.f32.gmra.mrb[0].mxu0 %v429
      %v920 = vpop.f32.mrb[0].mxu0
      %v921 = vadd.f32 %v362, %v920
      %v922 = vpop.f32.mrb[0].mxu0
      %923 = vmatprep.mubr.f32.mxu0 0.0
      %924 = vmatmul.mubr.f32.gmra.mrb[0].mxu0 %v432
      %v925 = vpop.f32.mrb[0].mxu0
      %v926 = vadd.f32 %v362, %v925
      %v927 = vpop.f32.mrb[0].mxu0
      %928 = vmatprep.mubr.f32.mxu0 0.0
      %929 = vmatmul.mubr.f32.gmra.mrb[0].mxu0 %v435
      %v930 = vpop.f32.mrb[0].mxu0
      %v931 = vadd.f32 %v362, %v930
      %v932 = vpop.f32.mrb[0].mxu0
      %933 = vmatprep.mubr.f32.mxu0 0.0
      %934 = vmatmul.mubr.f32.gmra.mrb[0].mxu0 %v438
      %v935 = vpop.f32.mrb[0].mxu0
      %v936 = vadd.f32 %v362, %v935
      %v937 = vpop.f32.mrb[0].mxu0
      %938 = vmatprep.mubr.f32.mxu0 0.0
      %939 = vmatmul.mubr.f32.gmra.mrb[0].mxu0 %v441
      %v940 = vpop.f32.mrb[0].mxu0
      %v941 = vadd.f32 %v362, %v940
      %v942 = vpop.f32.mrb[0].mxu0
      %943 = vmatprep.mubr.f32.mxu0 0.0
      %944 = vmatmul.mubr.f32.gmra.mrb[0].mxu0 %v444
      %v945 = vpop.f32.mrb[0].mxu0
      %v946 = vadd.f32 %v362, %v945
      %v947 = vpop.f32.mrb[0].mxu0
      %948 = vmatprep.mubr.f32.mxu0 0.0
      %949 = vmatmul.mubr.f32.gmra.mrb[0].mxu0 %v447
      %v950 = vpop.f32.mrb[0].mxu0
      %v951 = vadd.f32 %v362, %v950
      %v952 = vpop.f32.mrb[0].mxu0
      %953 = vmatprep.mubr.f32.mxu0 0.0
      %954 = vmatmul.mubr.f32.gmra.mrb[0].mxu0 %v450
      %v955 = vpop.f32.mrb[0].mxu0
      %v956 = vadd.f32 %v362, %v955
      %v957 = vpop.f32.mrb[0].mxu0
      %958 = vmatprep.mubr.f32.mxu0 0.0
      %959 = vmatmul.mubr.f32.gmra.mrb[0].mxu0 %v453
      %v960 = vpop.f32.mrb[0].mxu0
      %v961 = vadd.f32 %v362, %v960
      %v962 = vpop.f32.mrb[0].mxu0
      %963 = vmatprep.mubr.f32.mxu0 0.0
      %964 = vmatmul.mubr.f32.gmra.mrb[0].mxu0 %v456
      %v965 = vpop.f32.mrb[0].mxu0
      %v966 = vadd.f32 %v362, %v965
      %v967 = vpop.f32.mrb[0].mxu0
      %968 = vmatprep.mubr.f32.mxu0 0.0
      %969 = vmatmul.mubr.f32.gmra.mrb[0].mxu0 %v459
      %v970 = vpop.f32.mrb[0].mxu0
      %v971 = vadd.f32 %v362, %v970
      %v972 = vpop.f32.mrb[0].mxu0
      %973 = vmatprep.mubr.f32.mxu0 0.0
      %974 = vmatmul.mubr.f32.gmra.mrb[0].mxu0 %v462
      %v975 = vpop.f32.mrb[0].mxu0
      %v976 = vadd.f32 %v362, %v975
      %v977 = vpop.f32.mrb[0].mxu0
      %978 = vmatprep.mubr.f32.mxu0 0.0
      %979 = vmatmul.mubr.f32.gmra.mrb[0].mxu0 %v465
      %v980 = vpop.f32.mrb[0].mxu0
      %v981 = vadd.f32 %v362, %v980
      %v982 = vpop.f32.mrb[0].mxu0
      %983 = vmatprep.mubr.f32.mxu0 0.0
      %984 = vmatmul.mubr.f32.gmra.mrb[0].mxu0 %v468
      %v985 = vpop.f32.mrb[0].mxu0
      %v986 = vadd.f32 %v362, %v985
      %v987 = vpop.f32.mrb[0].mxu0
      %988 = vmatprep.mubr.f32.mxu0 0.0
      %989 = vmatmul.mubr.f32.gmra.mrb[0].mxu0 %v471
      %v990 = vpop.f32.mrb[0].mxu0
      %v991 = vadd.f32 %v362, %v990
      %v992 = vpop.f32.mrb[0].mxu0
      %993 = vmatprep.mubr.f32.mxu0 0.0
      %994 = vmatmul.mubr.f32.gmra.mrb[0].mxu0 %v474
      %v995 = vpop.f32.mrb[0].mxu0
      %v996 = vadd.f32 %v362, %v995
      %v997 = vpop.f32.mrb[0].mxu0
      %998 = vmatprep.mubr.f32.mxu0 0.0
      %999 = vmatmul.mubr.f32.gmra.mrb[0].mxu0 %v477
      %v1000 = vpop.f32.mrb[0].mxu0
      %v1001 = vadd.f32 %v362, %v1000
      %v1002 = vpop.f32.mrb[0].mxu0
      %1003 = vmatprep.mubr.f32.mxu0 0.0
      %1004 = vmatmul.mubr.f32.gmra.mrb[0].mxu0 %v480
      %v1005 = vpop.f32.mrb[0].mxu0
      %v1006 = vadd.f32 %v362, %v1005
      %v1007 = vpop.f32.mrb[0].mxu0
      %1008 = vmatprep.mubr.f32.mxu0 0.0
      %1009 = vmatmul.mubr.f32.gmra.mrb[0].mxu0 %v483
      %v1010 = vpop.f32.mrb[0].mxu0
      %v1011 = vadd.f32 %v362, %v1010
      %v1012 = vpop.f32.mrb[0].mxu0
      %1013 = vmatprep.mubr.f32.mxu0 0.0
      %1014 = vmatmul.mubr.f32.gmra.mrb[0].mxu0 %v486
      %v1015 = vpop.f32.mrb[0].mxu0
      %v1016 = vadd.f32 %v362, %v1015
      %v1017 = vpop.f32.mrb[0].mxu0
      %1018 = vmatprep.mubr.f32.mxu0 0.0
      %1019 = vmatmul.mubr.f32.gmra.mrb[0].mxu0 %v489
      %v1020 = vpop.f32.mrb[0].mxu0
      %v1021 = vadd.f32 %v362, %v1020
      %v1022 = vpop.f32.mrb[0].mxu0
      %1023 = vmatprep.mubr.f32.mxu0 0.0
      %1024 = vmatmul.mubr.f32.gmra.mrb[0].mxu0 %v492
      %v1025 = vpop.f32.mrb[0].mxu0
      %v1026 = vadd.f32 %v362, %v1025
      %v1027 = vpop.f32.mrb[0].mxu0
      %1028 = vmatprep.mubr.f32.mxu0 0.0
      %1029 = vmatmul.mubr.f32.gmra.mrb[0].mxu0 %v495
      %v1030 = vpop.f32.mrb[0].mxu0
      %v1031 = vadd.f32 %v362, %v1030
      %v1032 = vpop.f32.mrb[0].mxu0
      %1033 = vmatprep.mubr.f32.mxu0 0.0
      %1034 = vmatmul.mubr.f32.gmra.mrb[0].mxu0 %v498
      %v1035 = vpop.f32.mrb[0].mxu0
      %v1036 = vadd.f32 %v362, %v1035
      %v1037 = vpop.f32.mrb[0].mxu0
      %1038 = vmatprep.mubr.f32.mxu0 0.0
      %1039 = vmatmul.mubr.f32.gmra.mrb[0].mxu0 %v501
      %v1040 = vpop.f32.mrb[0].mxu0
      %v1041 = vadd.f32 %v362, %v1040
      %v1042 = vpop.f32.mrb[0].mxu0
      %1043 = vmatprep.mubr.f32.mxu0 0.0
      %1044 = vmatmul.mubr.f32.gmra.mrb[0].mxu0 %v504
      %v1045 = vpop.f32.mrb[0].mxu0
      %v1046 = vadd.f32 %v362, %v1045
      %v1047 = vpop.f32.mrb[0].mxu0
      %1048 = vmatprep.mubr.f32.mxu0 0.0
      %1049 = vmatmul.mubr.f32.gmra.mrb[0].mxu0 %v507
      %v1050 = vpop.f32.mrb[0].mxu0
      %v1051 = vadd.f32 %v362, %v1050
      %v1052 = vpop.f32.mrb[0].mxu0
      %1053 = vmatprep.mubr.f32.mxu0 0.0
      %1054 = vmatmul.mubr.f32.gmra.mrb[0].mxu0 %v510
      %v1055 = vpop.f32.mrb[0].mxu0
      %v1056 = vadd.f32 %v362, %v1055
      %v1057 = vpop.f32.mrb[0].mxu0
      %1058 = vmatprep.mubr.f32.mxu0 0.0
      %1059 = vmatmul.mubr.f32.gmra.mrb[0].mxu0 %v513
      %v1060 = vpop.f32.mrb[0].mxu0
      %v1061 = vadd.f32 %v362, %v1060
      %v1062 = vpop.f32.mrb[0].mxu0
      %1063 = vmatprep.mubr.f32.mxu0 0.0
      %1064 = vmatmul.mubr.f32.gmra.mrb[0].mxu0 %v516
      %v1065 = vpop.f32.mrb[0].mxu0
      %v1066 = vadd.f32 %v362, %v1065
      %v1067 = vpop.f32.mrb[0].mxu0
      %1068 = vmatprep.mubr.f32.mxu0 0.0
      %1069 = vmatmul.mubr.f32.gmra.mrb[0].mxu0 %v519
      %v1070 = vpop.f32.mrb[0].mxu0
      %v1071 = vadd.f32 %v362, %v1070
      %v1072 = vpop.f32.mrb[0].mxu0
      %1073 = vmatprep.mubr.f32.mxu0 0.0
      %1074 = vmatmul.mubr.f32.gmra.mrb[0].mxu0 %v522
      %v1075 = vpop.f32.mrb[0].mxu0
      %v1076 = vadd.f32 %v362, %v1075
      %v1077 = vpop.f32.mrb[0].mxu0
      %1078 = vmatprep.mubr.f32.mxu0 0.0
      %1079 = vmatmul.mubr.f32.gmra.mrb[0].mxu0 %v525
      %v1080 = vpop.f32.mrb[0].mxu0
      %v1081 = vadd.f32 %v362, %v1080
      %v1082 = vpop.f32.mrb[0].mxu0
      %1083 = vmatprep.mubr.f32.mxu0 0.0
      %1084 = vmatmul.mubr.f32.gmra.mrb[0].mxu0 %v528
      %v1085 = vpop.f32.mrb[0].mxu0
      %v1086 = vadd.f32 %v362, %v1085
      %v1087 = vpop.f32.mrb[0].mxu0
      %1088 = vmatprep.mubr.f32.mxu0 0.0
      %1089 = vmatmul.mubr.f32.gmra.mrb[0].mxu0 %v531
      %v1090 = vpop.f32.mrb[0].mxu0
      %v1091 = vadd.f32 %v362, %v1090
      %v1092 = vpop.f32.mrb[0].mxu0
      %1093 = vmatprep.mubr.f32.mxu0 0.0
      %1094 = vmatmul.mubr.f32.gmra.mrb[0].mxu0 %v534
      %v1095 = vpop.f32.mrb[0].mxu0
      %v1096 = vadd.f32 %v362, %v1095
      %v1097 = vpop.f32.mrb[0].mxu0
      %1098 = vmatprep.mubr.f32.mxu0 0.0
      %1099 = vmatmul.mubr.f32.gmra.mrb[0].mxu0 %v537
      %v1100 = vpop.f32.mrb[0].mxu0
      %v1101 = vadd.f32 %v362, %v1100
      %v1102 = vpop.f32.mrb[0].mxu0
      %1103 = vmatprep.mubr.f32.mxu0 0.0
      %1104 = vmatmul.mubr.f32.gmra.mrb[0].mxu0 %v540
      %v1105 = vpop.f32.mrb[0].mxu0
      %v1106 = vadd.f32 %v362, %v1105
      %v1107 = vpop.f32.mrb[0].mxu0
      %1108 = vmatprep.mubr.f32.mxu0 0.0
      %1109 = vmatmul.mubr.f32.gmra.mrb[0].mxu0 %v543
      %v1110 = vpop.f32.mrb[0].mxu0
      %v1111 = vadd.f32 %v362, %v1110
      %v1112 = vpop.f32.mrb[0].mxu0
      %1113 = vmatprep.mubr.f32.mxu0 0.0
      %1114 = vmatmul.mubr.f32.gmra.mrb[0].mxu0 %v546
      %v1115 = vpop.f32.mrb[0].mxu0
      %v1116 = vadd.f32 %v362, %v1115
      %v1117 = vpop.f32.mrb[0].mxu0
      %1118 = vmatprep.mubr.f32.mxu0 0.0
      %1119 = vmatmul.mubr.f32.gmra.mrb[0].mxu0 %v549
      %v1120 = vpop.f32.mrb[0].mxu0
      %v1121 = vadd.f32 %v362, %v1120
      %v1122 = vpop.f32.mrb[0].mxu0
      %1123 = vmatprep.mubr.f32.mxu0 0.0
      %1124 = vmatmul.mubr.f32.gmra.mrb[0].mxu0 %v552
      %v1125 = vpop.f32.mrb[0].mxu0
      %v1126 = vadd.f32 %v362, %v1125
      %v1127 = vpop.f32.mrb[0].mxu0
      %1128 = vmatprep.mubr.f32.mxu0 0.0
      %1129 = vmatmul.mubr.f32.gmra.mrb[0].mxu0 %v555
      %v1130 = vpop.f32.mrb[0].mxu0
      %v1131 = vadd.f32 %v362, %v1130
      %v1132 = vpop.f32.mrb[0].mxu0
      %1133 = vmatprep.mubr.f32.mxu0 0.0
      %1134 = vmatmul.mubr.f32.gmra.mrb[0].mxu0 %v558
      %v1135 = vpop.f32.mrb[0].mxu0
      %v1136 = vadd.f32 %v362, %v1135
      %v1137 = vpop.f32.mrb[0].mxu0
      %1138 = vmatprep.mubr.f32.mxu0 0.0
      %1139 = vmatmul.mubr.f32.gmra.mrb[0].mxu0 %v561
      %v1140 = vpop.f32.mrb[0].mxu0
      %v1141 = vadd.f32 %v362, %v1140
      %v1142 = vpop.f32.mrb[0].mxu0
      %1143 = vmatprep.mubr.f32.mxu0 0.0
      %1144 = vmatmul.mubr.f32.gmra.mrb[0].mxu0 %v564
      %v1145 = vpop.f32.mrb[0].mxu0
      %v1146 = vadd.f32 %v362, %v1145
      %v1147 = vpop.f32.mrb[0].mxu0
      %1148 = vmatprep.mubr.f32.mxu0 0.0
      %1149 = vmatmul.mubr.f32.gmra.mrb[0].mxu0 %v567
      %v1150 = vpop.f32.mrb[0].mxu0
      %v1151 = vadd.f32 %v362, %v1150
      %v1152 = vpop.f32.mrb[0].mxu0
      %1153 = vmatprep.mubr.f32.mxu0 0.0
      %1154 = vmatmul.mubr.f32.gmra.mrb[0].mxu0 %v570
      %v1155 = vpop.f32.mrb[0].mxu0
      %v1156 = vadd.f32 %v362, %v1155
      %v1157 = vpop.f32.mrb[0].mxu0
      %1158 = vmatprep.mubr.f32.mxu0 0.0
      %1159 = vmatmul.mubr.f32.gmra.mrb[0].mxu0 %v573
      %v1160 = vpop.f32.mrb[0].mxu0
      %v1161 = vadd.f32 %v362, %v1160
      %v1162 = vpop.f32.mrb[0].mxu0
      %1163 = vmatprep.mubr.f32.mxu0 0.0
      %1164 = vmatmul.mubr.f32.gmra.mrb[0].mxu0 %v576
      %v1165 = vpop.f32.mrb[0].mxu0
      %v1166 = vadd.f32 %v362, %v1165
      %v1167 = vpop.f32.mrb[0].mxu0
      %1168 = vmatprep.mubr.f32.mxu0 0.0
      %1169 = vmatmul.mubr.f32.gmra.mrb[0].mxu0 %v579
      %v1170 = vpop.f32.mrb[0].mxu0
      %v1171 = vadd.f32 %v362, %v1170
      %v1172 = vpop.f32.mrb[0].mxu0
      %1173 = vmatprep.mubr.f32.mxu0 0.0
      %1174 = vmatmul.mubr.f32.gmra.mrb[0].mxu0 %v582
      %v1175 = vpop.f32.mrb[0].mxu0
      %v1176 = vadd.f32 %v362, %v1175
      %v1177 = vpop.f32.mrb[0].mxu0
      %1178 = vmatprep.mubr.f32.mxu0 0.0
      %1179 = vmatmul.mubr.f32.gmra.mrb[0].mxu0 %v585
      %v1180 = vpop.f32.mrb[0].mxu0
      %v1181 = vadd.f32 %v362, %v1180
      %v1182 = vpop.f32.mrb[0].mxu0
      %1183 = vmatprep.mubr.f32.mxu0 0.0
      %1184 = vmatmul.mubr.f32.gmra.mrb[0].mxu0 %v588
      %v1185 = vpop.f32.mrb[0].mxu0
      %v1186 = vadd.f32 %v362, %v1185
      %v1187 = vpop.f32.mrb[0].mxu0
      %1188 = vmatprep.mubr.f32.mxu0 0.0
      %1189 = vmatmul.mubr.f32.gmra.mrb[0].mxu0 %v591
      %v1190 = vpop.f32.mrb[0].mxu0
      %v1191 = vadd.f32 %v362, %v1190
      %v1192 = vpop.f32.mrb[0].mxu0
      %1193 = vmatprep.mubr.f32.mxu0 0.0
      %1194 = vmatmul.mubr.f32.gmra.mrb[0].mxu0 %v594
      %v1195 = vpop.f32.mrb[0].mxu0
      %v1196 = vadd.f32 %v362, %v1195
      %v1197 = vpop.f32.mrb[0].mxu0
      %1198 = vmatprep.mubr.f32.mxu0 0.0
      %1199 = vmatmul.mubr.f32.gmra.mrb[0].mxu0 %v597
      %v1200 = vpop.f32.mrb[0].mxu0
      %v1201 = vadd.f32 %v362, %v1200
      %v1202 = vpop.f32.mrb[0].mxu0
      %1203 = vmatprep.mubr.f32.mxu0 0.0
      %1204 = vmatmul.mubr.f32.gmra.mrb[0].mxu0 %v600
      %v1205 = vpop.f32.mrb[0].mxu0
      %v1206 = vadd.f32 %v362, %v1205
      %v1207 = vpop.f32.mrb[0].mxu0
      %1208 = vmatprep.mubr.f32.mxu0 0.0
      %1209 = vmatmul.mubr.f32.gmra.mrb[0].mxu0 %v603
      %v1210 = vpop.f32.mrb[0].mxu0
      %v1211 = vadd.f32 %v362, %v1210
      %v1212 = vpop.f32.mrb[0].mxu0
      %1213 = vmatprep.mubr.f32.mxu0 0.0
      %1214 = vmatmul.mubr.f32.gmra.mrb[0].mxu0 %v606
      %v1215 = vpop.f32.mrb[0].mxu0
      %v1216 = vadd.f32 %v362, %v1215
      %v1217 = vpop.f32.mrb[0].mxu0
      %1218 = vmatprep.mubr.f32.mxu0 0.0
      %1219 = vmatmul.mubr.f32.gmra.mrb[0].mxu0 %v609
      %v1220 = vpop.f32.mrb[0].mxu0
      %v1221 = vadd.f32 %v362, %v1220
      %v1222 = vpop.f32.mrb[0].mxu0
      %1223 = vmatprep.mubr.f32.mxu0 0.0
      %1224 = vmatmul.mubr.f32.gmra.mrb[0].mxu0 %v612
      %v1225 = vpop.f32.mrb[0].mxu0
      %v1226 = vadd.f32 %v362, %v1225
      %v1227 = vpop.f32.mrb[0].mxu0
      %1228 = vmatprep.mubr.f32.mxu0 0.0
      %1229 = vmatmul.mubr.f32.gmra.mrb[0].mxu0 %v615
      %v1230 = vpop.f32.mrb[0].mxu0
      %v1231 = vadd.f32 %v362, %v1230
      %v1232 = vpop.f32.mrb[0].mxu0
      %1233 = vmatprep.mubr.f32.mxu0 0.0
      %1234 = vmatmul.mubr.f32.gmra.mrb[0].mxu0 %v618
      %v1235 = vpop.f32.mrb[0].mxu0
      %v1236 = vadd.f32 %v362, %v1235
      %v1237 = vpop.f32.mrb[0].mxu0
      %1238 = vmatprep.mubr.f32.mxu0 0.0
      %1239 = vmatmul.mubr.f32.gmra.mrb[0].mxu0 %v621
      %v1240 = vpop.f32.mrb[0].mxu0
      %v1241 = vadd.f32 %v362, %v1240
      %v1242 = vpop.f32.mrb[0].mxu0
      %1243 = vmatprep.mubr.f32.mxu0 0.0
      %1244 = vmatmul.mubr.f32.gmra.mrb[0].mxu0 %v624
      %v1245 = vpop.f32.mrb[0].mxu0
      %v1246 = vadd.f32 %v362, %v1245
      %v1247 = vpop.f32.mrb[0].mxu0
      %1248 = vmatprep.mubr.f32.mxu0 0.0
      %1249 = vmatmul.mubr.f32.gmra.mrb[0].mxu0 %v627
      %v1250 = vpop.f32.mrb[0].mxu0
      %v1251 = vadd.f32 %v362, %v1250
      %v1252 = vpop.f32.mrb[0].mxu0
      %1253 = vmatprep.mubr.f32.mxu0 0.0
      %1254 = vmatmul.mubr.f32.gmra.mrb[0].mxu0 %v630
      %v1255 = vpop.f32.mrb[0].mxu0
      %v1256 = vadd.f32 %v362, %v1255
      %v1257 = vpop.f32.mrb[0].mxu0
      %1258 = vmatprep.mubr.f32.mxu0 0.0
      %1259 = vmatmul.mubr.f32.gmra.mrb[0].mxu0 %v633
      %v1260 = vpop.f32.mrb[0].mxu0
      %v1261 = vadd.f32 %v362, %v1260
      %v1262 = vpop.f32.mrb[0].mxu0
      %1263 = vmatprep.mubr.f32.mxu0 0.0
      %1264 = vmatmul.mubr.f32.gmra.mrb[0].mxu0 %v636
      %v1265 = vpop.f32.mrb[0].mxu0
      %v1266 = vadd.f32 %v362, %v1265
      %v1267 = vpop.f32.mrb[0].mxu0
      %1268 = vmatprep.mubr.f32.mxu0 0.0
      %1269 = vmatmul.mubr.f32.gmra.mrb[0].mxu0 %v639
      %v1270 = vpop.f32.mrb[0].mxu0
      %v1271 = vadd.f32 %v362, %v1270
      %v1272 = vpop.f32.mrb[0].mxu0
      %1273 = vmatprep.mubr.f32.mxu0 0.0
      %1274 = vmatmul.mubr.f32.gmra.mrb[0].mxu0 %v642
      %v1275 = vpop.f32.mrb[0].mxu0
      %v1276 = vadd.f32 %v362, %v1275
      %v1277 = vpop.f32.mrb[0].mxu0
      %1278 = vmatprep.mubr.f32.mxu0 0.0
      %1279 = vmatmul.mubr.f32.gmra.mrb[0].mxu0 %v645
      %v1280 = vpop.f32.mrb[0].mxu0
      %v1281 = vadd.f32 %v362, %v1280
      %v1282 = vpop.f32.mrb[0].mxu0
      %1283 = vmatprep.mubr.f32.mxu0 0.0
      %1284 = vmatmul.mubr.f32.gmra.mrb[0].mxu0 %v648
      %v1285 = vpop.f32.mrb[0].mxu0
      %v1286 = vadd.f32 %v362, %v1285
      %v1287 = vpop.f32.mrb[0].mxu0
      %1288 = vmatprep.mubr.f32.mxu0 0.0
      %1289 = vmatmul.mubr.f32.gmra.mrb[0].mxu0 %v651
      %v1290 = vpop.f32.mrb[0].mxu0
      %v1291 = vadd.f32 %v362, %v1290
      %v1292 = vpop.f32.mrb[0].mxu0
      %1293 = vmatprep.mubr.f32.mxu0 0.0
      %1294 = vmatmul.mubr.f32.gmra.mrb[0].mxu0 %v654
      %v1295 = vpop.f32.mrb[0].mxu0
      %v1296 = vadd.f32 %v362, %v1295
      %v1297 = vpop.f32.mrb[0].mxu0
      %1298 = vmatprep.mubr.f32.mxu0 0.0
      %1299 = vmatmul.mubr.f32.gmra.mrb[0].mxu0 %v657
      %v1300 = vpop.f32.mrb[0].mxu0
      %v1301 = vadd.f32 %v362, %v1300
      %v1302 = vpop.f32.mrb[0].mxu0
      %1303 = vmatprep.mubr.f32.mxu0 0.0
      %1304 = vmatmul.mubr.f32.gmra.mrb[0].mxu0 %v660
      %v1305 = vpop.f32.mrb[0].mxu0
      %v1306 = vadd.f32 %v362, %v1305
      %v1307 = vpop.f32.mrb[0].mxu0
      %1308 = vmatprep.mubr.f32.mxu0 0.0
      %1309 = vmatmul.mubr.f32.gmra.mrb[0].mxu0 %v663
      %v1310 = vpop.f32.mrb[0].mxu0
      %v1311 = vadd.f32 %v362, %v1310
      %v1312 = vpop.f32.mrb[0].mxu0
      %1313 = vmatprep.mubr.f32.mxu0 0.0
      %1314 = vmatmul.mubr.f32.gmra.mrb[0].mxu0 %v666
      %v1315 = vpop.f32.mrb[0].mxu0
      %v1316 = vadd.f32 %v362, %v1315
      %v1317 = vpop.f32.mrb[0].mxu0
      %1318 = vmatprep.mubr.f32.mxu0 0.0
      %1319 = vmatmul.mubr.f32.gmra.mrb[0].mxu0 %v669
      %v1320 = vpop.f32.mrb[0].mxu0
      %v1321 = vadd.f32 %v362, %v1320
      %v1322 = vpop.f32.mrb[0].mxu0
      %1323 = vmatprep.mubr.f32.mxu0 0.0
      %1324 = vmatmul.mubr.f32.gmra.mrb[0].mxu0 %v672
      %v1325 = vpop.f32.mrb[0].mxu0
      %v1326 = vadd.f32 %v362, %v1325
      %v1327 = vpop.f32.mrb[0].mxu0
      %1328 = vmatprep.mubr.f32.mxu0 0.0
      %1329 = vmatmul.mubr.f32.gmra.mrb[0].mxu0 %v675
      %v1330 = vpop.f32.mrb[0].mxu0
      %v1331 = vadd.f32 %v362, %v1330
      %v1332 = vpop.f32.mrb[0].mxu0
      %1333 = vmatprep.mubr.f32.mxu0 0.0
      %1334 = vmatmul.mubr.f32.gmra.mrb[0].mxu0 %v678
      %v1335 = vpop.f32.mrb[0].mxu0
      %v1336 = vadd.f32 %v362, %v1335
      %v1337 = vpop.f32.mrb[0].mxu0
      %1338 = vmatprep.mubr.f32.mxu0 0.0
      %1339 = vmatmul.mubr.f32.gmra.mrb[0].mxu0 %v681
      %v1340 = vpop.f32.mrb[0].mxu0
      %v1341 = vadd.f32 %v362, %v1340
      %v1342 = vpop.f32.mrb[0].mxu0
      %1343 = vmatprep.mubr.f32.mxu0 0.0
      %1344 = vmatmul.mubr.f32.gmra.mrb[0].mxu0 %v684
      %v1345 = vpop.f32.mrb[0].mxu0
      %v1346 = vadd.f32 %v362, %v1345
      %v1347 = vpop.f32.mrb[0].mxu0
      %1348 = vmatprep.mubr.f32.mxu0 0.0
      %1349 = vmatmul.mubr.f32.gmra.mrb[0].mxu0 %v687
      %v1350 = vpop.f32.mrb[0].mxu0
      %v1351 = vadd.f32 %v362, %v1350
      %v1352 = vpop.f32.mrb[0].mxu0
      %1353 = vmatprep.mubr.f32.mxu0 0.0
      %1354 = vmatmul.mubr.f32.gmra.mrb[0].mxu0 %v690
      %v1355 = vpop.f32.mrb[0].mxu0
      %v1356 = vadd.f32 %v362, %v1355
      %v1357 = vpop.f32.mrb[0].mxu0
      %1358 = vmatprep.mubr.f32.mxu0 0.0
      %1359 = vmatmul.mubr.f32.gmra.mrb[0].mxu0 %v693
      %v1360 = vpop.f32.mrb[0].mxu0
      %v1361 = vadd.f32 %v362, %v1360
      %v1362 = vpop.f32.mrb[0].mxu0
      %1363 = vmatprep.mubr.f32.mxu0 0.0
      %1364 = vmatmul.mubr.f32.gmra.mrb[0].mxu0 %v696
      %v1365 = vpop.f32.mrb[0].mxu0
      %v1366 = vadd.f32 %v362, %v1365
      %v1367 = vpop.f32.mrb[0].mxu0
      %1368 = vmatprep.mubr.f32.mxu0 0.0
      %1369 = vmatmul.mubr.f32.gmra.mrb[0].mxu0 %v699
      %v1370 = vpop.f32.mrb[0].mxu0
      %v1371 = vadd.f32 %v362, %v1370
      %v1372 = vpop.f32.mrb[0].mxu0
      %1373 = vmatprep.mubr.f32.mxu0 0.0
      %1374 = vmatmul.mubr.f32.gmra.mrb[0].mxu0 %v702
      %v1375 = vpop.f32.mrb[0].mxu0
      %v1376 = vadd.f32 %v362, %v1375
      %v1377 = vpop.f32.mrb[0].mxu0
      %1378 = vmatprep.mubr.f32.mxu0 0.0
      %1379 = vmatmul.mubr.f32.gmra.mrb[0].mxu0 %v705
      %v1380 = vpop.f32.mrb[0].mxu0
      %v1381 = vadd.f32 %v362, %v1380
      %v1382 = vpop.f32.mrb[0].mxu0
      %1383 = vmatprep.mubr.f32.mxu0 0.0
      %1384 = vmatmul.mubr.f32.gmra.mrb[0].mxu0 %v708
      %v1385 = vpop.f32.mrb[0].mxu0
      %v1386 = vadd.f32 %v362, %v1385
      %v1387 = vpop.f32.mrb[0].mxu0
      %1388 = vmatprep.mubr.f32.mxu0 0.0
      %1389 = vmatmul.mubr.f32.gmra.mrb[0].mxu0 %v711
      %v1390 = vpop.f32.mrb[0].mxu0
      %v1391 = vadd.f32 %v362, %v1390
      %v1392 = vpop.f32.mrb[0].mxu0
      %1393 = vmatprep.mubr.f32.mxu0 0.0
      %1394 = vmatmul.mubr.f32.gmra.mrb[0].mxu0 %v714
      %v1395 = vpop.f32.mrb[0].mxu0
      %v1396 = vadd.f32 %v362, %v1395
      %v1397 = vpop.f32.mrb[0].mxu0
      %1398 = vmatprep.mubr.f32.mxu0 0.0
      %1399 = vmatmul.mubr.f32.gmra.mrb[0].mxu0 %v717
      %v1400 = vpop.f32.mrb[0].mxu0
      %v1401 = vadd.f32 %v362, %v1400
      %v1402 = vpop.f32.mrb[0].mxu0
      %1403 = vmatprep.mubr.f32.mxu0 0.0
      %1404 = vmatmul.mubr.f32.gmra.mrb[0].mxu0 %v720
      %v1405 = vpop.f32.mrb[0].mxu0
      %v1406 = vadd.f32 %v362, %v1405
      %v1407 = vpop.f32.mrb[0].mxu0
      %1408 = vmatprep.mubr.f32.mxu0 0.0
      %1409 = vmatmul.mubr.f32.gmra.mrb[0].mxu0 %v723
      %v1410 = vpop.f32.mrb[0].mxu0
      %v1411 = vadd.f32 %v362, %v1410
      %v1412 = vpop.f32.mrb[0].mxu0
      %1413 = vmatprep.mubr.f32.mxu0 0.0
      %1414 = vmatmul.mubr.f32.gmra.mrb[0].mxu0 %v726
      %v1415 = vpop.f32.mrb[0].mxu0
      %v1416 = vadd.f32 %v362, %v1415
      %v1417 = vpop.f32.mrb[0].mxu0
      %1418 = vmatprep.mubr.f32.mxu0 0.0
      %1419 = vmatmul.mubr.f32.gmra.mrb[0].mxu0 %v729
      %v1420 = vpop.f32.mrb[0].mxu0
      %v1421 = vadd.f32 %v362, %v1420
      %v1422 = vpop.f32.mrb[0].mxu0
      %1423 = vmatprep.mubr.f32.mxu0 0.0
      %1424 = vmatmul.mubr.f32.gmra.mrb[0].mxu0 %v732
      %v1425 = vpop.f32.mrb[0].mxu0
      %v1426 = vadd.f32 %v362, %v1425
      %v1427 = vpop.f32.mrb[0].mxu0
      %1428 = vmatprep.mubr.f32.mxu0 0.0
      %1429 = vmatmul.mubr.f32.gmra.mrb[0].mxu0 %v735
      %v1430 = vpop.f32.mrb[0].mxu0
      %v1431 = vadd.f32 %v362, %v1430
      %v1432 = vpop.f32.mrb[0].mxu0
      %1433 = vmatprep.mubr.f32.mxu0 0.0
      %1434 = vmatmul.mubr.f32.gmra.mrb[0].mxu0 %v738
      %v1435 = vpop.f32.mrb[0].mxu0
      %v1436 = vadd.f32 %v362, %v1435
      %v1437 = vpop.f32.mrb[0].mxu0
      %1438 = vmatprep.mubr.f32.mxu0 0.0
      %1439 = vmatmul.mubr.f32.gmra.mrb[0].mxu0 %v741
      %v1440 = vpop.f32.mrb[0].mxu0
      %v1441 = vadd.f32 %v362, %v1440
      %v1442 = vpop.f32.mrb[0].mxu0
      %1443 = vmatprep.mubr.f32.mxu0 0.0
      %1444 = vmatmul.mubr.f32.gmra.mrb[0].mxu0 %v744
      %v1445 = vpop.f32.mrb[0].mxu0
      %v1446 = vadd.f32 %v362, %v1445
      %v1447 = vpop.f32.mrb[0].mxu0
      %1448 = vmatprep.mubr.f32.mxu0 0.0
      %1449 = vmatmul.mubr.f32.gmra.mrb[0].mxu0 %v747
      %v1450 = vpop.f32.mrb[0].mxu0
      %v1451 = vadd.f32 %v362, %v1450
      %v1452 = vpop.f32.mrb[0].mxu0
      %1453 = vdwg.mxu0
      %v1454 = vmax.f32 %v816, 0.0
      %v1455 = vmax.f32 %v821, 0.0
      %v1456 = vmax.f32 %v826, 0.0
      %v1457 = vmax.f32 %v831, 0.0
      %v1458 = vmax.f32 %v836, 0.0
      %v1459 = vmax.f32 %v841, 0.0
      %v1460 = vmax.f32 %v846, 0.0
      %v1461 = vmax.f32 %v851, 0.0
      %v1462 = vmax.f32 %v856, 0.0
      %v1463 = vmax.f32 %v861, 0.0
      %v1464 = vmax.f32 %v866, 0.0
      %v1465 = vmax.f32 %v871, 0.0
      %v1466 = vmax.f32 %v876, 0.0
      %v1467 = vmax.f32 %v881, 0.0
      %v1468 = vmax.f32 %v886, 0.0
      %v1469 = vmax.f32 %v891, 0.0
      %v1470 = vmax.f32 %v896, 0.0
      %v1471 = vmax.f32 %v901, 0.0
      %v1472 = vmax.f32 %v906, 0.0
      %v1473 = vmax.f32 %v911, 0.0
      %v1474 = vmax.f32 %v916, 0.0
      %v1475 = vmax.f32 %v921, 0.0
      %v1476 = vmax.f32 %v926, 0.0
      %v1477 = vmax.f32 %v931, 0.0
      %v1478 = vmax.f32 %v936, 0.0
      %v1479 = vmax.f32 %v941, 0.0
      %v1480 = vmax.f32 %v946, 0.0
      %v1481 = vmax.f32 %v951, 0.0
      %v1482 = vmax.f32 %v956, 0.0
      %v1483 = vmax.f32 %v961, 0.0
      %v1484 = vmax.f32 %v966, 0.0
      %v1485 = vmax.f32 %v971, 0.0
      %v1486 = vmax.f32 %v976, 0.0
      %v1487 = vmax.f32 %v981, 0.0
      %v1488 = vmax.f32 %v986, 0.0
      %v1489 = vmax.f32 %v991, 0.0
      %v1490 = vmax.f32 %v996, 0.0
      %v1491 = vmax.f32 %v1001, 0.0
      %v1492 = vmax.f32 %v1006, 0.0
      %v1493 = vmax.f32 %v1011, 0.0
      %v1494 = vmax.f32 %v1016, 0.0
      %v1495 = vmax.f32 %v1021, 0.0
      %v1496 = vmax.f32 %v1026, 0.0
      %v1497 = vmax.f32 %v1031, 0.0
      %v1498 = vmax.f32 %v1036, 0.0
      %v1499 = vmax.f32 %v1041, 0.0
      %v1500 = vmax.f32 %v1046, 0.0
      %v1501 = vmax.f32 %v1051, 0.0
      %v1502 = vmax.f32 %v1056, 0.0
      %v1503 = vmax.f32 %v1061, 0.0
      %v1504 = vmax.f32 %v1066, 0.0
      %v1505 = vmax.f32 %v1071, 0.0
      %v1506 = vmax.f32 %v1076, 0.0
      %v1507 = vmax.f32 %v1081, 0.0
      %v1508 = vmax.f32 %v1086, 0.0
      %v1509 = vmax.f32 %v1091, 0.0
      %v1510 = vmax.f32 %v1096, 0.0
      %v1511 = vmax.f32 %v1101, 0.0
      %v1512 = vmax.f32 %v1106, 0.0
      %v1513 = vmax.f32 %v1111, 0.0
      %v1514 = vmax.f32 %v1116, 0.0
      %v1515 = vmax.f32 %v1121, 0.0
      %v1516 = vmax.f32 %v1126, 0.0
      %v1517 = vmax.f32 %v1131, 0.0
      %v1518 = vmax.f32 %v1136, 0.0
      %v1519 = vmax.f32 %v1141, 0.0
      %v1520 = vmax.f32 %v1146, 0.0
      %v1521 = vmax.f32 %v1151, 0.0
      %v1522 = vmax.f32 %v1156, 0.0
      %v1523 = vmax.f32 %v1161, 0.0
      %v1524 = vmax.f32 %v1166, 0.0
      %v1525 = vmax.f32 %v1171, 0.0
      %v1526 = vmax.f32 %v1176, 0.0
      %v1527 = vmax.f32 %v1181, 0.0
      %v1528 = vmax.f32 %v1186, 0.0
      %v1529 = vmax.f32 %v1191, 0.0
      %v1530 = vmax.f32 %v1196, 0.0
      %v1531 = vmax.f32 %v1201, 0.0
      %v1532 = vmax.f32 %v1206, 0.0
      %v1533 = vmax.f32 %v1211, 0.0
      %v1534 = vmax.f32 %v1216, 0.0
      %v1535 = vmax.f32 %v1221, 0.0
      %v1536 = vmax.f32 %v1226, 0.0
      %v1537 = vmax.f32 %v1231, 0.0
      %v1538 = vmax.f32 %v1236, 0.0
      %v1539 = vmax.f32 %v1241, 0.0
      %v1540 = vmax.f32 %v1246, 0.0
      %v1541 = vmax.f32 %v1251, 0.0
      %v1542 = vmax.f32 %v1256, 0.0
      %v1543 = vmax.f32 %v1261, 0.0
      %v1544 = vmax.f32 %v1266, 0.0
      %v1545 = vmax.f32 %v1271, 0.0
      %v1546 = vmax.f32 %v1276, 0.0
      %v1547 = vmax.f32 %v1281, 0.0
      %v1548 = vmax.f32 %v1286, 0.0
      %v1549 = vmax.f32 %v1291, 0.0
      %v1550 = vmax.f32 %v1296, 0.0
      %v1551 = vmax.f32 %v1301, 0.0
      %v1552 = vmax.f32 %v1306, 0.0
      %v1553 = vmax.f32 %v1311, 0.0
      %v1554 = vmax.f32 %v1316, 0.0
      %v1555 = vmax.f32 %v1321, 0.0
      %v1556 = vmax.f32 %v1326, 0.0
      %v1557 = vmax.f32 %v1331, 0.0
      %v1558 = vmax.f32 %v1336, 0.0
      %v1559 = vmax.f32 %v1341, 0.0
      %v1560 = vmax.f32 %v1346, 0.0
      %v1561 = vmax.f32 %v1351, 0.0
      %v1562 = vmax.f32 %v1356, 0.0
      %v1563 = vmax.f32 %v1361, 0.0
      %v1564 = vmax.f32 %v1366, 0.0
      %v1565 = vmax.f32 %v1371, 0.0
      %v1566 = vmax.f32 %v1376, 0.0
      %v1567 = vmax.f32 %v1381, 0.0
      %v1568 = vmax.f32 %v1386, 0.0
      %v1569 = vmax.f32 %v1391, 0.0
      %v1570 = vmax.f32 %v1396, 0.0
      %v1571 = vmax.f32 %v1401, 0.0
      %v1572 = vmax.f32 %v1406, 0.0
      %v1573 = vmax.f32 %v1411, 0.0
      %v1574 = vmax.f32 %v1416, 0.0
      %v1575 = vmax.f32 %v1421, 0.0
      %v1576 = vmax.f32 %v1426, 0.0
      %v1577 = vmax.f32 %v1431, 0.0
      %v1578 = vmax.f32 %v1436, 0.0
      %v1579 = vmax.f32 %v1441, 0.0
      %v1580 = vmax.f32 %v1446, 0.0
      %v1581 = vmax.f32 %v1451, 0.0
      %v1582 = vmax.f32 %v1454, %v1458
      %v1583 = vmax.f32 %v1455, %v1459
      %v1584 = vmax.f32 %v1456, %v1460
      %v1585 = vmax.f32 %v1457, %v1461
      %v1586 = vmax.f32 %v1462, %v1466
      %v1587 = vmax.f32 %v1463, %v1467
      %v1588 = vmax.f32 %v1464, %v1468
      %v1589 = vmax.f32 %v1465, %v1469
      %v1590 = vmax.f32 %v1470, %v1474
      %v1591 = vmax.f32 %v1471, %v1475
      %v1592 = vmax.f32 %v1472, %v1476
      %v1593 = vmax.f32 %v1473, %v1477
      %v1594 = vmax.f32 %v1478, %v1482
      %v1595 = vmax.f32 %v1479, %v1483
      %v1596 = vmax.f32 %v1480, %v1484
      %v1597 = vmax.f32 %v1481, %v1485
      %v1598 = vmax.f32 %v1486, %v1490
      %v1599 = vmax.f32 %v1487, %v1491
      %v1600 = vmax.f32 %v1488, %v1492
      %v1601 = vmax.f32 %v1489, %v1493
      %v1602 = vmax.f32 %v1494, %v1498
      %v1603 = vmax.f32 %v1495, %v1499
      %v1604 = vmax.f32 %v1496, %v1500
      %v1605 = vmax.f32 %v1497, %v1501
      %v1606 = vmax.f32 %v1502, %v1506
      %v1607 = vmax.f32 %v1503, %v1507
      %v1608 = vmax.f32 %v1504, %v1508
      %v1609 = vmax.f32 %v1505, %v1509
      %v1610 = vmax.f32 %v1510, %v1514
      %v1611 = vmax.f32 %v1511, %v1515
      %v1612 = vmax.f32 %v1512, %v1516
      %v1613 = vmax.f32 %v1513, %v1517
      %v1614 = vmax.f32 %v1518, %v1522
      %v1615 = vmax.f32 %v1519, %v1523
      %v1616 = vmax.f32 %v1520, %v1524
      %v1617 = vmax.f32 %v1521, %v1525
      %v1618 = vmax.f32 %v1526, %v1530
      %v1619 = vmax.f32 %v1527, %v1531
      %v1620 = vmax.f32 %v1528, %v1532
      %v1621 = vmax.f32 %v1529, %v1533
      %v1622 = vmax.f32 %v1534, %v1538
      %v1623 = vmax.f32 %v1535, %v1539
      %v1624 = vmax.f32 %v1536, %v1540
      %v1625 = vmax.f32 %v1537, %v1541
      %v1626 = vmax.f32 %v1542, %v1546
      %v1627 = vmax.f32 %v1543, %v1547
      %v1628 = vmax.f32 %v1544, %v1548
      %v1629 = vmax.f32 %v1545, %v1549
      %v1630 = vmax.f32 %v1550, %v1554
      %v1631 = vmax.f32 %v1551, %v1555
      %v1632 = vmax.f32 %v1552, %v1556
      %v1633 = vmax.f32 %v1553, %v1557
      %v1634 = vmax.f32 %v1558, %v1562
      %v1635 = vmax.f32 %v1559, %v1563
      %v1636 = vmax.f32 %v1560, %v1564
      %v1637 = vmax.f32 %v1561, %v1565
      %v1638 = vmax.f32 %v1566, %v1570
      %v1639 = vmax.f32 %v1567, %v1571
      %v1640 = vmax.f32 %v1568, %v1572
      %v1641 = vmax.f32 %v1569, %v1573
      %v1642 = vmax.f32 %v1574, %v1578
      %v1643 = vmax.f32 %v1575, %v1579
      %v1644 = vmax.f32 %v1576, %v1580
      %v1645 = vmax.f32 %v1577, %v1581
      %vm1646 = vcmask 130048
      %1647 = vst.msk [vmem:[#allocation2] sm:$0xff] %vm1646, %v1582
      %1648 = vst.msk [vmem:[#allocation2 + $0x8] sm:$0xff] %vm1646, %v1583
      %1649 = vst.msk [vmem:[#allocation2 + $0x10] sm:$0xff] %vm1646, %v1584
      %1650 = vst.msk [vmem:[#allocation2 + $0x18] sm:$0xff] %vm1646, %v1585
      %1651 = vst.msk [vmem:[#allocation2 + $0x20] sm:$0xff] %vm1646, %v1586
      %1652 = vst.msk [vmem:[#allocation2 + $0x28] sm:$0xff] %vm1646, %v1587
      %1653 = vst.msk [vmem:[#allocation2 + $0x30] sm:$0xff] %vm1646, %v1588
      %1654 = vst.msk [vmem:[#allocation2 + $0x38] sm:$0xff] %vm1646, %v1589
      %1655 = vst.msk [vmem:[#allocation2 + $0x40] sm:$0xff] %vm1646, %v1590
      %1656 = vst.msk [vmem:[#allocation2 + $0x48] sm:$0xff] %vm1646, %v1591
      %1657 = vst.msk [vmem:[#allocation2 + $0x50] sm:$0xff] %vm1646, %v1592
      %1658 = vst.msk [vmem:[#allocation2 + $0x58] sm:$0xff] %vm1646, %v1593
      %1659 = vst.msk [vmem:[#allocation2 + $0x60] sm:$0xff] %vm1646, %v1594
      %1660 = vst.msk [vmem:[#allocation2 + $0x68] sm:$0xff] %vm1646, %v1595
      %1661 = vst.msk [vmem:[#allocation2 + $0x70] sm:$0xff] %vm1646, %v1596
      %1662 = vst.msk [vmem:[#allocation2 + $0x78] sm:$0xff] %vm1646, %v1597
      %1663 = vst.msk [vmem:[#allocation2 + $0x80] sm:$0xff] %vm1646, %v1598
      %1664 = vst.msk [vmem:[#allocation2 + $0x88] sm:$0xff] %vm1646, %v1599
      %1665 = vst.msk [vmem:[#allocation2 + $0x90] sm:$0xff] %vm1646, %v1600
      %1666 = vst.msk [vmem:[#allocation2 + $0x98] sm:$0xff] %vm1646, %v1601
      %1667 = vst.msk [vmem:[#allocation2 + $0xa0] sm:$0xff] %vm1646, %v1602
      %1668 = vst.msk [vmem:[#allocation2 + $0xa8] sm:$0xff] %vm1646, %v1603
      %1669 = vst.msk [vmem:[#allocation2 + $0xb0] sm:$0xff] %vm1646, %v1604
      %1670 = vst.msk [vmem:[#allocation2 + $0xb8] sm:$0xff] %vm1646, %v1605
      %1671 = vst.msk [vmem:[#allocation2 + $0xc0] sm:$0xff] %vm1646, %v1606
      %1672 = vst.msk [vmem:[#allocation2 + $0xc8] sm:$0xff] %vm1646, %v1607
      %1673 = vst.msk [vmem:[#allocation2 + $0xd0] sm:$0xff] %vm1646, %v1608
      %1674 = vst.msk [vmem:[#allocation2 + $0xd8] sm:$0xff] %vm1646, %v1609
      %1675 = vst.msk [vmem:[#allocation2 + $0xe0] sm:$0xff] %vm1646, %v1610
      %1676 = vst.msk [vmem:[#allocation2 + $0xe8] sm:$0xff] %vm1646, %v1611
      %1677 = vst.msk [vmem:[#allocation2 + $0xf0] sm:$0xff] %vm1646, %v1612
      %1678 = vst.msk [vmem:[#allocation2 + $0xf8] sm:$0xff] %vm1646, %v1613
      %1679 = vst.msk [vmem:[#allocation2 + $0x100] sm:$0xff] %vm1646, %v1614
      %1680 = vst.msk [vmem:[#allocation2 + $0x108] sm:$0xff] %vm1646, %v1615
      %1681 = vst.msk [vmem:[#allocation2 + $0x110] sm:$0xff] %vm1646, %v1616
      %1682 = vst.msk [vmem:[#allocation2 + $0x118] sm:$0xff] %vm1646, %v1617
      %1683 = vst.msk [vmem:[#allocation2 + $0x120] sm:$0xff] %vm1646, %v1618
      %1684 = vst.msk [vmem:[#allocation2 + $0x128] sm:$0xff] %vm1646, %v1619
      %1685 = vst.msk [vmem:[#allocation2 + $0x130] sm:$0xff] %vm1646, %v1620
      %1686 = vst.msk [vmem:[#allocation2 + $0x138] sm:$0xff] %vm1646, %v1621
      %1687 = vst.msk [vmem:[#allocation2 + $0x140] sm:$0xff] %vm1646, %v1622
      %1688 = vst.msk [vmem:[#allocation2 + $0x148] sm:$0xff] %vm1646, %v1623
      %1689 = vst.msk [vmem:[#allocation2 + $0x150] sm:$0xff] %vm1646, %v1624
      %1690 = vst.msk [vmem:[#allocation2 + $0x158] sm:$0xff] %vm1646, %v1625
      %1691 = vst.msk [vmem:[#allocation2 + $0x160] sm:$0xff] %vm1646, %v1626
      %1692 = vst.msk [vmem:[#allocation2 + $0x168] sm:$0xff] %vm1646, %v1627
      %1693 = vst.msk [vmem:[#allocation2 + $0x170] sm:$0xff] %vm1646, %v1628
      %1694 = vst.msk [vmem:[#allocation2 + $0x178] sm:$0xff] %vm1646, %v1629
      %1695 = vst.msk [vmem:[#allocation2 + $0x180] sm:$0xff] %vm1646, %v1630
      %1696 = vst.msk [vmem:[#allocation2 + $0x188] sm:$0xff] %vm1646, %v1631
      %1697 = vst.msk [vmem:[#allocation2 + $0x190] sm:$0xff] %vm1646, %v1632
      %1698 = vst.msk [vmem:[#allocation2 + $0x198] sm:$0xff] %vm1646, %v1633
      %1699 = vst.msk [vmem:[#allocation2 + $0x1a0] sm:$0xff] %vm1646, %v1634
      %1700 = vst.msk [vmem:[#allocation2 + $0x1a8] sm:$0xff] %vm1646, %v1635
      %1701 = vst.msk [vmem:[#allocation2 + $0x1b0] sm:$0xff] %vm1646, %v1636
      %1702 = vst.msk [vmem:[#allocation2 + $0x1b8] sm:$0xff] %vm1646, %v1637
      %1703 = vst.msk [vmem:[#allocation2 + $0x1c0] sm:$0xff] %vm1646, %v1638
      %1704 = vst.msk [vmem:[#allocation2 + $0x1c8] sm:$0xff] %vm1646, %v1639
      %1705 = vst.msk [vmem:[#allocation2 + $0x1d0] sm:$0xff] %vm1646, %v1640
      %1706 = vst.msk [vmem:[#allocation2 + $0x1d8] sm:$0xff] %vm1646, %v1641
      %1707 = vst.msk [vmem:[#allocation2 + $0x1e0] sm:$0xff] %vm1646, %v1642
      %1708 = vst.msk [vmem:[#allocation2 + $0x1e8] sm:$0xff] %vm1646, %v1643
      %1709 = vst.msk [vmem:[#allocation2 + $0x1f0] sm:$0xff] %vm1646, %v1644
      %1710 = vst.msk [vmem:[#allocation2 + $0x1f8] sm:$0xff] %vm1646, %v1645
      %v1711 = vld [vmem:[#allocation2] ss:$2 sm:$0xff]
      %s1712 = scalar_lea.vmem [#allocation2], 16
      %v1713 = vld [vmem:[%s1712] ss:$2 sm:$0xff]
      %s1714 = scalar_lea.vmem [#allocation2], 32
      %v1715 = vld [vmem:[%s1714] ss:$2 sm:$0xff]
      %s1716 = scalar_lea.vmem [#allocation2], 48
      %v1717 = vld [vmem:[%s1716] ss:$2 sm:$0xff]
      %s1718 = scalar_lea.vmem [#allocation2], 64
      %v1719 = vld [vmem:[%s1718] ss:$2 sm:$0xff]
      %s1720 = scalar_lea.vmem [#allocation2], 80
      %v1721 = vld [vmem:[%s1720] ss:$2 sm:$0xff]
      %s1722 = scalar_lea.vmem [#allocation2], 96
      %v1723 = vld [vmem:[%s1722] ss:$2 sm:$0xff]
      %s1724 = scalar_lea.vmem [#allocation2], 112
      %v1725 = vld [vmem:[%s1724] ss:$2 sm:$0xff]
      %s1726 = scalar_lea.vmem [#allocation2], 128
      %v1727 = vld [vmem:[%s1726] ss:$2 sm:$0xff]
      %s1728 = scalar_lea.vmem [#allocation2], 144
      %v1729 = vld [vmem:[%s1728] ss:$2 sm:$0xff]
      %s1730 = scalar_lea.vmem [#allocation2], 160
      %v1731 = vld [vmem:[%s1730] ss:$2 sm:$0xff]
      %s1732 = scalar_lea.vmem [#allocation2], 176
      %v1733 = vld [vmem:[%s1732] ss:$2 sm:$0xff]
      %s1734 = scalar_lea.vmem [#allocation2], 192
      %v1735 = vld [vmem:[%s1734] ss:$2 sm:$0xff]
      %s1736 = scalar_lea.vmem [#allocation2], 208
      %v1737 = vld [vmem:[%s1736] ss:$2 sm:$0xff]
      %s1738 = scalar_lea.vmem [#allocation2], 224
      %v1739 = vld [vmem:[%s1738] ss:$2 sm:$0xff]
      %s1740 = scalar_lea.vmem [#allocation2], 240
      %v1741 = vld [vmem:[%s1740] ss:$2 sm:$0xff]
      %s1742 = scalar_lea.vmem [#allocation2], 256
      %v1743 = vld [vmem:[%s1742] ss:$2 sm:$0xff]
      %s1744 = scalar_lea.vmem [#allocation2], 272
      %v1745 = vld [vmem:[%s1744] ss:$2 sm:$0xff]
      %s1746 = scalar_lea.vmem [#allocation2], 288
      %v1747 = vld [vmem:[%s1746] ss:$2 sm:$0xff]
      %s1748 = scalar_lea.vmem [#allocation2], 304
      %v1749 = vld [vmem:[%s1748] ss:$2 sm:$0xff]
      %s1750 = scalar_lea.vmem [#allocation2], 320
      %v1751 = vld [vmem:[%s1750] ss:$2 sm:$0xff]
      %s1752 = scalar_lea.vmem [#allocation2], 336
      %v1753 = vld [vmem:[%s1752] ss:$2 sm:$0xff]
      %s1754 = scalar_lea.vmem [#allocation2], 352
      %v1755 = vld [vmem:[%s1754] ss:$2 sm:$0xff]
      %s1756 = scalar_lea.vmem [#allocation2], 368
      %v1757 = vld [vmem:[%s1756] ss:$2 sm:$0xff]
      %s1758 = scalar_lea.vmem [#allocation2], 384
      %v1759 = vld [vmem:[%s1758] ss:$2 sm:$0xff]
      %s1760 = scalar_lea.vmem [#allocation2], 400
      %v1761 = vld [vmem:[%s1760] ss:$2 sm:$0xff]
      %s1762 = scalar_lea.vmem [#allocation2], 416
      %v1763 = vld [vmem:[%s1762] ss:$2 sm:$0xff]
      %s1764 = scalar_lea.vmem [#allocation2], 432
      %v1765 = vld [vmem:[%s1764] ss:$2 sm:$0xff]
      %s1766 = scalar_lea.vmem [#allocation2], 448
      %v1767 = vld [vmem:[%s1766] ss:$2 sm:$0xff]
      %s1768 = scalar_lea.vmem [#allocation2], 464
      %v1769 = vld [vmem:[%s1768] ss:$2 sm:$0xff]
      %s1770 = scalar_lea.vmem [#allocation2], 480
      %v1771 = vld [vmem:[%s1770] ss:$2 sm:$0xff]
      %s1772 = scalar_lea.vmem [#allocation2], 496
      %v1773 = vld [vmem:[%s1772] ss:$2 sm:$0xff]
      %s1774 = scalar_lea.vmem [#allocation2], 1
      %v1775 = vld [vmem:[%s1774] ss:$2 sm:$0xff]
      %s1776 = scalar_lea.vmem [#allocation2], 17
      %v1777 = vld [vmem:[%s1776] ss:$2 sm:$0xff]
      %s1778 = scalar_lea.vmem [#allocation2], 33
      %v1779 = vld [vmem:[%s1778] ss:$2 sm:$0xff]
      %s1780 = scalar_lea.vmem [#allocation2], 49
      %v1781 = vld [vmem:[%s1780] ss:$2 sm:$0xff]
      %s1782 = scalar_lea.vmem [#allocation2], 65
      %v1783 = vld [vmem:[%s1782] ss:$2 sm:$0xff]
      %s1784 = scalar_lea.vmem [#allocation2], 81
      %v1785 = vld [vmem:[%s1784] ss:$2 sm:$0xff]
      %s1786 = scalar_lea.vmem [#allocation2], 97
      %v1787 = vld [vmem:[%s1786] ss:$2 sm:$0xff]
      %s1788 = scalar_lea.vmem [#allocation2], 113
      %v1789 = vld [vmem:[%s1788] ss:$2 sm:$0xff]
      %s1790 = scalar_lea.vmem [#allocation2], 129
      %v1791 = vld [vmem:[%s1790] ss:$2 sm:$0xff]
      %s1792 = scalar_lea.vmem [#allocation2], 145
      %v1793 = vld [vmem:[%s1792] ss:$2 sm:$0xff]
      %s1794 = scalar_lea.vmem [#allocation2], 161
      %v1795 = vld [vmem:[%s1794] ss:$2 sm:$0xff]
      %s1796 = scalar_lea.vmem [#allocation2], 177
      %v1797 = vld [vmem:[%s1796] ss:$2 sm:$0xff]
      %s1798 = scalar_lea.vmem [#allocation2], 193
      %v1799 = vld [vmem:[%s1798] ss:$2 sm:$0xff]
      %s1800 = scalar_lea.vmem [#allocation2], 209
      %v1801 = vld [vmem:[%s1800] ss:$2 sm:$0xff]
      %s1802 = scalar_lea.vmem [#allocation2], 225
      %v1803 = vld [vmem:[%s1802] ss:$2 sm:$0xff]
      %s1804 = scalar_lea.vmem [#allocation2], 241
      %v1805 = vld [vmem:[%s1804] ss:$2 sm:$0xff]
      %s1806 = scalar_lea.vmem [#allocation2], 257
      %v1807 = vld [vmem:[%s1806] ss:$2 sm:$0xff]
      %s1808 = scalar_lea.vmem [#allocation2], 273
      %v1809 = vld [vmem:[%s1808] ss:$2 sm:$0xff]
      %s1810 = scalar_lea.vmem [#allocation2], 289
      %v1811 = vld [vmem:[%s1810] ss:$2 sm:$0xff]
      %s1812 = scalar_lea.vmem [#allocation2], 305
      %v1813 = vld [vmem:[%s1812] ss:$2 sm:$0xff]
      %s1814 = scalar_lea.vmem [#allocation2], 321
      %v1815 = vld [vmem:[%s1814] ss:$2 sm:$0xff]
      %s1816 = scalar_lea.vmem [#allocation2], 337
      %v1817 = vld [vmem:[%s1816] ss:$2 sm:$0xff]
      %s1818 = scalar_lea.vmem [#allocation2], 353
      %v1819 = vld [vmem:[%s1818] ss:$2 sm:$0xff]
      %s1820 = scalar_lea.vmem [#allocation2], 369
      %v1821 = vld [vmem:[%s1820] ss:$2 sm:$0xff]
      %s1822 = scalar_lea.vmem [#allocation2], 385
      %v1823 = vld [vmem:[%s1822] ss:$2 sm:$0xff]
      %s1824 = scalar_lea.vmem [#allocation2], 401
      %v1825 = vld [vmem:[%s1824] ss:$2 sm:$0xff]
      %s1826 = scalar_lea.vmem [#allocation2], 417
      %v1827 = vld [vmem:[%s1826] ss:$2 sm:$0xff]
      %s1828 = scalar_lea.vmem [#allocation2], 433
      %v1829 = vld [vmem:[%s1828] ss:$2 sm:$0xff]
      %s1830 = scalar_lea.vmem [#allocation2], 449
      %v1831 = vld [vmem:[%s1830] ss:$2 sm:$0xff]
      %s1832 = scalar_lea.vmem [#allocation2], 465
      %v1833 = vld [vmem:[%s1832] ss:$2 sm:$0xff]
      %s1834 = scalar_lea.vmem [#allocation2], 481
      %v1835 = vld [vmem:[%s1834] ss:$2 sm:$0xff]
      %s1836 = scalar_lea.vmem [#allocation2], 497
      %v1837 = vld [vmem:[%s1836] ss:$2 sm:$0xff]
      %v1838 = vmax.f32 %v1711, %v1775
      %v1839 = vmax.f32 %v1713, %v1777
      %v1840 = vmax.f32 %v1715, %v1779
      %v1841 = vmax.f32 %v1717, %v1781
      %v1842 = vmax.f32 %v1719, %v1783
      %v1843 = vmax.f32 %v1721, %v1785
      %v1844 = vmax.f32 %v1723, %v1787
      %v1845 = vmax.f32 %v1725, %v1789
      %v1846 = vmax.f32 %v1727, %v1791
      %v1847 = vmax.f32 %v1729, %v1793
      %v1848 = vmax.f32 %v1731, %v1795
      %v1849 = vmax.f32 %v1733, %v1797
      %v1850 = vmax.f32 %v1735, %v1799
      %v1851 = vmax.f32 %v1737, %v1801
      %v1852 = vmax.f32 %v1739, %v1803
      %v1853 = vmax.f32 %v1741, %v1805
      %v1854 = vmax.f32 %v1743, %v1807
      %v1855 = vmax.f32 %v1745, %v1809
      %v1856 = vmax.f32 %v1747, %v1811
      %v1857 = vmax.f32 %v1749, %v1813
      %v1858 = vmax.f32 %v1751, %v1815
      %v1859 = vmax.f32 %v1753, %v1817
      %v1860 = vmax.f32 %v1755, %v1819
      %v1861 = vmax.f32 %v1757, %v1821
      %v1862 = vmax.f32 %v1759, %v1823
      %v1863 = vmax.f32 %v1761, %v1825
      %v1864 = vmax.f32 %v1763, %v1827
      %v1865 = vmax.f32 %v1765, %v1829
      %v1866 = vmax.f32 %v1767, %v1831
      %v1867 = vmax.f32 %v1769, %v1833
      %v1868 = vmax.f32 %v1771, %v1835
      %v1869 = vmax.f32 %v1773, %v1837
      %1870 = vst.msk [vmem:[#allocation3] sm:$0xff] %vm1646, 0.0
      %1871 = vst.msk [vmem:[#allocation3 + $0x8] sm:$0xff] %vm1646, 0.0
      %1872 = vst.msk [vmem:[#allocation3 + $0x10] sm:$0xff] %vm1646, 0.0
      %1873 = vst.msk [vmem:[#allocation3 + $0x118] sm:$0xff] %vm1646, 0.0
      %1874 = vst.msk [vmem:[#allocation3 + $0x120] sm:$0xff] %vm1646, 0.0
      %1875 = vst.msk [vmem:[#allocation3 + $0x128] sm:$0xff] %vm1646, 0.0
      %1876 = vst.msk [vmem:[#allocation3 + $0x18] sm:$0xff] %vm1646, %v1838
      %1877 = vst.msk [vmem:[#allocation3 + $0x20] sm:$0xff] %vm1646, %v1839
      %1878 = vst.msk [vmem:[#allocation3 + $0x28] sm:$0xff] %vm1646, %v1840
      %1879 = vst.msk [vmem:[#allocation3 + $0x30] sm:$0xff] %vm1646, %v1841
      %1880 = vst.msk [vmem:[#allocation3 + $0x38] sm:$0xff] %vm1646, %v1842
      %1881 = vst.msk [vmem:[#allocation3 + $0x40] sm:$0xff] %vm1646, %v1843
      %1882 = vst.msk [vmem:[#allocation3 + $0x48] sm:$0xff] %vm1646, %v1844
      %1883 = vst.msk [vmem:[#allocation3 + $0x50] sm:$0xff] %vm1646, %v1845
      %1884 = vst.msk [vmem:[#allocation3 + $0x58] sm:$0xff] %vm1646, %v1846
      %1885 = vst.msk [vmem:[#allocation3 + $0x60] sm:$0xff] %vm1646, %v1847
      %1886 = vst.msk [vmem:[#allocation3 + $0x68] sm:$0xff] %vm1646, %v1848
      %1887 = vst.msk [vmem:[#allocation3 + $0x70] sm:$0xff] %vm1646, %v1849
      %1888 = vst.msk [vmem:[#allocation3 + $0x78] sm:$0xff] %vm1646, %v1850
      %1889 = vst.msk [vmem:[#allocation3 + $0x80] sm:$0xff] %vm1646, %v1851
      %1890 = vst.msk [vmem:[#allocation3 + $0x88] sm:$0xff] %vm1646, %v1852
      %1891 = vst.msk [vmem:[#allocation3 + $0x90] sm:$0xff] %vm1646, %v1853
      %1892 = vst.msk [vmem:[#allocation3 + $0x98] sm:$0xff] %vm1646, %v1854
      %1893 = vst.msk [vmem:[#allocation3 + $0xa0] sm:$0xff] %vm1646, %v1855
      %1894 = vst.msk [vmem:[#allocation3 + $0xa8] sm:$0xff] %vm1646, %v1856
      %1895 = vst.msk [vmem:[#allocation3 + $0xb0] sm:$0xff] %vm1646, %v1857
      %1896 = vst.msk [vmem:[#allocation3 + $0xb8] sm:$0xff] %vm1646, %v1858
      %1897 = vst.msk [vmem:[#allocation3 + $0xc0] sm:$0xff] %vm1646, %v1859
      %1898 = vst.msk [vmem:[#allocation3 + $0xc8] sm:$0xff] %vm1646, %v1860
      %1899 = vst.msk [vmem:[#allocation3 + $0xd0] sm:$0xff] %vm1646, %v1861
      %1900 = vst.msk [vmem:[#allocation3 + $0xd8] sm:$0xff] %vm1646, %v1862
      %1901 = vst.msk [vmem:[#allocation3 + $0xe0] sm:$0xff] %vm1646, %v1863
      %1902 = vst.msk [vmem:[#allocation3 + $0xe8] sm:$0xff] %vm1646, %v1864
      %1903 = vst.msk [vmem:[#allocation3 + $0xf0] sm:$0xff] %vm1646, %v1865
      %1904 = vst.msk [vmem:[#allocation3 + $0xf8] sm:$0xff] %vm1646, %v1866
      %1905 = vst.msk [vmem:[#allocation3 + $0x100] sm:$0xff] %vm1646, %v1867
      %1906 = vst.msk [vmem:[#allocation3 + $0x108] sm:$0xff] %vm1646, %v1868
      %1907 = vst.msk [vmem:[#allocation3 + $0x110] sm:$0xff] %vm1646, %v1869
      %v1908 = vlaneseq
      %v1909 = vshrl.u32 %v1908, 7
      %v1910 = vadd.s32 %v1909, 8
      %v1911 = vadd.s32 %v1909, 16
      %v1912 = vadd.s32 %v1909, 24
      %v1913 = vadd.s32 %v1909, 32
      %v1914 = vadd.s32 %v1909, 40
      %v1915 = vadd.s32 %v1909, 48
      %v1916 = vadd.s32 %v1909, 56
      %v1917 = vadd.s32 %v1909, 64
      %v1918 = vadd.s32 %v1909, 72
      %v1919 = vadd.s32 %v1909, 80
      %v1920 = vadd.s32 %v1909, 88
      %v1921 = vadd.s32 %v1909, 96
      %v1922 = vadd.s32 %v1909, 104
      %v1923 = vadd.s32 %v1909, 112
      %v1924 = vadd.s32 %v1909, 120
      %v1925 = vadd.s32 %v1909, 128
      %v1926 = vadd.s32 %v1909, 136
      %v1927 = vadd.s32 %v1909, 144
      %v1928 = vadd.s32 %v1909, 152
      %v1929 = vadd.s32 %v1909, 160
      %v1930 = vadd.s32 %v1909, 168
      %v1931 = vadd.s32 %v1909, 176
      %v1932 = vadd.s32 %v1909, 184
      %v1933 = vadd.s32 %v1909, 192
      %v1934 = vadd.s32 %v1909, 200
      %v1935 = vadd.s32 %v1909, 208
      %v1936 = vadd.s32 %v1909, 216
      %v1937 = vadd.s32 %v1909, 224
      %v1938 = vadd.s32 %v1909, 232
      %v1939 = vadd.s32 %v1909, 240
      %v1940 = vadd.s32 %v1909, 248
      %vm1941 = vcmp.lt.s32.totalorder %v1909, 0
      %v1942 = vsub.s32 0, %v1909
      %v1943 = vsel %vm1941, %v1942, %v1909
      %v1944 = vshrl.u32 %v1943, 4
      %v1945 = vand.u32 %v1943, 15
      %v1946 = vsub.s32 0, %v1945
      %v1947 = vsel %vm1941, %v1946, %v1945
      %vm1948 = vcmp.lt.s32.totalorder %v1910, 0
      %v1949 = vsub.s32 0, %v1910
      %v1950 = vsel %vm1948, %v1949, %v1910
      %v1951 = vshrl.u32 %v1950, 4
      %v1952 = vand.u32 %v1950, 15
      %v1953 = vsub.s32 0, %v1952
      %v1954 = vsel %vm1948, %v1953, %v1952
      %vm1955 = vcmp.lt.s32.totalorder %v1911, 0
      %v1956 = vsub.s32 0, %v1911
      %v1957 = vsel %vm1955, %v1956, %v1911
      %v1958 = vshrl.u32 %v1957, 4
      %v1959 = vand.u32 %v1957, 15
      %v1960 = vsub.s32 0, %v1959
      %v1961 = vsel %vm1955, %v1960, %v1959
      %vm1962 = vcmp.lt.s32.totalorder %v1912, 0
      %v1963 = vsub.s32 0, %v1912
      %v1964 = vsel %vm1962, %v1963, %v1912
      %v1965 = vshrl.u32 %v1964, 4
      %v1966 = vand.u32 %v1964, 15
      %v1967 = vsub.s32 0, %v1966
      %v1968 = vsel %vm1962, %v1967, %v1966
      %vm1969 = vcmp.lt.s32.totalorder %v1913, 0
      %v1970 = vsub.s32 0, %v1913
      %v1971 = vsel %vm1969, %v1970, %v1913
      %v1972 = vshrl.u32 %v1971, 4
      %v1973 = vand.u32 %v1971, 15
      %v1974 = vsub.s32 0, %v1973
      %v1975 = vsel %vm1969, %v1974, %v1973
      %vm1976 = vcmp.lt.s32.totalorder %v1914, 0
      %v1977 = vsub.s32 0, %v1914
      %v1978 = vsel %vm1976, %v1977, %v1914
      %v1979 = vshrl.u32 %v1978, 4
      %v1980 = vand.u32 %v1978, 15
      %v1981 = vsub.s32 0, %v1980
      %v1982 = vsel %vm1976, %v1981, %v1980
      %vm1983 = vcmp.lt.s32.totalorder %v1915, 0
      %v1984 = vsub.s32 0, %v1915
      %v1985 = vsel %vm1983, %v1984, %v1915
      %v1986 = vshrl.u32 %v1985, 4
      %v1987 = vand.u32 %v1985, 15
      %v1988 = vsub.s32 0, %v1987
      %v1989 = vsel %vm1983, %v1988, %v1987
      %vm1990 = vcmp.lt.s32.totalorder %v1916, 0
      %v1991 = vsub.s32 0, %v1916
      %v1992 = vsel %vm1990, %v1991, %v1916
      %v1993 = vshrl.u32 %v1992, 4
      %v1994 = vand.u32 %v1992, 15
      %v1995 = vsub.s32 0, %v1994
      %v1996 = vsel %vm1990, %v1995, %v1994
      %vm1997 = vcmp.lt.s32.totalorder %v1917, 0
      %v1998 = vsub.s32 0, %v1917
      %v1999 = vsel %vm1997, %v1998, %v1917
      %v2000 = vshrl.u32 %v1999, 4
      %v2001 = vand.u32 %v1999, 15
      %v2002 = vsub.s32 0, %v2001
      %v2003 = vsel %vm1997, %v2002, %v2001
      %vm2004 = vcmp.lt.s32.totalorder %v1918, 0
      %v2005 = vsub.s32 0, %v1918
      %v2006 = vsel %vm2004, %v2005, %v1918
      %v2007 = vshrl.u32 %v2006, 4
      %v2008 = vand.u32 %v2006, 15
      %v2009 = vsub.s32 0, %v2008
      %v2010 = vsel %vm2004, %v2009, %v2008
      %vm2011 = vcmp.lt.s32.totalorder %v1919, 0
      %v2012 = vsub.s32 0, %v1919
      %v2013 = vsel %vm2011, %v2012, %v1919
      %v2014 = vshrl.u32 %v2013, 4
      %v2015 = vand.u32 %v2013, 15
      %v2016 = vsub.s32 0, %v2015
      %v2017 = vsel %vm2011, %v2016, %v2015
      %vm2018 = vcmp.lt.s32.totalorder %v1920, 0
      %v2019 = vsub.s32 0, %v1920
      %v2020 = vsel %vm2018, %v2019, %v1920
      %v2021 = vshrl.u32 %v2020, 4
      %v2022 = vand.u32 %v2020, 15
      %v2023 = vsub.s32 0, %v2022
      %v2024 = vsel %vm2018, %v2023, %v2022
      %vm2025 = vcmp.lt.s32.totalorder %v1921, 0
      %v2026 = vsub.s32 0, %v1921
      %v2027 = vsel %vm2025, %v2026, %v1921
      %v2028 = vshrl.u32 %v2027, 4
      %v2029 = vand.u32 %v2027, 15
      %v2030 = vsub.s32 0, %v2029
      %v2031 = vsel %vm2025, %v2030, %v2029
      %vm2032 = vcmp.lt.s32.totalorder %v1922, 0
      %v2033 = vsub.s32 0, %v1922
      %v2034 = vsel %vm2032, %v2033, %v1922
      %v2035 = vshrl.u32 %v2034, 4
      %v2036 = vand.u32 %v2034, 15
      %v2037 = vsub.s32 0, %v2036
      %v2038 = vsel %vm2032, %v2037, %v2036
      %vm2039 = vcmp.lt.s32.totalorder %v1923, 0
      %v2040 = vsub.s32 0, %v1923
      %v2041 = vsel %vm2039, %v2040, %v1923
      %v2042 = vshrl.u32 %v2041, 4
      %v2043 = vand.u32 %v2041, 15
      %v2044 = vsub.s32 0, %v2043
      %v2045 = vsel %vm2039, %v2044, %v2043
      %vm2046 = vcmp.lt.s32.totalorder %v1924, 0
      %v2047 = vsub.s32 0, %v1924
      %v2048 = vsel %vm2046, %v2047, %v1924
      %v2049 = vshrl.u32 %v2048, 4
      %v2050 = vand.u32 %v2048, 15
      %v2051 = vsub.s32 0, %v2050
      %v2052 = vsel %vm2046, %v2051, %v2050
      %vm2053 = vcmp.lt.s32.totalorder %v1925, 0
      %v2054 = vsub.s32 0, %v1925
      %v2055 = vsel %vm2053, %v2054, %v1925
      %v2056 = vshrl.u32 %v2055, 4
      %v2057 = vand.u32 %v2055, 15
      %v2058 = vsub.s32 0, %v2057
      %v2059 = vsel %vm2053, %v2058, %v2057
      %vm2060 = vcmp.lt.s32.totalorder %v1926, 0
      %v2061 = vsub.s32 0, %v1926
      %v2062 = vsel %vm2060, %v2061, %v1926
      %v2063 = vshrl.u32 %v2062, 4
      %v2064 = vand.u32 %v2062, 15
      %v2065 = vsub.s32 0, %v2064
      %v2066 = vsel %vm2060, %v2065, %v2064
      %vm2067 = vcmp.lt.s32.totalorder %v1927, 0
      %v2068 = vsub.s32 0, %v1927
      %v2069 = vsel %vm2067, %v2068, %v1927
      %v2070 = vshrl.u32 %v2069, 4
      %v2071 = vand.u32 %v2069, 15
      %v2072 = vsub.s32 0, %v2071
      %v2073 = vsel %vm2067, %v2072, %v2071
      %vm2074 = vcmp.lt.s32.totalorder %v1928, 0
      %v2075 = vsub.s32 0, %v1928
      %v2076 = vsel %vm2074, %v2075, %v1928
      %v2077 = vshrl.u32 %v2076, 4
      %v2078 = vand.u32 %v2076, 15
      %v2079 = vsub.s32 0, %v2078
      %v2080 = vsel %vm2074, %v2079, %v2078
      %vm2081 = vcmp.lt.s32.totalorder %v1929, 0
      %v2082 = vsub.s32 0, %v1929
      %v2083 = vsel %vm2081, %v2082, %v1929
      %v2084 = vshrl.u32 %v2083, 4
      %v2085 = vand.u32 %v2083, 15
      %v2086 = vsub.s32 0, %v2085
      %v2087 = vsel %vm2081, %v2086, %v2085
      %vm2088 = vcmp.lt.s32.totalorder %v1930, 0
      %v2089 = vsub.s32 0, %v1930
      %v2090 = vsel %vm2088, %v2089, %v1930
      %v2091 = vshrl.u32 %v2090, 4
      %v2092 = vand.u32 %v2090, 15
      %v2093 = vsub.s32 0, %v2092
      %v2094 = vsel %vm2088, %v2093, %v2092
      %vm2095 = vcmp.lt.s32.totalorder %v1931, 0
      %v2096 = vsub.s32 0, %v1931
      %v2097 = vsel %vm2095, %v2096, %v1931
      %v2098 = vshrl.u32 %v2097, 4
      %v2099 = vand.u32 %v2097, 15
      %v2100 = vsub.s32 0, %v2099
      %v2101 = vsel %vm2095, %v2100, %v2099
      %vm2102 = vcmp.lt.s32.totalorder %v1932, 0
      %v2103 = vsub.s32 0, %v1932
      %v2104 = vsel %vm2102, %v2103, %v1932
      %v2105 = vshrl.u32 %v2104, 4
      %v2106 = vand.u32 %v2104, 15
      %v2107 = vsub.s32 0, %v2106
      %v2108 = vsel %vm2102, %v2107, %v2106
      %vm2109 = vcmp.lt.s32.totalorder %v1933, 0
      %v2110 = vsub.s32 0, %v1933
      %v2111 = vsel %vm2109, %v2110, %v1933
      %v2112 = vshrl.u32 %v2111, 4
      %v2113 = vand.u32 %v2111, 15
      %v2114 = vsub.s32 0, %v2113
      %v2115 = vsel %vm2109, %v2114, %v2113
      %vm2116 = vcmp.lt.s32.totalorder %v1934, 0
      %v2117 = vsub.s32 0, %v1934
      %v2118 = vsel %vm2116, %v2117, %v1934
      %v2119 = vshrl.u32 %v2118, 4
      %v2120 = vand.u32 %v2118, 15
      %v2121 = vsub.s32 0, %v2120
      %v2122 = vsel %vm2116, %v2121, %v2120
      %vm2123 = vcmp.lt.s32.totalorder %v1935, 0
      %v2124 = vsub.s32 0, %v1935
      %v2125 = vsel %vm2123, %v2124, %v1935
      %v2126 = vshrl.u32 %v2125, 4
      %v2127 = vand.u32 %v2125, 15
      %v2128 = vsub.s32 0, %v2127
      %v2129 = vsel %vm2123, %v2128, %v2127
      %vm2130 = vcmp.lt.s32.totalorder %v1936, 0
      %v2131 = vsub.s32 0, %v1936
      %v2132 = vsel %vm2130, %v2131, %v1936
      %v2133 = vshrl.u32 %v2132, 4
      %v2134 = vand.u32 %v2132, 15
      %v2135 = vsub.s32 0, %v2134
      %v2136 = vsel %vm2130, %v2135, %v2134
      %vm2137 = vcmp.lt.s32.totalorder %v1937, 0
      %v2138 = vsub.s32 0, %v1937
      %v2139 = vsel %vm2137, %v2138, %v1937
      %v2140 = vshrl.u32 %v2139, 4
      %v2141 = vand.u32 %v2139, 15
      %v2142 = vsub.s32 0, %v2141
      %v2143 = vsel %vm2137, %v2142, %v2141
      %vm2144 = vcmp.lt.s32.totalorder %v1938, 0
      %v2145 = vsub.s32 0, %v1938
      %v2146 = vsel %vm2144, %v2145, %v1938
      %v2147 = vshrl.u32 %v2146, 4
      %v2148 = vand.u32 %v2146, 15
      %v2149 = vsub.s32 0, %v2148
      %v2150 = vsel %vm2144, %v2149, %v2148
      %vm2151 = vcmp.lt.s32.totalorder %v1939, 0
      %v2152 = vsub.s32 0, %v1939
      %v2153 = vsel %vm2151, %v2152, %v1939
      %v2154 = vshrl.u32 %v2153, 4
      %v2155 = vand.u32 %v2153, 15
      %v2156 = vsub.s32 0, %v2155
      %v2157 = vsel %vm2151, %v2156, %v2155
      %vm2158 = vcmp.lt.s32.totalorder %v1940, 0
      %v2159 = vsub.s32 0, %v1940
      %v2160 = vsel %vm2158, %v2159, %v1940
      %v2161 = vshrl.u32 %v2160, 4
      %v2162 = vand.u32 %v2160, 15
      %v2163 = vsub.s32 0, %v2162
      %v2164 = vsel %vm2158, %v2163, %v2162
      %vm2165 = vcmp.ne.s32.totalorder %v1947, 0
      %vm2166 = vcmp.ne.s32.totalorder %v1954, 0
      %vm2167 = vcmp.ne.s32.totalorder %v1961, 0
      %vm2168 = vcmp.ne.s32.totalorder %v1968, 0
      %vm2169 = vcmp.ne.s32.totalorder %v1975, 0
      %vm2170 = vcmp.ne.s32.totalorder %v1982, 0
      %vm2171 = vcmp.ne.s32.totalorder %v1989, 0
      %vm2172 = vcmp.ne.s32.totalorder %v1996, 0
      %vm2173 = vcmp.ne.s32.totalorder %v2003, 0
      %vm2174 = vcmp.ne.s32.totalorder %v2010, 0
      %vm2175 = vcmp.ne.s32.totalorder %v2017, 0
      %vm2176 = vcmp.ne.s32.totalorder %v2024, 0
      %vm2177 = vcmp.ne.s32.totalorder %v2031, 0
      %vm2178 = vcmp.ne.s32.totalorder %v2038, 0
      %vm2179 = vcmp.ne.s32.totalorder %v2045, 0
      %vm2180 = vcmp.ne.s32.totalorder %v2052, 0
      %vm2181 = vcmp.ne.s32.totalorder %v2059, 0
      %vm2182 = vcmp.ne.s32.totalorder %v2066, 0
      %vm2183 = vcmp.ne.s32.totalorder %v2073, 0
      %vm2184 = vcmp.ne.s32.totalorder %v2080, 0
      %vm2185 = vcmp.ne.s32.totalorder %v2087, 0
      %vm2186 = vcmp.ne.s32.totalorder %v2094, 0
      %vm2187 = vcmp.ne.s32.totalorder %v2101, 0
      %vm2188 = vcmp.ne.s32.totalorder %v2108, 0
      %vm2189 = vcmp.ne.s32.totalorder %v2115, 0
      %vm2190 = vcmp.ne.s32.totalorder %v2122, 0
      %vm2191 = vcmp.ne.s32.totalorder %v2129, 0
      %vm2192 = vcmp.ne.s32.totalorder %v2136, 0
      %vm2193 = vcmp.ne.s32.totalorder %v2143, 0
      %vm2194 = vcmp.ne.s32.totalorder %v2150, 0
      %vm2195 = vcmp.ne.s32.totalorder %v2157, 0
      %vm2196 = vcmp.ne.s32.totalorder %v2164, 0
      %vm2197 = vcmp.lt.s32.totalorder %v1947, 0
      %vm2198 = vcmp.lt.s32.totalorder %v1954, 0
      %vm2199 = vcmp.lt.s32.totalorder %v1961, 0
      %vm2200 = vcmp.lt.s32.totalorder %v1968, 0
      %vm2201 = vcmp.lt.s32.totalorder %v1975, 0
      %vm2202 = vcmp.lt.s32.totalorder %v1982, 0
      %vm2203 = vcmp.lt.s32.totalorder %v1989, 0
      %vm2204 = vcmp.lt.s32.totalorder %v1996, 0
      %vm2205 = vcmp.lt.s32.totalorder %v2003, 0
      %vm2206 = vcmp.lt.s32.totalorder %v2010, 0
      %vm2207 = vcmp.lt.s32.totalorder %v2017, 0
      %vm2208 = vcmp.lt.s32.totalorder %v2024, 0
      %vm2209 = vcmp.lt.s32.totalorder %v2031, 0
      %vm2210 = vcmp.lt.s32.totalorder %v2038, 0
      %vm2211 = vcmp.lt.s32.totalorder %v2045, 0
      %vm2212 = vcmp.lt.s32.totalorder %v2052, 0
      %vm2213 = vcmp.lt.s32.totalorder %v2059, 0
      %vm2214 = vcmp.lt.s32.totalorder %v2066, 0
      %vm2215 = vcmp.lt.s32.totalorder %v2073, 0
      %vm2216 = vcmp.lt.s32.totalorder %v2080, 0
      %vm2217 = vcmp.lt.s32.totalorder %v2087, 0
      %vm2218 = vcmp.lt.s32.totalorder %v2094, 0
      %vm2219 = vcmp.lt.s32.totalorder %v2101, 0
      %vm2220 = vcmp.lt.s32.totalorder %v2108, 0
      %vm2221 = vcmp.lt.s32.totalorder %v2115, 0
      %vm2222 = vcmp.lt.s32.totalorder %v2122, 0
      %vm2223 = vcmp.lt.s32.totalorder %v2129, 0
      %vm2224 = vcmp.lt.s32.totalorder %v2136, 0
      %vm2225 = vcmp.lt.s32.totalorder %v2143, 0
      %vm2226 = vcmp.lt.s32.totalorder %v2150, 0
      %vm2227 = vcmp.lt.s32.totalorder %v2157, 0
      %vm2228 = vcmp.lt.s32.totalorder %v2164, 0
      %vm2229 = vmand %vm2197, %vm2165
      %vm2230 = vmand %vm2198, %vm2166
      %vm2231 = vmand %vm2199, %vm2167
      %vm2232 = vmand %vm2200, %vm2168
      %vm2233 = vmand %vm2201, %vm2169
      %vm2234 = vmand %vm2202, %vm2170
      %vm2235 = vmand %vm2203, %vm2171
      %vm2236 = vmand %vm2204, %vm2172
      %vm2237 = vmand %vm2205, %vm2173
      %vm2238 = vmand %vm2206, %vm2174
      %vm2239 = vmand %vm2207, %vm2175
      %vm2240 = vmand %vm2208, %vm2176
      %vm2241 = vmand %vm2209, %vm2177
      %vm2242 = vmand %vm2210, %vm2178
      %vm2243 = vmand %vm2211, %vm2179
      %vm2244 = vmand %vm2212, %vm2180
      %vm2245 = vmand %vm2213, %vm2181
      %vm2246 = vmand %vm2214, %vm2182
      %vm2247 = vmand %vm2215, %vm2183
      %vm2248 = vmand %vm2216, %vm2184
      %vm2249 = vmand %vm2217, %vm2185
      %vm2250 = vmand %vm2218, %vm2186
      %vm2251 = vmand %vm2219, %vm2187
      %vm2252 = vmand %vm2220, %vm2188
      %vm2253 = vmand %vm2221, %vm2189
      %vm2254 = vmand %vm2222, %vm2190
      %vm2255 = vmand %vm2223, %vm2191
      %vm2256 = vmand %vm2224, %vm2192
      %vm2257 = vmand %vm2225, %vm2193
      %vm2258 = vmand %vm2226, %vm2194
      %vm2259 = vmand %vm2227, %vm2195
      %vm2260 = vmand %vm2228, %vm2196
      %v2261 = vadd.s32 %v1947, 16
      %v2262 = vadd.s32 %v1954, 16
      %v2263 = vadd.s32 %v1961, 16
      %v2264 = vadd.s32 %v1968, 16
      %v2265 = vadd.s32 %v1975, 16
      %v2266 = vadd.s32 %v1982, 16
      %v2267 = vadd.s32 %v1989, 16
      %v2268 = vadd.s32 %v1996, 16
      %v2269 = vadd.s32 %v2003, 16
      %v2270 = vadd.s32 %v2010, 16
      %v2271 = vadd.s32 %v2017, 16
      %v2272 = vadd.s32 %v2024, 16
      %v2273 = vadd.s32 %v2031, 16
      %v2274 = vadd.s32 %v2038, 16
      %v2275 = vadd.s32 %v2045, 16
      %v2276 = vadd.s32 %v2052, 16
      %v2277 = vadd.s32 %v2059, 16
      %v2278 = vadd.s32 %v2066, 16
      %v2279 = vadd.s32 %v2073, 16
      %v2280 = vadd.s32 %v2080, 16
      %v2281 = vadd.s32 %v2087, 16
      %v2282 = vadd.s32 %v2094, 16
      %v2283 = vadd.s32 %v2101, 16
      %v2284 = vadd.s32 %v2108, 16
      %v2285 = vadd.s32 %v2115, 16
      %v2286 = vadd.s32 %v2122, 16
      %v2287 = vadd.s32 %v2129, 16
      %v2288 = vadd.s32 %v2136, 16
      %v2289 = vadd.s32 %v2143, 16
      %v2290 = vadd.s32 %v2150, 16
      %v2291 = vadd.s32 %v2157, 16
      %v2292 = vadd.s32 %v2164, 16
      %v2293 = vsel %vm2229, %v2261, %v1947
      %v2294 = vsel %vm2230, %v2262, %v1954
      %v2295 = vsel %vm2231, %v2263, %v1961
      %v2296 = vsel %vm2232, %v2264, %v1968
      %v2297 = vsel %vm2233, %v2265, %v1975
      %v2298 = vsel %vm2234, %v2266, %v1982
      %v2299 = vsel %vm2235, %v2267, %v1989
      %v2300 = vsel %vm2236, %v2268, %v1996
      %v2301 = vsel %vm2237, %v2269, %v2003
      %v2302 = vsel %vm2238, %v2270, %v2010
      %v2303 = vsel %vm2239, %v2271, %v2017
      %v2304 = vsel %vm2240, %v2272, %v2024
      %v2305 = vsel %vm2241, %v2273, %v2031
      %v2306 = vsel %vm2242, %v2274, %v2038
      %v2307 = vsel %vm2243, %v2275, %v2045
      %v2308 = vsel %vm2244, %v2276, %v2052
      %v2309 = vsel %vm2245, %v2277, %v2059
      %v2310 = vsel %vm2246, %v2278, %v2066
      %v2311 = vsel %vm2247, %v2279, %v2073
      %v2312 = vsel %vm2248, %v2280, %v2080
      %v2313 = vsel %vm2249, %v2281, %v2087
      %v2314 = vsel %vm2250, %v2282, %v2094
      %v2315 = vsel %vm2251, %v2283, %v2101
      %v2316 = vsel %vm2252, %v2284, %v2108
      %v2317 = vsel %vm2253, %v2285, %v2115
      %v2318 = vsel %vm2254, %v2286, %v2122
      %v2319 = vsel %vm2255, %v2287, %v2129
      %v2320 = vsel %vm2256, %v2288, %v2136
      %v2321 = vsel %vm2257, %v2289, %v2143
      %v2322 = vsel %vm2258, %v2290, %v2150
      %v2323 = vsel %vm2259, %v2291, %v2157
      %v2324 = vsel %vm2260, %v2292, %v2164
      %vm2325 = vcmp.gt.s32.totalorder %v2293, 0
      %vm2326 = vcmp.gt.s32.totalorder %v2294, 0
      %vm2327 = vcmp.gt.s32.totalorder %v2295, 0
      %vm2328 = vcmp.gt.s32.totalorder %v2296, 0
      %vm2329 = vcmp.gt.s32.totalorder %v2297, 0
      %vm2330 = vcmp.gt.s32.totalorder %v2298, 0
      %vm2331 = vcmp.gt.s32.totalorder %v2299, 0
      %vm2332 = vcmp.gt.s32.totalorder %v2300, 0
      %vm2333 = vcmp.gt.s32.totalorder %v2301, 0
      %vm2334 = vcmp.gt.s32.totalorder %v2302, 0
      %vm2335 = vcmp.gt.s32.totalorder %v2303, 0
      %vm2336 = vcmp.gt.s32.totalorder %v2304, 0
      %vm2337 = vcmp.gt.s32.totalorder %v2305, 0
      %vm2338 = vcmp.gt.s32.totalorder %v2306, 0
      %vm2339 = vcmp.gt.s32.totalorder %v2307, 0
      %vm2340 = vcmp.gt.s32.totalorder %v2308, 0
      %vm2341 = vcmp.gt.s32.totalorder %v2309, 0
      %vm2342 = vcmp.gt.s32.totalorder %v2310, 0
      %vm2343 = vcmp.gt.s32.totalorder %v2311, 0
      %vm2344 = vcmp.gt.s32.totalorder %v2312, 0
      %vm2345 = vcmp.gt.s32.totalorder %v2313, 0
      %vm2346 = vcmp.gt.s32.totalorder %v2314, 0
      %vm2347 = vcmp.gt.s32.totalorder %v2315, 0
      %vm2348 = vcmp.gt.s32.totalorder %v2316, 0
      %vm2349 = vcmp.gt.s32.totalorder %v2317, 0
      %vm2350 = vcmp.gt.s32.totalorder %v2318, 0
      %vm2351 = vcmp.gt.s32.totalorder %v2319, 0
      %vm2352 = vcmp.gt.s32.totalorder %v2320, 0
      %vm2353 = vcmp.gt.s32.totalorder %v2321, 0
      %vm2354 = vcmp.gt.s32.totalorder %v2322, 0
      %vm2355 = vcmp.gt.s32.totalorder %v2323, 0
      %vm2356 = vcmp.gt.s32.totalorder %v2324, 0
      %vm2357 = vcmp.lt.s32.totalorder %v2293, 15
      %vm2358 = vcmp.lt.s32.totalorder %v2294, 15
      %vm2359 = vcmp.lt.s32.totalorder %v2295, 15
      %vm2360 = vcmp.lt.s32.totalorder %v2296, 15
      %vm2361 = vcmp.lt.s32.totalorder %v2297, 15
      %vm2362 = vcmp.lt.s32.totalorder %v2298, 15
      %vm2363 = vcmp.lt.s32.totalorder %v2299, 15
      %vm2364 = vcmp.lt.s32.totalorder %v2300, 15
      %vm2365 = vcmp.lt.s32.totalorder %v2301, 15
      %vm2366 = vcmp.lt.s32.totalorder %v2302, 15
      %vm2367 = vcmp.lt.s32.totalorder %v2303, 15
      %vm2368 = vcmp.lt.s32.totalorder %v2304, 15
      %vm2369 = vcmp.lt.s32.totalorder %v2305, 15
      %vm2370 = vcmp.lt.s32.totalorder %v2306, 15
      %vm2371 = vcmp.lt.s32.totalorder %v2307, 15
      %vm2372 = vcmp.lt.s32.totalorder %v2308, 15
      %vm2373 = vcmp.lt.s32.totalorder %v2309, 15
      %vm2374 = vcmp.lt.s32.totalorder %v2310, 15
      %vm2375 = vcmp.lt.s32.totalorder %v2311, 15
      %vm2376 = vcmp.lt.s32.totalorder %v2312, 15
      %vm2377 = vcmp.lt.s32.totalorder %v2313, 15
      %vm2378 = vcmp.lt.s32.totalorder %v2314, 15
      %vm2379 = vcmp.lt.s32.totalorder %v2315, 15
      %vm2380 = vcmp.lt.s32.totalorder %v2316, 15
      %vm2381 = vcmp.lt.s32.totalorder %v2317, 15
      %vm2382 = vcmp.lt.s32.totalorder %v2318, 15
      %vm2383 = vcmp.lt.s32.totalorder %v2319, 15
      %vm2384 = vcmp.lt.s32.totalorder %v2320, 15
      %vm2385 = vcmp.lt.s32.totalorder %v2321, 15
      %vm2386 = vcmp.lt.s32.totalorder %v2322, 15
      %vm2387 = vcmp.lt.s32.totalorder %v2323, 15
      %vm2388 = vcmp.lt.s32.totalorder %v2324, 15
      %v2389 = vld [vmem:[#allocation3 + $0x7] sm:$0xff]
      %v2390 = vld [vmem:[#allocation3 + $0xf] sm:$0xff]
      %v2391 = vld [vmem:[#allocation3 + $0x17] sm:$0xff]
      %v2392 = vld [vmem:[#allocation3 + $0x1f] sm:$0xff]
      %v2393 = vld [vmem:[#allocation3 + $0x27] sm:$0xff]
      %v2394 = vld [vmem:[#allocation3 + $0x2f] sm:$0xff]
      %v2395 = vld [vmem:[#allocation3 + $0x37] sm:$0xff]
      %v2396 = vld [vmem:[#allocation3 + $0x3f] sm:$0xff]
      %v2397 = vld [vmem:[#allocation3 + $0x47] sm:$0xff]
      %v2398 = vld [vmem:[#allocation3 + $0x4f] sm:$0xff]
      %v2399 = vld [vmem:[#allocation3 + $0x57] sm:$0xff]
      %v2400 = vld [vmem:[#allocation3 + $0x5f] sm:$0xff]
      %v2401 = vld [vmem:[#allocation3 + $0x67] sm:$0xff]
      %v2402 = vld [vmem:[#allocation3 + $0x6f] sm:$0xff]
      %v2403 = vld [vmem:[#allocation3 + $0x77] sm:$0xff]
      %v2404 = vld [vmem:[#allocation3 + $0x7f] sm:$0xff]
      %v2405 = vld [vmem:[#allocation3 + $0x87] sm:$0xff]
      %v2406 = vld [vmem:[#allocation3 + $0x8f] sm:$0xff]
      %v2407 = vld [vmem:[#allocation3 + $0x97] sm:$0xff]
      %v2408 = vld [vmem:[#allocation3 + $0x9f] sm:$0xff]
      %v2409 = vld [vmem:[#allocation3 + $0xa7] sm:$0xff]
      %v2410 = vld [vmem:[#allocation3 + $0xaf] sm:$0xff]
      %v2411 = vld [vmem:[#allocation3 + $0xb7] sm:$0xff]
      %v2412 = vld [vmem:[#allocation3 + $0xbf] sm:$0xff]
      %v2413 = vld [vmem:[#allocation3 + $0xc7] sm:$0xff]
      %v2414 = vld [vmem:[#allocation3 + $0xcf] sm:$0xff]
      %v2415 = vld [vmem:[#allocation3 + $0xd7] sm:$0xff]
      %v2416 = vld [vmem:[#allocation3 + $0xdf] sm:$0xff]
      %v2417 = vld [vmem:[#allocation3 + $0xe7] sm:$0xff]
      %v2418 = vld [vmem:[#allocation3 + $0xef] sm:$0xff]
      %v2419 = vld [vmem:[#allocation3 + $0xf7] sm:$0xff]
      %v2420 = vld [vmem:[#allocation3 + $0xff] sm:$0xff]
      %v2421 = vsel %vm2325, 1, 0
      %v2422 = vsel %vm2326, 1, 0
      %v2423 = vsel %vm2327, 1, 0
      %v2424 = vsel %vm2328, 1, 0
      %v2425 = vsel %vm2329, 1, 0
      %v2426 = vsel %vm2330, 1, 0
      %v2427 = vsel %vm2331, 1, 0
      %v2428 = vsel %vm2332, 1, 0
      %v2429 = vsel %vm2333, 1, 0
      %v2430 = vsel %vm2334, 1, 0
      %v2431 = vsel %vm2335, 1, 0
      %v2432 = vsel %vm2336, 1, 0
      %v2433 = vsel %vm2337, 1, 0
      %v2434 = vsel %vm2338, 1, 0
      %v2435 = vsel %vm2339, 1, 0
      %v2436 = vsel %vm2340, 1, 0
      %v2437 = vsel %vm2341, 1, 0
      %v2438 = vsel %vm2342, 1, 0
      %v2439 = vsel %vm2343, 1, 0
      %v2440 = vsel %vm2344, 1, 0
      %v2441 = vsel %vm2345, 1, 0
      %v2442 = vsel %vm2346, 1, 0
      %v2443 = vsel %vm2347, 1, 0
      %v2444 = vsel %vm2348, 1, 0
      %v2445 = vsel %vm2349, 1, 0
      %v2446 = vsel %vm2350, 1, 0
      %v2447 = vsel %vm2351, 1, 0
      %v2448 = vsel %vm2352, 1, 0
      %v2449 = vsel %vm2353, 1, 0
      %v2450 = vsel %vm2354, 1, 0
      %v2451 = vsel %vm2355, 1, 0
      %v2452 = vsel %vm2356, 1, 0
      %vm2453 = vcmp.eq.s32.totalorder %v2421, 1
      %vm2454 = vcmp.eq.s32.totalorder %v2422, 1
      %vm2455 = vcmp.eq.s32.totalorder %v2423, 1
      %vm2456 = vcmp.eq.s32.totalorder %v2424, 1
      %vm2457 = vcmp.eq.s32.totalorder %v2425, 1
      %vm2458 = vcmp.eq.s32.totalorder %v2426, 1
      %vm2459 = vcmp.eq.s32.totalorder %v2427, 1
      %vm2460 = vcmp.eq.s32.totalorder %v2428, 1
      %vm2461 = vcmp.eq.s32.totalorder %v2429, 1
      %vm2462 = vcmp.eq.s32.totalorder %v2430, 1
      %vm2463 = vcmp.eq.s32.totalorder %v2431, 1
      %vm2464 = vcmp.eq.s32.totalorder %v2432, 1
      %vm2465 = vcmp.eq.s32.totalorder %v2433, 1
      %vm2466 = vcmp.eq.s32.totalorder %v2434, 1
      %vm2467 = vcmp.eq.s32.totalorder %v2435, 1
      %vm2468 = vcmp.eq.s32.totalorder %v2436, 1
      %vm2469 = vcmp.eq.s32.totalorder %v2437, 1
      %vm2470 = vcmp.eq.s32.totalorder %v2438, 1
      %vm2471 = vcmp.eq.s32.totalorder %v2439, 1
      %vm2472 = vcmp.eq.s32.totalorder %v2440, 1
      %vm2473 = vcmp.eq.s32.totalorder %v2441, 1
      %vm2474 = vcmp.eq.s32.totalorder %v2442, 1
      %vm2475 = vcmp.eq.s32.totalorder %v2443, 1
      %vm2476 = vcmp.eq.s32.totalorder %v2444, 1
      %vm2477 = vcmp.eq.s32.totalorder %v2445, 1
      %vm2478 = vcmp.eq.s32.totalorder %v2446, 1
      %vm2479 = vcmp.eq.s32.totalorder %v2447, 1
      %vm2480 = vcmp.eq.s32.totalorder %v2448, 1
      %vm2481 = vcmp.eq.s32.totalorder %v2449, 1
      %vm2482 = vcmp.eq.s32.totalorder %v2450, 1
      %vm2483 = vcmp.eq.s32.totalorder %v2451, 1
      %vm2484 = vcmp.eq.s32.totalorder %v2452, 1
      %v2485 = vsel %vm2453, %v2389, 0.0
      %v2486 = vsel %vm2454, %v2390, 0.0
      %v2487 = vsel %vm2455, %v2391, 0.0
      %v2488 = vsel %vm2456, %v2392, 0.0
      %v2489 = vsel %vm2457, %v2393, 0.0
      %v2490 = vsel %vm2458, %v2394, 0.0
      %v2491 = vsel %vm2459, %v2395, 0.0
      %v2492 = vsel %vm2460, %v2396, 0.0
      %v2493 = vsel %vm2461, %v2397, 0.0
      %v2494 = vsel %vm2462, %v2398, 0.0
      %v2495 = vsel %vm2463, %v2399, 0.0
      %v2496 = vsel %vm2464, %v2400, 0.0
      %v2497 = vsel %vm2465, %v2401, 0.0
      %v2498 = vsel %vm2466, %v2402, 0.0
      %v2499 = vsel %vm2467, %v2403, 0.0
      %v2500 = vsel %vm2468, %v2404, 0.0
      %v2501 = vsel %vm2469, %v2405, 0.0
      %v2502 = vsel %vm2470, %v2406, 0.0
      %v2503 = vsel %vm2471, %v2407, 0.0
      %v2504 = vsel %vm2472, %v2408, 0.0
      %v2505 = vsel %vm2473, %v2409, 0.0
      %v2506 = vsel %vm2474, %v2410, 0.0
      %v2507 = vsel %vm2475, %v2411, 0.0
      %v2508 = vsel %vm2476, %v2412, 0.0
      %v2509 = vsel %vm2477, %v2413, 0.0
      %v2510 = vsel %vm2478, %v2414, 0.0
      %v2511 = vsel %vm2479, %v2415, 0.0
      %v2512 = vsel %vm2480, %v2416, 0.0
      %v2513 = vsel %vm2481, %v2417, 0.0
      %v2514 = vsel %vm2482, %v2418, 0.0
      %v2515 = vsel %vm2483, %v2419, 0.0
      %v2516 = vsel %vm2484, %v2420, 0.0
      %v2517 = vld [vmem:[#allocation3 + $0x8] sm:$0xff]
      %v2518 = vld [vmem:[#allocation3 + $0x10] sm:$0xff]
      %v2519 = vld [vmem:[#allocation3 + $0x18] sm:$0xff]
      %v2520 = vld [vmem:[#allocation3 + $0x20] sm:$0xff]
      %v2521 = vld [vmem:[#allocation3 + $0x28] sm:$0xff]
      %v2522 = vld [vmem:[#allocation3 + $0x30] sm:$0xff]
      %v2523 = vld [vmem:[#allocation3 + $0x38] sm:$0xff]
      %v2524 = vld [vmem:[#allocation3 + $0x40] sm:$0xff]
      %v2525 = vld [vmem:[#allocation3 + $0x48] sm:$0xff]
      %v2526 = vld [vmem:[#allocation3 + $0x50] sm:$0xff]
      %v2527 = vld [vmem:[#allocation3 + $0x58] sm:$0xff]
      %v2528 = vld [vmem:[#allocation3 + $0x60] sm:$0xff]
      %v2529 = vld [vmem:[#allocation3 + $0x68] sm:$0xff]
      %v2530 = vld [vmem:[#allocation3 + $0x70] sm:$0xff]
      %v2531 = vld [vmem:[#allocation3 + $0x78] sm:$0xff]
      %v2532 = vld [vmem:[#allocation3 + $0x80] sm:$0xff]
      %v2533 = vld [vmem:[#allocation3 + $0x88] sm:$0xff]
      %v2534 = vld [vmem:[#allocation3 + $0x90] sm:$0xff]
      %v2535 = vld [vmem:[#allocation3 + $0x98] sm:$0xff]
      %v2536 = vld [vmem:[#allocation3 + $0xa0] sm:$0xff]
      %v2537 = vld [vmem:[#allocation3 + $0xa8] sm:$0xff]
      %v2538 = vld [vmem:[#allocation3 + $0xb0] sm:$0xff]
      %v2539 = vld [vmem:[#allocation3 + $0xb8] sm:$0xff]
      %v2540 = vld [vmem:[#allocation3 + $0xc0] sm:$0xff]
      %v2541 = vld [vmem:[#allocation3 + $0xc8] sm:$0xff]
      %v2542 = vld [vmem:[#allocation3 + $0xd0] sm:$0xff]
      %v2543 = vld [vmem:[#allocation3 + $0xd8] sm:$0xff]
      %v2544 = vld [vmem:[#allocation3 + $0xe0] sm:$0xff]
      %v2545 = vld [vmem:[#allocation3 + $0xe8] sm:$0xff]
      %v2546 = vld [vmem:[#allocation3 + $0xf0] sm:$0xff]
      %v2547 = vld [vmem:[#allocation3 + $0xf8] sm:$0xff]
      %v2548 = vld [vmem:[#allocation3 + $0x100] sm:$0xff]
      %v2549 = vld [vmem:[#allocation3 + $0x9] sm:$0xff]
      %v2550 = vld [vmem:[#allocation3 + $0x11] sm:$0xff]
      %v2551 = vld [vmem:[#allocation3 + $0x19] sm:$0xff]
      %v2552 = vld [vmem:[#allocation3 + $0x21] sm:$0xff]
      %v2553 = vld [vmem:[#allocation3 + $0x29] sm:$0xff]
      %v2554 = vld [vmem:[#allocation3 + $0x31] sm:$0xff]
      %v2555 = vld [vmem:[#allocation3 + $0x39] sm:$0xff]
      %v2556 = vld [vmem:[#allocation3 + $0x41] sm:$0xff]
      %v2557 = vld [vmem:[#allocation3 + $0x49] sm:$0xff]
      %v2558 = vld [vmem:[#allocation3 + $0x51] sm:$0xff]
      %v2559 = vld [vmem:[#allocation3 + $0x59] sm:$0xff]
      %v2560 = vld [vmem:[#allocation3 + $0x61] sm:$0xff]
      %v2561 = vld [vmem:[#allocation3 + $0x69] sm:$0xff]
      %v2562 = vld [vmem:[#allocation3 + $0x71] sm:$0xff]
      %v2563 = vld [vmem:[#allocation3 + $0x79] sm:$0xff]
      %v2564 = vld [vmem:[#allocation3 + $0x81] sm:$0xff]
      %v2565 = vld [vmem:[#allocation3 + $0x89] sm:$0xff]
      %v2566 = vld [vmem:[#allocation3 + $0x91] sm:$0xff]
      %v2567 = vld [vmem:[#allocation3 + $0x99] sm:$0xff]
      %v2568 = vld [vmem:[#allocation3 + $0xa1] sm:$0xff]
      %v2569 = vld [vmem:[#allocation3 + $0xa9] sm:$0xff]
      %v2570 = vld [vmem:[#allocation3 + $0xb1] sm:$0xff]
      %v2571 = vld [vmem:[#allocation3 + $0xb9] sm:$0xff]
      %v2572 = vld [vmem:[#allocation3 + $0xc1] sm:$0xff]
      %v2573 = vld [vmem:[#allocation3 + $0xc9] sm:$0xff]
      %v2574 = vld [vmem:[#allocation3 + $0xd1] sm:$0xff]
      %v2575 = vld [vmem:[#allocation3 + $0xd9] sm:$0xff]
      %v2576 = vld [vmem:[#allocation3 + $0xe1] sm:$0xff]
      %v2577 = vld [vmem:[#allocation3 + $0xe9] sm:$0xff]
      %v2578 = vld [vmem:[#allocation3 + $0xf1] sm:$0xff]
      %v2579 = vld [vmem:[#allocation3 + $0xf9] sm:$0xff]
      %v2580 = vld [vmem:[#allocation3 + $0x101] sm:$0xff]
      %v2581 = vsel %vm2357, 1, 0
      %v2582 = vsel %vm2358, 1, 0
      %v2583 = vsel %vm2359, 1, 0
      %v2584 = vsel %vm2360, 1, 0
      %v2585 = vsel %vm2361, 1, 0
      %v2586 = vsel %vm2362, 1, 0
      %v2587 = vsel %vm2363, 1, 0
      %v2588 = vsel %vm2364, 1, 0
      %v2589 = vsel %vm2365, 1, 0
      %v2590 = vsel %vm2366, 1, 0
      %v2591 = vsel %vm2367, 1, 0
      %v2592 = vsel %vm2368, 1, 0
      %v2593 = vsel %vm2369, 1, 0
      %v2594 = vsel %vm2370, 1, 0
      %v2595 = vsel %vm2371, 1, 0
      %v2596 = vsel %vm2372, 1, 0
      %v2597 = vsel %vm2373, 1, 0
      %v2598 = vsel %vm2374, 1, 0
      %v2599 = vsel %vm2375, 1, 0
      %v2600 = vsel %vm2376, 1, 0
      %v2601 = vsel %vm2377, 1, 0
      %v2602 = vsel %vm2378, 1, 0
      %v2603 = vsel %vm2379, 1, 0
      %v2604 = vsel %vm2380, 1, 0
      %v2605 = vsel %vm2381, 1, 0
      %v2606 = vsel %vm2382, 1, 0
      %v2607 = vsel %vm2383, 1, 0
      %v2608 = vsel %vm2384, 1, 0
      %v2609 = vsel %vm2385, 1, 0
      %v2610 = vsel %vm2386, 1, 0
      %v2611 = vsel %vm2387, 1, 0
      %v2612 = vsel %vm2388, 1, 0
      %vm2613 = vcmp.eq.s32.totalorder %v2581, 1
      %vm2614 = vcmp.eq.s32.totalorder %v2582, 1
      %vm2615 = vcmp.eq.s32.totalorder %v2583, 1
      %vm2616 = vcmp.eq.s32.totalorder %v2584, 1
      %vm2617 = vcmp.eq.s32.totalorder %v2585, 1
      %vm2618 = vcmp.eq.s32.totalorder %v2586, 1
      %vm2619 = vcmp.eq.s32.totalorder %v2587, 1
      %vm2620 = vcmp.eq.s32.totalorder %v2588, 1
      %vm2621 = vcmp.eq.s32.totalorder %v2589, 1
      %vm2622 = vcmp.eq.s32.totalorder %v2590, 1
      %vm2623 = vcmp.eq.s32.totalorder %v2591, 1
      %vm2624 = vcmp.eq.s32.totalorder %v2592, 1
      %vm2625 = vcmp.eq.s32.totalorder %v2593, 1
      %vm2626 = vcmp.eq.s32.totalorder %v2594, 1
      %vm2627 = vcmp.eq.s32.totalorder %v2595, 1
      %vm2628 = vcmp.eq.s32.totalorder %v2596, 1
      %vm2629 = vcmp.eq.s32.totalorder %v2597, 1
      %vm2630 = vcmp.eq.s32.totalorder %v2598, 1
      %vm2631 = vcmp.eq.s32.totalorder %v2599, 1
      %vm2632 = vcmp.eq.s32.totalorder %v2600, 1
      %vm2633 = vcmp.eq.s32.totalorder %v2601, 1
      %vm2634 = vcmp.eq.s32.totalorder %v2602, 1
      %vm2635 = vcmp.eq.s32.totalorder %v2603, 1
      %vm2636 = vcmp.eq.s32.totalorder %v2604, 1
      %vm2637 = vcmp.eq.s32.totalorder %v2605, 1
      %vm2638 = vcmp.eq.s32.totalorder %v2606, 1
      %vm2639 = vcmp.eq.s32.totalorder %v2607, 1
      %vm2640 = vcmp.eq.s32.totalorder %v2608, 1
      %vm2641 = vcmp.eq.s32.totalorder %v2609, 1
      %vm2642 = vcmp.eq.s32.totalorder %v2610, 1
      %vm2643 = vcmp.eq.s32.totalorder %v2611, 1
      %vm2644 = vcmp.eq.s32.totalorder %v2612, 1
      %v2645 = vsel %vm2613, %v2549, 0.0
      %v2646 = vsel %vm2614, %v2550, 0.0
      %v2647 = vsel %vm2615, %v2551, 0.0
      %v2648 = vsel %vm2616, %v2552, 0.0
      %v2649 = vsel %vm2617, %v2553, 0.0
      %v2650 = vsel %vm2618, %v2554, 0.0
      %v2651 = vsel %vm2619, %v2555, 0.0
      %v2652 = vsel %vm2620, %v2556, 0.0
      %v2653 = vsel %vm2621, %v2557, 0.0
      %v2654 = vsel %vm2622, %v2558, 0.0
      %v2655 = vsel %vm2623, %v2559, 0.0
      %v2656 = vsel %vm2624, %v2560, 0.0
      %v2657 = vsel %vm2625, %v2561, 0.0
      %v2658 = vsel %vm2626, %v2562, 0.0
      %v2659 = vsel %vm2627, %v2563, 0.0
      %v2660 = vsel %vm2628, %v2564, 0.0
      %v2661 = vsel %vm2629, %v2565, 0.0
      %v2662 = vsel %vm2630, %v2566, 0.0
      %v2663 = vsel %vm2631, %v2567, 0.0
      %v2664 = vsel %vm2632, %v2568, 0.0
      %v2665 = vsel %vm2633, %v2569, 0.0
      %v2666 = vsel %vm2634, %v2570, 0.0
      %v2667 = vsel %vm2635, %v2571, 0.0
      %v2668 = vsel %vm2636, %v2572, 0.0
      %v2669 = vsel %vm2637, %v2573, 0.0
      %v2670 = vsel %vm2638, %v2574, 0.0
      %v2671 = vsel %vm2639, %v2575, 0.0
      %v2672 = vsel %vm2640, %v2576, 0.0
      %v2673 = vsel %vm2641, %v2577, 0.0
      %v2674 = vsel %vm2642, %v2578, 0.0
      %v2675 = vsel %vm2643, %v2579, 0.0
      %v2676 = vsel %vm2644, %v2580, 0.0
      %v2677 = vld [vmem:[#allocation3 + $0x107] sm:$0xff]
      %v2678 = vld [vmem:[#allocation3 + $0x10f] sm:$0xff]
      %v2679 = vsel %vm2453, %v2391, 0.0
      %v2680 = vsel %vm2454, %v2392, 0.0
      %v2681 = vsel %vm2455, %v2393, 0.0
      %v2682 = vsel %vm2456, %v2394, 0.0
      %v2683 = vsel %vm2457, %v2395, 0.0
      %v2684 = vsel %vm2458, %v2396, 0.0
      %v2685 = vsel %vm2459, %v2397, 0.0
      %v2686 = vsel %vm2460, %v2398, 0.0
      %v2687 = vsel %vm2461, %v2399, 0.0
      %v2688 = vsel %vm2462, %v2400, 0.0
      %v2689 = vsel %vm2463, %v2401, 0.0
      %v2690 = vsel %vm2464, %v2402, 0.0
      %v2691 = vsel %vm2465, %v2403, 0.0
      %v2692 = vsel %vm2466, %v2404, 0.0
      %v2693 = vsel %vm2467, %v2405, 0.0
      %v2694 = vsel %vm2468, %v2406, 0.0
      %v2695 = vsel %vm2469, %v2407, 0.0
      %v2696 = vsel %vm2470, %v2408, 0.0
      %v2697 = vsel %vm2471, %v2409, 0.0
      %v2698 = vsel %vm2472, %v2410, 0.0
      %v2699 = vsel %vm2473, %v2411, 0.0
      %v2700 = vsel %vm2474, %v2412, 0.0
      %v2701 = vsel %vm2475, %v2413, 0.0
      %v2702 = vsel %vm2476, %v2414, 0.0
      %v2703 = vsel %vm2477, %v2415, 0.0
      %v2704 = vsel %vm2478, %v2416, 0.0
      %v2705 = vsel %vm2479, %v2417, 0.0
      %v2706 = vsel %vm2480, %v2418, 0.0
      %v2707 = vsel %vm2481, %v2419, 0.0
      %v2708 = vsel %vm2482, %v2420, 0.0
      %v2709 = vsel %vm2483, %v2677, 0.0
      %v2710 = vsel %vm2484, %v2678, 0.0
      %v2711 = vld [vmem:[#allocation3 + $0x108] sm:$0xff]
      %v2712 = vld [vmem:[#allocation3 + $0x110] sm:$0xff]
      %v2713 = vld [vmem:[#allocation3 + $0x109] sm:$0xff]
      %v2714 = vld [vmem:[#allocation3 + $0x111] sm:$0xff]
      %v2715 = vsel %vm2613, %v2551, 0.0
      %v2716 = vsel %vm2614, %v2552, 0.0
      %v2717 = vsel %vm2615, %v2553, 0.0
      %v2718 = vsel %vm2616, %v2554, 0.0
      %v2719 = vsel %vm2617, %v2555, 0.0
      %v2720 = vsel %vm2618, %v2556, 0.0
      %v2721 = vsel %vm2619, %v2557, 0.0
      %v2722 = vsel %vm2620, %v2558, 0.0
      %v2723 = vsel %vm2621, %v2559, 0.0
      %v2724 = vsel %vm2622, %v2560, 0.0
      %v2725 = vsel %vm2623, %v2561, 0.0
      %v2726 = vsel %vm2624, %v2562, 0.0
      %v2727 = vsel %vm2625, %v2563, 0.0
      %v2728 = vsel %vm2626, %v2564, 0.0
      %v2729 = vsel %vm2627, %v2565, 0.0
      %v2730 = vsel %vm2628, %v2566, 0.0
      %v2731 = vsel %vm2629, %v2567, 0.0
      %v2732 = vsel %vm2630, %v2568, 0.0
      %v2733 = vsel %vm2631, %v2569, 0.0
      %v2734 = vsel %vm2632, %v2570, 0.0
      %v2735 = vsel %vm2633, %v2571, 0.0
      %v2736 = vsel %vm2634, %v2572, 0.0
      %v2737 = vsel %vm2635, %v2573, 0.0
      %v2738 = vsel %vm2636, %v2574, 0.0
      %v2739 = vsel %vm2637, %v2575, 0.0
      %v2740 = vsel %vm2638, %v2576, 0.0
      %v2741 = vsel %vm2639, %v2577, 0.0
      %v2742 = vsel %vm2640, %v2578, 0.0
      %v2743 = vsel %vm2641, %v2579, 0.0
      %v2744 = vsel %vm2642, %v2580, 0.0
      %v2745 = vsel %vm2643, %v2713, 0.0
      %v2746 = vsel %vm2644, %v2714, 0.0
      %v2747 = vld [vmem:[#allocation3 + $0x117] sm:$0xff]
      %v2748 = vld [vmem:[#allocation3 + $0x11f] sm:$0xff]
      %v2749 = vsel %vm2453, %v2393, 0.0
      %v2750 = vsel %vm2454, %v2394, 0.0
      %v2751 = vsel %vm2455, %v2395, 0.0
      %v2752 = vsel %vm2456, %v2396, 0.0
      %v2753 = vsel %vm2457, %v2397, 0.0
      %v2754 = vsel %vm2458, %v2398, 0.0
      %v2755 = vsel %vm2459, %v2399, 0.0
      %v2756 = vsel %vm2460, %v2400, 0.0
      %v2757 = vsel %vm2461, %v2401, 0.0
      %v2758 = vsel %vm2462, %v2402, 0.0
      %v2759 = vsel %vm2463, %v2403, 0.0
      %v2760 = vsel %vm2464, %v2404, 0.0
      %v2761 = vsel %vm2465, %v2405, 0.0
      %v2762 = vsel %vm2466, %v2406, 0.0
      %v2763 = vsel %vm2467, %v2407, 0.0
      %v2764 = vsel %vm2468, %v2408, 0.0
      %v2765 = vsel %vm2469, %v2409, 0.0
      %v2766 = vsel %vm2470, %v2410, 0.0
      %v2767 = vsel %vm2471, %v2411, 0.0
      %v2768 = vsel %vm2472, %v2412, 0.0
      %v2769 = vsel %vm2473, %v2413, 0.0
      %v2770 = vsel %vm2474, %v2414, 0.0
      %v2771 = vsel %vm2475, %v2415, 0.0
      %v2772 = vsel %vm2476, %v2416, 0.0
      %v2773 = vsel %vm2477, %v2417, 0.0
      %v2774 = vsel %vm2478, %v2418, 0.0
      %v2775 = vsel %vm2479, %v2419, 0.0
      %v2776 = vsel %vm2480, %v2420, 0.0
      %v2777 = vsel %vm2481, %v2677, 0.0
      %v2778 = vsel %vm2482, %v2678, 0.0
      %v2779 = vsel %vm2483, %v2747, 0.0
      %v2780 = vsel %vm2484, %v2748, 0.0
      %v2781 = vld [vmem:[#allocation3 + $0x118] sm:$0xff]
      %v2782 = vld [vmem:[#allocation3 + $0x120] sm:$0xff]
      %v2783 = vld [vmem:[#allocation3 + $0x119] sm:$0xff]
      %v2784 = vld [vmem:[#allocation3 + $0x121] sm:$0xff]
      %v2785 = vsel %vm2613, %v2553, 0.0
      %v2786 = vsel %vm2614, %v2554, 0.0
      %v2787 = vsel %vm2615, %v2555, 0.0
      %v2788 = vsel %vm2616, %v2556, 0.0
      %v2789 = vsel %vm2617, %v2557, 0.0
      %v2790 = vsel %vm2618, %v2558, 0.0
      %v2791 = vsel %vm2619, %v2559, 0.0
      %v2792 = vsel %vm2620, %v2560, 0.0
      %v2793 = vsel %vm2621, %v2561, 0.0
      %v2794 = vsel %vm2622, %v2562, 0.0
      %v2795 = vsel %vm2623, %v2563, 0.0
      %v2796 = vsel %vm2624, %v2564, 0.0
      %v2797 = vsel %vm2625, %v2565, 0.0
      %v2798 = vsel %vm2626, %v2566, 0.0
      %v2799 = vsel %vm2627, %v2567, 0.0
      %v2800 = vsel %vm2628, %v2568, 0.0
      %v2801 = vsel %vm2629, %v2569, 0.0
      %v2802 = vsel %vm2630, %v2570, 0.0
      %v2803 = vsel %vm2631, %v2571, 0.0
      %v2804 = vsel %vm2632, %v2572, 0.0
      %v2805 = vsel %vm2633, %v2573, 0.0
      %v2806 = vsel %vm2634, %v2574, 0.0
      %v2807 = vsel %vm2635, %v2575, 0.0
      %v2808 = vsel %vm2636, %v2576, 0.0
      %v2809 = vsel %vm2637, %v2577, 0.0
      %v2810 = vsel %vm2638, %v2578, 0.0
      %v2811 = vsel %vm2639, %v2579, 0.0
      %v2812 = vsel %vm2640, %v2580, 0.0
      %v2813 = vsel %vm2641, %v2713, 0.0
      %v2814 = vsel %vm2642, %v2714, 0.0
      %v2815 = vsel %vm2643, %v2783, 0.0
      %v2816 = vsel %vm2644, %v2784, 0.0
      %2849 = vrot.lane.b32.xlu0 %v2517, 16
      %v2850 = vpop.permute.xlu0 %2849
      %2851 = vrot.lane.b32.xlu0 %v2518, 16
      %v2852 = vpop.permute.xlu0 %2851
      %2853 = vrot.lane.b32.xlu0 %v2519, 16
      %v2854 = vpop.permute.xlu0 %2853
      %2855 = vrot.lane.b32.xlu0 %v2520, 16
      %v2856 = vpop.permute.xlu0 %2855
      %2857 = vrot.lane.b32.xlu0 %v2521, 16
      %v2858 = vpop.permute.xlu0 %2857
      %2859 = vrot.lane.b32.xlu0 %v2522, 16
      %v2860 = vpop.permute.xlu0 %2859
      %2861 = vrot.lane.b32.xlu0 %v2523, 16
      %v2862 = vpop.permute.xlu0 %2861
      %2863 = vrot.lane.b32.xlu0 %v2524, 16
      %v2864 = vpop.permute.xlu0 %2863
      %2865 = vrot.lane.b32.xlu0 %v2525, 16
      %v2866 = vpop.permute.xlu0 %2865
      %2867 = vrot.lane.b32.xlu0 %v2526, 16
      %v2868 = vpop.permute.xlu0 %2867
      %2869 = vrot.lane.b32.xlu0 %v2527, 16
      %v2870 = vpop.permute.xlu0 %2869
      %2871 = vrot.lane.b32.xlu0 %v2528, 16
      %v2872 = vpop.permute.xlu0 %2871
      %2873 = vrot.lane.b32.xlu0 %v2529, 16
      %v2874 = vpop.permute.xlu0 %2873
      %2875 = vrot.lane.b32.xlu0 %v2530, 16
      %v2876 = vpop.permute.xlu0 %2875
      %2877 = vrot.lane.b32.xlu0 %v2531, 16
      %v2878 = vpop.permute.xlu0 %2877
      %2879 = vrot.lane.b32.xlu0 %v2532, 16
      %v2880 = vpop.permute.xlu0 %2879
      %2881 = vrot.lane.b32.xlu0 %v2533, 16
      %v2882 = vpop.permute.xlu0 %2881
      %2883 = vrot.lane.b32.xlu0 %v2534, 16
      %v2884 = vpop.permute.xlu0 %2883
      %2885 = vrot.lane.b32.xlu0 %v2535, 16
      %v2886 = vpop.permute.xlu0 %2885
      %2887 = vrot.lane.b32.xlu0 %v2536, 16
      %v2888 = vpop.permute.xlu0 %2887
      %2889 = vrot.lane.b32.xlu0 %v2537, 16
      %v2890 = vpop.permute.xlu0 %2889
      %2891 = vrot.lane.b32.xlu0 %v2538, 16
      %v2892 = vpop.permute.xlu0 %2891
      %2893 = vrot.lane.b32.xlu0 %v2539, 16
      %v2894 = vpop.permute.xlu0 %2893
      %2895 = vrot.lane.b32.xlu0 %v2540, 16
      %v2896 = vpop.permute.xlu0 %2895
      %2897 = vrot.lane.b32.xlu0 %v2541, 16
      %v2898 = vpop.permute.xlu0 %2897
      %2899 = vrot.lane.b32.xlu0 %v2542, 16
      %v2900 = vpop.permute.xlu0 %2899
      %2901 = vrot.lane.b32.xlu0 %v2543, 16
      %v2902 = vpop.permute.xlu0 %2901
      %2903 = vrot.lane.b32.xlu0 %v2544, 16
      %v2904 = vpop.permute.xlu0 %2903
      %2905 = vrot.lane.b32.xlu0 %v2545, 16
      %v2906 = vpop.permute.xlu0 %2905
      %2907 = vrot.lane.b32.xlu0 %v2546, 16
      %v2908 = vpop.permute.xlu0 %2907
      %2909 = vrot.lane.b32.xlu0 %v2547, 16
      %v2910 = vpop.permute.xlu0 %2909
      %2911 = vrot.lane.b32.xlu0 %v2548, 16
      %v2912 = vpop.permute.xlu0 %2911
      %2977 = vrot.lane.b32.xlu0 %v2645, 32
      %v2978 = vpop.permute.xlu0 %2977
      %2979 = vrot.lane.b32.xlu0 %v2646, 32
      %v2980 = vpop.permute.xlu0 %2979
      %2981 = vrot.lane.b32.xlu0 %v2647, 32
      %v2982 = vpop.permute.xlu0 %2981
      %2983 = vrot.lane.b32.xlu0 %v2648, 32
      %v2984 = vpop.permute.xlu0 %2983
      %2985 = vrot.lane.b32.xlu0 %v2649, 32
      %v2986 = vpop.permute.xlu0 %2985
      %2987 = vrot.lane.b32.xlu0 %v2650, 32
      %v2988 = vpop.permute.xlu0 %2987
      %2989 = vrot.lane.b32.xlu0 %v2651, 32
      %v2990 = vpop.permute.xlu0 %2989
      %2991 = vrot.lane.b32.xlu0 %v2652, 32
      %v2992 = vpop.permute.xlu0 %2991
      %2993 = vrot.lane.b32.xlu0 %v2653, 32
      %v2994 = vpop.permute.xlu0 %2993
      %2995 = vrot.lane.b32.xlu0 %v2654, 32
      %v2996 = vpop.permute.xlu0 %2995
      %2997 = vrot.lane.b32.xlu0 %v2655, 32
      %v2998 = vpop.permute.xlu0 %2997
      %2999 = vrot.lane.b32.xlu0 %v2656, 32
      %v3000 = vpop.permute.xlu0 %2999
      %3001 = vrot.lane.b32.xlu0 %v2657, 32
      %v3002 = vpop.permute.xlu0 %3001
      %3003 = vrot.lane.b32.xlu0 %v2658, 32
      %v3004 = vpop.permute.xlu0 %3003
      %3005 = vrot.lane.b32.xlu0 %v2659, 32
      %v3006 = vpop.permute.xlu0 %3005
      %3007 = vrot.lane.b32.xlu0 %v2660, 32
      %v3008 = vpop.permute.xlu0 %3007
      %3009 = vrot.lane.b32.xlu0 %v2661, 32
      %v3010 = vpop.permute.xlu0 %3009
      %3011 = vrot.lane.b32.xlu0 %v2662, 32
      %v3012 = vpop.permute.xlu0 %3011
      %3013 = vrot.lane.b32.xlu0 %v2663, 32
      %v3014 = vpop.permute.xlu0 %3013
      %3015 = vrot.lane.b32.xlu0 %v2664, 32
      %v3016 = vpop.permute.xlu0 %3015
      %3017 = vrot.lane.b32.xlu0 %v2665, 32
      %v3018 = vpop.permute.xlu0 %3017
      %3019 = vrot.lane.b32.xlu0 %v2666, 32
      %v3020 = vpop.permute.xlu0 %3019
      %3021 = vrot.lane.b32.xlu0 %v2667, 32
      %v3022 = vpop.permute.xlu0 %3021
      %3023 = vrot.lane.b32.xlu0 %v2668, 32
      %v3024 = vpop.permute.xlu0 %3023
      %3025 = vrot.lane.b32.xlu0 %v2669, 32
      %v3026 = vpop.permute.xlu0 %3025
      %3027 = vrot.lane.b32.xlu0 %v2670, 32
      %v3028 = vpop.permute.xlu0 %3027
      %3029 = vrot.lane.b32.xlu0 %v2671, 32
      %v3030 = vpop.permute.xlu0 %3029
      %3031 = vrot.lane.b32.xlu0 %v2672, 32
      %v3032 = vpop.permute.xlu0 %3031
      %3033 = vrot.lane.b32.xlu0 %v2673, 32
      %v3034 = vpop.permute.xlu0 %3033
      %3035 = vrot.lane.b32.xlu0 %v2674, 32
      %v3036 = vpop.permute.xlu0 %3035
      %3037 = vrot.lane.b32.xlu0 %v2675, 32
      %v3038 = vpop.permute.xlu0 %3037
      %3039 = vrot.lane.b32.xlu0 %v2676, 32
      %v3040 = vpop.permute.xlu0 %3039
      %3105 = vrot.lane.b32.xlu0 %v2679, 48
      %v3106 = vpop.permute.xlu0 %3105
      %3107 = vrot.lane.b32.xlu0 %v2680, 48
      %v3108 = vpop.permute.xlu0 %3107
      %3109 = vrot.lane.b32.xlu0 %v2681, 48
      %v3110 = vpop.permute.xlu0 %3109
      %3111 = vrot.lane.b32.xlu0 %v2682, 48
      %v3112 = vpop.permute.xlu0 %3111
      %3113 = vrot.lane.b32.xlu0 %v2683, 48
      %v3114 = vpop.permute.xlu0 %3113
      %3115 = vrot.lane.b32.xlu0 %v2684, 48
      %v3116 = vpop.permute.xlu0 %3115
      %3117 = vrot.lane.b32.xlu0 %v2685, 48
      %v3118 = vpop.permute.xlu0 %3117
      %3119 = vrot.lane.b32.xlu0 %v2686, 48
      %v3120 = vpop.permute.xlu0 %3119
      %3121 = vrot.lane.b32.xlu0 %v2687, 48
      %v3122 = vpop.permute.xlu0 %3121
      %3123 = vrot.lane.b32.xlu0 %v2688, 48
      %v3124 = vpop.permute.xlu0 %3123
      %3125 = vrot.lane.b32.xlu0 %v2689, 48
      %v3126 = vpop.permute.xlu0 %3125
      %3127 = vrot.lane.b32.xlu0 %v2690, 48
      %v3128 = vpop.permute.xlu0 %3127
      %3129 = vrot.lane.b32.xlu0 %v2691, 48
      %v3130 = vpop.permute.xlu0 %3129
      %3131 = vrot.lane.b32.xlu0 %v2692, 48
      %v3132 = vpop.permute.xlu0 %3131
      %3133 = vrot.lane.b32.xlu0 %v2693, 48
      %v3134 = vpop.permute.xlu0 %3133
      %3135 = vrot.lane.b32.xlu0 %v2694, 48
      %v3136 = vpop.permute.xlu0 %3135
      %3137 = vrot.lane.b32.xlu0 %v2695, 48
      %v3138 = vpop.permute.xlu0 %3137
      %3139 = vrot.lane.b32.xlu0 %v2696, 48
      %v3140 = vpop.permute.xlu0 %3139
      %3141 = vrot.lane.b32.xlu0 %v2697, 48
      %v3142 = vpop.permute.xlu0 %3141
      %3143 = vrot.lane.b32.xlu0 %v2698, 48
      %v3144 = vpop.permute.xlu0 %3143
      %3145 = vrot.lane.b32.xlu0 %v2699, 48
      %v3146 = vpop.permute.xlu0 %3145
      %3147 = vrot.lane.b32.xlu0 %v2700, 48
      %v3148 = vpop.permute.xlu0 %3147
      %3149 = vrot.lane.b32.xlu0 %v2701, 48
      %v3150 = vpop.permute.xlu0 %3149
      %3151 = vrot.lane.b32.xlu0 %v2702, 48
      %v3152 = vpop.permute.xlu0 %3151
      %3153 = vrot.lane.b32.xlu0 %v2703, 48
      %v3154 = vpop.permute.xlu0 %3153
      %3155 = vrot.lane.b32.xlu0 %v2704, 48
      %v3156 = vpop.permute.xlu0 %3155
      %3157 = vrot.lane.b32.xlu0 %v2705, 48
      %v3158 = vpop.permute.xlu0 %3157
      %3159 = vrot.lane.b32.xlu0 %v2706, 48
      %v3160 = vpop.permute.xlu0 %3159
      %3161 = vrot.lane.b32.xlu0 %v2707, 48
      %v3162 = vpop.permute.xlu0 %3161
      %3163 = vrot.lane.b32.xlu0 %v2708, 48
      %v3164 = vpop.permute.xlu0 %3163
      %3165 = vrot.lane.b32.xlu0 %v2709, 48
      %v3166 = vpop.permute.xlu0 %3165
      %3167 = vrot.lane.b32.xlu0 %v2710, 48
      %v3168 = vpop.permute.xlu0 %3167
      %3203 = vrot.lane.b32.xlu0 %v2519, 64
      %v3204 = vpop.permute.xlu0 %3203
      %3205 = vrot.lane.b32.xlu0 %v2520, 64
      %v3206 = vpop.permute.xlu0 %3205
      %3207 = vrot.lane.b32.xlu0 %v2521, 64
      %v3208 = vpop.permute.xlu0 %3207
      %3209 = vrot.lane.b32.xlu0 %v2522, 64
      %v3210 = vpop.permute.xlu0 %3209
      %3211 = vrot.lane.b32.xlu0 %v2523, 64
      %v3212 = vpop.permute.xlu0 %3211
      %3213 = vrot.lane.b32.xlu0 %v2524, 64
      %v3214 = vpop.permute.xlu0 %3213
      %3215 = vrot.lane.b32.xlu0 %v2525, 64
      %v3216 = vpop.permute.xlu0 %3215
      %3217 = vrot.lane.b32.xlu0 %v2526, 64
      %v3218 = vpop.permute.xlu0 %3217
      %3219 = vrot.lane.b32.xlu0 %v2527, 64
      %v3220 = vpop.permute.xlu0 %3219
      %3221 = vrot.lane.b32.xlu0 %v2528, 64
      %v3222 = vpop.permute.xlu0 %3221
      %3223 = vrot.lane.b32.xlu0 %v2529, 64
      %v3224 = vpop.permute.xlu0 %3223
      %3225 = vrot.lane.b32.xlu0 %v2530, 64
      %v3226 = vpop.permute.xlu0 %3225
      %3227 = vrot.lane.b32.xlu0 %v2531, 64
      %v3228 = vpop.permute.xlu0 %3227
      %3229 = vrot.lane.b32.xlu0 %v2532, 64
      %v3230 = vpop.permute.xlu0 %3229
      %3231 = vrot.lane.b32.xlu0 %v2533, 64
      %v3232 = vpop.permute.xlu0 %3231
      %3233 = vrot.lane.b32.xlu0 %v2534, 64
      %v3234 = vpop.permute.xlu0 %3233
      %3235 = vrot.lane.b32.xlu0 %v2535, 64
      %v3236 = vpop.permute.xlu0 %3235
      %3237 = vrot.lane.b32.xlu0 %v2536, 64
      %v3238 = vpop.permute.xlu0 %3237
      %3239 = vrot.lane.b32.xlu0 %v2537, 64
      %v3240 = vpop.permute.xlu0 %3239
      %3241 = vrot.lane.b32.xlu0 %v2538, 64
      %v3242 = vpop.permute.xlu0 %3241
      %3243 = vrot.lane.b32.xlu0 %v2539, 64
      %v3244 = vpop.permute.xlu0 %3243
      %3245 = vrot.lane.b32.xlu0 %v2540, 64
      %v3246 = vpop.permute.xlu0 %3245
      %3247 = vrot.lane.b32.xlu0 %v2541, 64
      %v3248 = vpop.permute.xlu0 %3247
      %3249 = vrot.lane.b32.xlu0 %v2542, 64
      %v3250 = vpop.permute.xlu0 %3249
      %3251 = vrot.lane.b32.xlu0 %v2543, 64
      %v3252 = vpop.permute.xlu0 %3251
      %3253 = vrot.lane.b32.xlu0 %v2544, 64
      %v3254 = vpop.permute.xlu0 %3253
      %3255 = vrot.lane.b32.xlu0 %v2545, 64
      %v3256 = vpop.permute.xlu0 %3255
      %3257 = vrot.lane.b32.xlu0 %v2546, 64
      %v3258 = vpop.permute.xlu0 %3257
      %3259 = vrot.lane.b32.xlu0 %v2547, 64
      %v3260 = vpop.permute.xlu0 %3259
      %3261 = vrot.lane.b32.xlu0 %v2548, 64
      %v3262 = vpop.permute.xlu0 %3261
      %3263 = vrot.lane.b32.xlu0 %v2711, 64
      %v3264 = vpop.permute.xlu0 %3263
      %3265 = vrot.lane.b32.xlu0 %v2712, 64
      %v3266 = vpop.permute.xlu0 %3265
      %3331 = vrot.lane.b32.xlu0 %v2715, 80
      %v3332 = vpop.permute.xlu0 %3331
      %3333 = vrot.lane.b32.xlu0 %v2716, 80
      %v3334 = vpop.permute.xlu0 %3333
      %3335 = vrot.lane.b32.xlu0 %v2717, 80
      %v3336 = vpop.permute.xlu0 %3335
      %3337 = vrot.lane.b32.xlu0 %v2718, 80
      %v3338 = vpop.permute.xlu0 %3337
      %3339 = vrot.lane.b32.xlu0 %v2719, 80
      %v3340 = vpop.permute.xlu0 %3339
      %3341 = vrot.lane.b32.xlu0 %v2720, 80
      %v3342 = vpop.permute.xlu0 %3341
      %3343 = vrot.lane.b32.xlu0 %v2721, 80
      %v3344 = vpop.permute.xlu0 %3343
      %3345 = vrot.lane.b32.xlu0 %v2722, 80
      %v3346 = vpop.permute.xlu0 %3345
      %3347 = vrot.lane.b32.xlu0 %v2723, 80
      %v3348 = vpop.permute.xlu0 %3347
      %3349 = vrot.lane.b32.xlu0 %v2724, 80
      %v3350 = vpop.permute.xlu0 %3349
      %3351 = vrot.lane.b32.xlu0 %v2725, 80
      %v3352 = vpop.permute.xlu0 %3351
      %3353 = vrot.lane.b32.xlu0 %v2726, 80
      %v3354 = vpop.permute.xlu0 %3353
      %3355 = vrot.lane.b32.xlu0 %v2727, 80
      %v3356 = vpop.permute.xlu0 %3355
      %3357 = vrot.lane.b32.xlu0 %v2728, 80
      %v3358 = vpop.permute.xlu0 %3357
      %3359 = vrot.lane.b32.xlu0 %v2729, 80
      %v3360 = vpop.permute.xlu0 %3359
      %3361 = vrot.lane.b32.xlu0 %v2730, 80
      %v3362 = vpop.permute.xlu0 %3361
      %3363 = vrot.lane.b32.xlu0 %v2731, 80
      %v3364 = vpop.permute.xlu0 %3363
      %3365 = vrot.lane.b32.xlu0 %v2732, 80
      %v3366 = vpop.permute.xlu0 %3365
      %3367 = vrot.lane.b32.xlu0 %v2733, 80
      %v3368 = vpop.permute.xlu0 %3367
      %3369 = vrot.lane.b32.xlu0 %v2734, 80
      %v3370 = vpop.permute.xlu0 %3369
      %3371 = vrot.lane.b32.xlu0 %v2735, 80
      %v3372 = vpop.permute.xlu0 %3371
      %3373 = vrot.lane.b32.xlu0 %v2736, 80
      %v3374 = vpop.permute.xlu0 %3373
      %3375 = vrot.lane.b32.xlu0 %v2737, 80
      %v3376 = vpop.permute.xlu0 %3375
      %3377 = vrot.lane.b32.xlu0 %v2738, 80
      %v3378 = vpop.permute.xlu0 %3377
      %3379 = vrot.lane.b32.xlu0 %v2739, 80
      %v3380 = vpop.permute.xlu0 %3379
      %3381 = vrot.lane.b32.xlu0 %v2740, 80
      %v3382 = vpop.permute.xlu0 %3381
      %3383 = vrot.lane.b32.xlu0 %v2741, 80
      %v3384 = vpop.permute.xlu0 %3383
      %3385 = vrot.lane.b32.xlu0 %v2742, 80
      %v3386 = vpop.permute.xlu0 %3385
      %3387 = vrot.lane.b32.xlu0 %v2743, 80
      %v3388 = vpop.permute.xlu0 %3387
      %3389 = vrot.lane.b32.xlu0 %v2744, 80
      %v3390 = vpop.permute.xlu0 %3389
      %3391 = vrot.lane.b32.xlu0 %v2745, 80
      %v3392 = vpop.permute.xlu0 %3391
      %3393 = vrot.lane.b32.xlu0 %v2746, 80
      %v3394 = vpop.permute.xlu0 %3393
      %3459 = vrot.lane.b32.xlu0 %v2749, 96
      %v3460 = vpop.permute.xlu0 %3459
      %3461 = vrot.lane.b32.xlu0 %v2750, 96
      %v3462 = vpop.permute.xlu0 %3461
      %3463 = vrot.lane.b32.xlu0 %v2751, 96
      %v3464 = vpop.permute.xlu0 %3463
      %3465 = vrot.lane.b32.xlu0 %v2752, 96
      %v3466 = vpop.permute.xlu0 %3465
      %3467 = vrot.lane.b32.xlu0 %v2753, 96
      %v3468 = vpop.permute.xlu0 %3467
      %3469 = vrot.lane.b32.xlu0 %v2754, 96
      %v3470 = vpop.permute.xlu0 %3469
      %3471 = vrot.lane.b32.xlu0 %v2755, 96
      %v3472 = vpop.permute.xlu0 %3471
      %3473 = vrot.lane.b32.xlu0 %v2756, 96
      %v3474 = vpop.permute.xlu0 %3473
      %3475 = vrot.lane.b32.xlu0 %v2757, 96
      %v3476 = vpop.permute.xlu0 %3475
      %3477 = vrot.lane.b32.xlu0 %v2758, 96
      %v3478 = vpop.permute.xlu0 %3477
      %3479 = vrot.lane.b32.xlu0 %v2759, 96
      %v3480 = vpop.permute.xlu0 %3479
      %3481 = vrot.lane.b32.xlu0 %v2760, 96
      %v3482 = vpop.permute.xlu0 %3481
      %3483 = vrot.lane.b32.xlu0 %v2761, 96
      %v3484 = vpop.permute.xlu0 %3483
      %3485 = vrot.lane.b32.xlu0 %v2762, 96
      %v3486 = vpop.permute.xlu0 %3485
      %3487 = vrot.lane.b32.xlu0 %v2763, 96
      %v3488 = vpop.permute.xlu0 %3487
      %3489 = vrot.lane.b32.xlu0 %v2764, 96
      %v3490 = vpop.permute.xlu0 %3489
      %3491 = vrot.lane.b32.xlu0 %v2765, 96
      %v3492 = vpop.permute.xlu0 %3491
      %3493 = vrot.lane.b32.xlu0 %v2766, 96
      %v3494 = vpop.permute.xlu0 %3493
      %3495 = vrot.lane.b32.xlu0 %v2767, 96
      %v3496 = vpop.permute.xlu0 %3495
      %3497 = vrot.lane.b32.xlu0 %v2768, 96
      %v3498 = vpop.permute.xlu0 %3497
      %3499 = vrot.lane.b32.xlu0 %v2769, 96
      %v3500 = vpop.permute.xlu0 %3499
      %3501 = vrot.lane.b32.xlu0 %v2770, 96
      %v3502 = vpop.permute.xlu0 %3501
      %3503 = vrot.lane.b32.xlu0 %v2771, 96
      %v3504 = vpop.permute.xlu0 %3503
      %3505 = vrot.lane.b32.xlu0 %v2772, 96
      %v3506 = vpop.permute.xlu0 %3505
      %3507 = vrot.lane.b32.xlu0 %v2773, 96
      %v3508 = vpop.permute.xlu0 %3507
      %3509 = vrot.lane.b32.xlu0 %v2774, 96
      %v3510 = vpop.permute.xlu0 %3509
      %3511 = vrot.lane.b32.xlu0 %v2775, 96
      %v3512 = vpop.permute.xlu0 %3511
      %3513 = vrot.lane.b32.xlu0 %v2776, 96
      %v3514 = vpop.permute.xlu0 %3513
      %3515 = vrot.lane.b32.xlu0 %v2777, 96
      %v3516 = vpop.permute.xlu0 %3515
      %3517 = vrot.lane.b32.xlu0 %v2778, 96
      %v3518 = vpop.permute.xlu0 %3517
      %3519 = vrot.lane.b32.xlu0 %v2779, 96
      %v3520 = vpop.permute.xlu0 %3519
      %3521 = vrot.lane.b32.xlu0 %v2780, 96
      %v3522 = vpop.permute.xlu0 %3521
      %3557 = vrot.lane.b32.xlu0 %v2521, 112
      %v3558 = vpop.permute.xlu0 %3557
      %3559 = vrot.lane.b32.xlu0 %v2522, 112
      %v3560 = vpop.permute.xlu0 %3559
      %3561 = vrot.lane.b32.xlu0 %v2523, 112
      %v3562 = vpop.permute.xlu0 %3561
      %3563 = vrot.lane.b32.xlu0 %v2524, 112
      %v3564 = vpop.permute.xlu0 %3563
      %3565 = vrot.lane.b32.xlu0 %v2525, 112
      %v3566 = vpop.permute.xlu0 %3565
      %3567 = vrot.lane.b32.xlu0 %v2526, 112
      %v3568 = vpop.permute.xlu0 %3567
      %3569 = vrot.lane.b32.xlu0 %v2527, 112
      %v3570 = vpop.permute.xlu0 %3569
      %3571 = vrot.lane.b32.xlu0 %v2528, 112
      %v3572 = vpop.permute.xlu0 %3571
      %3573 = vrot.lane.b32.xlu0 %v2529, 112
      %v3574 = vpop.permute.xlu0 %3573
      %3575 = vrot.lane.b32.xlu0 %v2530, 112
      %v3576 = vpop.permute.xlu0 %3575
      %3577 = vrot.lane.b32.xlu0 %v2531, 112
      %v3578 = vpop.permute.xlu0 %3577
      %3579 = vrot.lane.b32.xlu0 %v2532, 112
      %v3580 = vpop.permute.xlu0 %3579
      %3581 = vrot.lane.b32.xlu0 %v2533, 112
      %v3582 = vpop.permute.xlu0 %3581
      %3583 = vrot.lane.b32.xlu0 %v2534, 112
      %v3584 = vpop.permute.xlu0 %3583
      %3585 = vrot.lane.b32.xlu0 %v2535, 112
      %v3586 = vpop.permute.xlu0 %3585
      %3587 = vrot.lane.b32.xlu0 %v2536, 112
      %v3588 = vpop.permute.xlu0 %3587
      %3589 = vrot.lane.b32.xlu0 %v2537, 112
      %v3590 = vpop.permute.xlu0 %3589
      %3591 = vrot.lane.b32.xlu0 %v2538, 112
      %v3592 = vpop.permute.xlu0 %3591
      %3593 = vrot.lane.b32.xlu0 %v2539, 112
      %v3594 = vpop.permute.xlu0 %3593
      %3595 = vrot.lane.b32.xlu0 %v2540, 112
      %v3596 = vpop.permute.xlu0 %3595
      %3597 = vrot.lane.b32.xlu0 %v2541, 112
      %v3598 = vpop.permute.xlu0 %3597
      %3599 = vrot.lane.b32.xlu0 %v2542, 112
      %v3600 = vpop.permute.xlu0 %3599
      %3601 = vrot.lane.b32.xlu0 %v2543, 112
      %v3602 = vpop.permute.xlu0 %3601
      %3603 = vrot.lane.b32.xlu0 %v2544, 112
      %v3604 = vpop.permute.xlu0 %3603
      %3605 = vrot.lane.b32.xlu0 %v2545, 112
      %v3606 = vpop.permute.xlu0 %3605
      %3607 = vrot.lane.b32.xlu0 %v2546, 112
      %v3608 = vpop.permute.xlu0 %3607
      %3609 = vrot.lane.b32.xlu0 %v2547, 112
      %v3610 = vpop.permute.xlu0 %3609
      %3611 = vrot.lane.b32.xlu0 %v2548, 112
      %v3612 = vpop.permute.xlu0 %3611
      %3613 = vrot.lane.b32.xlu0 %v2711, 112
      %v3614 = vpop.permute.xlu0 %3613
      %3615 = vrot.lane.b32.xlu0 %v2712, 112
      %v3616 = vpop.permute.xlu0 %3615
      %3617 = vrot.lane.b32.xlu0 %v2781, 112
      %v3618 = vpop.permute.xlu0 %3617
      %3619 = vrot.lane.b32.xlu0 %v2782, 112
      %v3620 = vpop.permute.xlu0 %3619
      %v3653 = vsel %vm1646, %v2485, %v2850
      %v3654 = vsel %vm1646, %v2486, %v2852
      %v3655 = vsel %vm1646, %v2487, %v2854
      %v3656 = vsel %vm1646, %v2488, %v2856
      %v3657 = vsel %vm1646, %v2489, %v2858
      %v3658 = vsel %vm1646, %v2490, %v2860
      %v3659 = vsel %vm1646, %v2491, %v2862
      %v3660 = vsel %vm1646, %v2492, %v2864
      %v3661 = vsel %vm1646, %v2493, %v2866
      %v3662 = vsel %vm1646, %v2494, %v2868
      %v3663 = vsel %vm1646, %v2495, %v2870
      %v3664 = vsel %vm1646, %v2496, %v2872
      %v3665 = vsel %vm1646, %v2497, %v2874
      %v3666 = vsel %vm1646, %v2498, %v2876
      %v3667 = vsel %vm1646, %v2499, %v2878
      %v3668 = vsel %vm1646, %v2500, %v2880
      %v3669 = vsel %vm1646, %v2501, %v2882
      %v3670 = vsel %vm1646, %v2502, %v2884
      %v3671 = vsel %vm1646, %v2503, %v2886
      %v3672 = vsel %vm1646, %v2504, %v2888
      %v3673 = vsel %vm1646, %v2505, %v2890
      %v3674 = vsel %vm1646, %v2506, %v2892
      %v3675 = vsel %vm1646, %v2507, %v2894
      %v3676 = vsel %vm1646, %v2508, %v2896
      %v3677 = vsel %vm1646, %v2509, %v2898
      %v3678 = vsel %vm1646, %v2510, %v2900
      %v3679 = vsel %vm1646, %v2511, %v2902
      %v3680 = vsel %vm1646, %v2512, %v2904
      %v3681 = vsel %vm1646, %v2513, %v2906
      %v3682 = vsel %vm1646, %v2514, %v2908
      %v3683 = vsel %vm1646, %v2515, %v2910
      %v3684 = vsel %vm1646, %v2516, %v2912
      %v3685 = vsel %vm364, %v3653, %v2978
      %v3686 = vsel %vm364, %v3654, %v2980
      %v3687 = vsel %vm364, %v3655, %v2982
      %v3688 = vsel %vm364, %v3656, %v2984
      %v3689 = vsel %vm364, %v3657, %v2986
      %v3690 = vsel %vm364, %v3658, %v2988
      %v3691 = vsel %vm364, %v3659, %v2990
      %v3692 = vsel %vm364, %v3660, %v2992
      %v3693 = vsel %vm364, %v3661, %v2994
      %v3694 = vsel %vm364, %v3662, %v2996
      %v3695 = vsel %vm364, %v3663, %v2998
      %v3696 = vsel %vm364, %v3664, %v3000
      %v3697 = vsel %vm364, %v3665, %v3002
      %v3698 = vsel %vm364, %v3666, %v3004
      %v3699 = vsel %vm364, %v3667, %v3006
      %v3700 = vsel %vm364, %v3668, %v3008
      %v3701 = vsel %vm364, %v3669, %v3010
      %v3702 = vsel %vm364, %v3670, %v3012
      %v3703 = vsel %vm364, %v3671, %v3014
      %v3704 = vsel %vm364, %v3672, %v3016
      %v3705 = vsel %vm364, %v3673, %v3018
      %v3706 = vsel %vm364, %v3674, %v3020
      %v3707 = vsel %vm364, %v3675, %v3022
      %v3708 = vsel %vm364, %v3676, %v3024
      %v3709 = vsel %vm364, %v3677, %v3026
      %v3710 = vsel %vm364, %v3678, %v3028
      %v3711 = vsel %vm364, %v3679, %v3030
      %v3712 = vsel %vm364, %v3680, %v3032
      %v3713 = vsel %vm364, %v3681, %v3034
      %v3714 = vsel %vm364, %v3682, %v3036
      %v3715 = vsel %vm364, %v3683, %v3038
      %v3716 = vsel %vm364, %v3684, %v3040
      %vm3717 = vcmask 392192
      %v3718 = vsel %vm3717, %v3685, %v3106
      %v3719 = vsel %vm3717, %v3686, %v3108
      %v3720 = vsel %vm3717, %v3687, %v3110
      %v3721 = vsel %vm3717, %v3688, %v3112
      %v3722 = vsel %vm3717, %v3689, %v3114
      %v3723 = vsel %vm3717, %v3690, %v3116
      %v3724 = vsel %vm3717, %v3691, %v3118
      %v3725 = vsel %vm3717, %v3692, %v3120
      %v3726 = vsel %vm3717, %v3693, %v3122
      %v3727 = vsel %vm3717, %v3694, %v3124
      %v3728 = vsel %vm3717, %v3695, %v3126
      %v3729 = vsel %vm3717, %v3696, %v3128
      %v3730 = vsel %vm3717, %v3697, %v3130
      %v3731 = vsel %vm3717, %v3698, %v3132
      %v3732 = vsel %vm3717, %v3699, %v3134
      %v3733 = vsel %vm3717, %v3700, %v3136
      %v3734 = vsel %vm3717, %v3701, %v3138
      %v3735 = vsel %vm3717, %v3702, %v3140
      %v3736 = vsel %vm3717, %v3703, %v3142
      %v3737 = vsel %vm3717, %v3704, %v3144
      %v3738 = vsel %vm3717, %v3705, %v3146
      %v3739 = vsel %vm3717, %v3706, %v3148
      %v3740 = vsel %vm3717, %v3707, %v3150
      %v3741 = vsel %vm3717, %v3708, %v3152
      %v3742 = vsel %vm3717, %v3709, %v3154
      %v3743 = vsel %vm3717, %v3710, %v3156
      %v3744 = vsel %vm3717, %v3711, %v3158
      %v3745 = vsel %vm3717, %v3712, %v3160
      %v3746 = vsel %vm3717, %v3713, %v3162
      %v3747 = vsel %vm3717, %v3714, %v3164
      %v3748 = vsel %vm3717, %v3715, %v3166
      %v3749 = vsel %vm3717, %v3716, %v3168
      %vm3750 = vcmask 523264
      %v3751 = vsel %vm3750, %v3718, %v3204
      %v3752 = vsel %vm3750, %v3719, %v3206
      %v3753 = vsel %vm3750, %v3720, %v3208
      %v3754 = vsel %vm3750, %v3721, %v3210
      %v3755 = vsel %vm3750, %v3722, %v3212
      %v3756 = vsel %vm3750, %v3723, %v3214
      %v3757 = vsel %vm3750, %v3724, %v3216
      %v3758 = vsel %vm3750, %v3725, %v3218
      %v3759 = vsel %vm3750, %v3726, %v3220
      %v3760 = vsel %vm3750, %v3727, %v3222
      %v3761 = vsel %vm3750, %v3728, %v3224
      %v3762 = vsel %vm3750, %v3729, %v3226
      %v3763 = vsel %vm3750, %v3730, %v3228
      %v3764 = vsel %vm3750, %v3731, %v3230
      %v3765 = vsel %vm3750, %v3732, %v3232
      %v3766 = vsel %vm3750, %v3733, %v3234
      %v3767 = vsel %vm3750, %v3734, %v3236
      %v3768 = vsel %vm3750, %v3735, %v3238
      %v3769 = vsel %vm3750, %v3736, %v3240
      %v3770 = vsel %vm3750, %v3737, %v3242
      %v3771 = vsel %vm3750, %v3738, %v3244
      %v3772 = vsel %vm3750, %v3739, %v3246
      %v3773 = vsel %vm3750, %v3740, %v3248
      %v3774 = vsel %vm3750, %v3741, %v3250
      %v3775 = vsel %vm3750, %v3742, %v3252
      %v3776 = vsel %vm3750, %v3743, %v3254
      %v3777 = vsel %vm3750, %v3744, %v3256
      %v3778 = vsel %vm3750, %v3745, %v3258
      %v3779 = vsel %vm3750, %v3746, %v3260
      %v3780 = vsel %vm3750, %v3747, %v3262
      %v3781 = vsel %vm3750, %v3748, %v3264
      %v3782 = vsel %vm3750, %v3749, %v3266
      %vm3783 = vcmask 654336
      %v3784 = vsel %vm3783, %v3751, %v3332
      %v3785 = vsel %vm3783, %v3752, %v3334
      %v3786 = vsel %vm3783, %v3753, %v3336
      %v3787 = vsel %vm3783, %v3754, %v3338
      %v3788 = vsel %vm3783, %v3755, %v3340
      %v3789 = vsel %vm3783, %v3756, %v3342
      %v3790 = vsel %vm3783, %v3757, %v3344
      %v3791 = vsel %vm3783, %v3758, %v3346
      %v3792 = vsel %vm3783, %v3759, %v3348
      %v3793 = vsel %vm3783, %v3760, %v3350
      %v3794 = vsel %vm3783, %v3761, %v3352
      %v3795 = vsel %vm3783, %v3762, %v3354
      %v3796 = vsel %vm3783, %v3763, %v3356
      %v3797 = vsel %vm3783, %v3764, %v3358
      %v3798 = vsel %vm3783, %v3765, %v3360
      %v3799 = vsel %vm3783, %v3766, %v3362
      %v3800 = vsel %vm3783, %v3767, %v3364
      %v3801 = vsel %vm3783, %v3768, %v3366
      %v3802 = vsel %vm3783, %v3769, %v3368
      %v3803 = vsel %vm3783, %v3770, %v3370
      %v3804 = vsel %vm3783, %v3771, %v3372
      %v3805 = vsel %vm3783, %v3772, %v3374
      %v3806 = vsel %vm3783, %v3773, %v3376
      %v3807 = vsel %vm3783, %v3774, %v3378
      %v3808 = vsel %vm3783, %v3775, %v3380
      %v3809 = vsel %vm3783, %v3776, %v3382
      %v3810 = vsel %vm3783, %v3777, %v3384
      %v3811 = vsel %vm3783, %v3778, %v3386
      %v3812 = vsel %vm3783, %v3779, %v3388
      %v3813 = vsel %vm3783, %v3780, %v3390
      %v3814 = vsel %vm3783, %v3781, %v3392
      %v3815 = vsel %vm3783, %v3782, %v3394
      %vm3816 = vcmask 785408
      %v3817 = vsel %vm3816, %v3784, %v3460
      %v3818 = vsel %vm3816, %v3785, %v3462
      %v3819 = vsel %vm3816, %v3786, %v3464
      %v3820 = vsel %vm3816, %v3787, %v3466
      %v3821 = vsel %vm3816, %v3788, %v3468
      %v3822 = vsel %vm3816, %v3789, %v3470
      %v3823 = vsel %vm3816, %v3790, %v3472
      %v3824 = vsel %vm3816, %v3791, %v3474
      %v3825 = vsel %vm3816, %v3792, %v3476
      %v3826 = vsel %vm3816, %v3793, %v3478
      %v3827 = vsel %vm3816, %v3794, %v3480
      %v3828 = vsel %vm3816, %v3795, %v3482
      %v3829 = vsel %vm3816, %v3796, %v3484
      %v3830 = vsel %vm3816, %v3797, %v3486
      %v3831 = vsel %vm3816, %v3798, %v3488
      %v3832 = vsel %vm3816, %v3799, %v3490
      %v3833 = vsel %vm3816, %v3800, %v3492
      %v3834 = vsel %vm3816, %v3801, %v3494
      %v3835 = vsel %vm3816, %v3802, %v3496
      %v3836 = vsel %vm3816, %v3803, %v3498
      %v3837 = vsel %vm3816, %v3804, %v3500
      %v3838 = vsel %vm3816, %v3805, %v3502
      %v3839 = vsel %vm3816, %v3806, %v3504
      %v3840 = vsel %vm3816, %v3807, %v3506
      %v3841 = vsel %vm3816, %v3808, %v3508
      %v3842 = vsel %vm3816, %v3809, %v3510
      %v3843 = vsel %vm3816, %v3810, %v3512
      %v3844 = vsel %vm3816, %v3811, %v3514
      %v3845 = vsel %vm3816, %v3812, %v3516
      %v3846 = vsel %vm3816, %v3813, %v3518
      %v3847 = vsel %vm3816, %v3814, %v3520
      %v3848 = vsel %vm3816, %v3815, %v3522
      %vm3849 = vcmask 916480
      %v3850 = vsel %vm3849, %v3817, %v3558
      %v3851 = vsel %vm3849, %v3818, %v3560
      %v3852 = vsel %vm3849, %v3819, %v3562
      %v3853 = vsel %vm3849, %v3820, %v3564
      %v3854 = vsel %vm3849, %v3821, %v3566
      %v3855 = vsel %vm3849, %v3822, %v3568
      %v3856 = vsel %vm3849, %v3823, %v3570
      %v3857 = vsel %vm3849, %v3824, %v3572
      %v3858 = vsel %vm3849, %v3825, %v3574
      %v3859 = vsel %vm3849, %v3826, %v3576
      %v3860 = vsel %vm3849, %v3827, %v3578
      %v3861 = vsel %vm3849, %v3828, %v3580
      %v3862 = vsel %vm3849, %v3829, %v3582
      %v3863 = vsel %vm3849, %v3830, %v3584
      %v3864 = vsel %vm3849, %v3831, %v3586
      %v3865 = vsel %vm3849, %v3832, %v3588
      %v3866 = vsel %vm3849, %v3833, %v3590
      %v3867 = vsel %vm3849, %v3834, %v3592
      %v3868 = vsel %vm3849, %v3835, %v3594
      %v3869 = vsel %vm3849, %v3836, %v3596
      %v3870 = vsel %vm3849, %v3837, %v3598
      %v3871 = vsel %vm3849, %v3838, %v3600
      %v3872 = vsel %vm3849, %v3839, %v3602
      %v3873 = vsel %vm3849, %v3840, %v3604
      %v3874 = vsel %vm3849, %v3841, %v3606
      %v3875 = vsel %vm3849, %v3842, %v3608
      %v3876 = vsel %vm3849, %v3843, %v3610
      %v3877 = vsel %vm3849, %v3844, %v3612
      %v3878 = vsel %vm3849, %v3845, %v3614
      %v3879 = vsel %vm3849, %v3846, %v3616
      %v3880 = vsel %vm3849, %v3847, %v3618
      %v3881 = vsel %vm3849, %v3848, %v3620
      %v3882 = vld [vmem:[%s3] sm:$0xff]
      %v3883 = vld [vmem:[%s3 + $0x8] sm:$0xff]
      %v3884 = vld [vmem:[%s3 + $0x10] sm:$0xff]
      %v3885 = vld [vmem:[%s3 + $0x18] sm:$0xff]
      %v3886 = vld [vmem:[%s3 + $0x20] sm:$0xff]
      %v3887 = vld [vmem:[%s3 + $0x28] sm:$0xff]
      %v3888 = vld [vmem:[%s3 + $0x30] sm:$0xff]
      %v3889 = vld [vmem:[%s3 + $0x38] sm:$0xff]
      %v3890 = vld [vmem:[%s3 + $0x40] sm:$0xff]
      %v3891 = vld [vmem:[%s3 + $0x48] sm:$0xff]
      %v3892 = vld [vmem:[%s3 + $0x50] sm:$0xff]
      %v3893 = vld [vmem:[%s3 + $0x58] sm:$0xff]
      %v3894 = vld [vmem:[%s3 + $0x60] sm:$0xff]
      %v3895 = vld [vmem:[%s3 + $0x68] sm:$0xff]
      %v3896 = vld [vmem:[%s3 + $0x70] sm:$0xff]
      %v3897 = vld [vmem:[%s3 + $0x78] sm:$0xff]
      %v3898 = vld [vmem:[%s3 + $0x80] sm:$0xff]
      %v3899 = vld [vmem:[%s3 + $0x88] sm:$0xff]
      %v3900 = vld [vmem:[%s4] sm:$0x1]
      %v3902 = vlaneseq
      %v3903 = vshrl.u32 %v3902, 7
      %v3904 = vsub.s32 0, %v3903
      %v3905 = vrot.slane %v3900, %v3904
      %v3908 = vsel %vm1646, %v2785, 0
      %v3911 = vsel %vm1646, %v2786, 0
      %v3914 = vsel %vm1646, %v2787, 0
      %v3917 = vsel %vm1646, %v2788, 0
      %v3920 = vsel %vm1646, %v2789, 0
      %v3923 = vsel %vm1646, %v2790, 0
      %v3926 = vsel %vm1646, %v2791, 0
      %v3929 = vsel %vm1646, %v2792, 0
      %v3932 = vsel %vm1646, %v2793, 0
      %v3935 = vsel %vm1646, %v2794, 0
      %v3938 = vsel %vm1646, %v2795, 0
      %v3941 = vsel %vm1646, %v2796, 0
      %v3944 = vsel %vm1646, %v2797, 0
      %v3947 = vsel %vm1646, %v2798, 0
      %v3950 = vsel %vm1646, %v2799, 0
      %v3953 = vsel %vm1646, %v2800, 0
      %v3956 = vsel %vm1646, %v2801, 0
      %v3959 = vsel %vm1646, %v2802, 0
      %v3962 = vsel %vm1646, %v2803, 0
      %v3965 = vsel %vm1646, %v2804, 0
      %v3968 = vsel %vm1646, %v2805, 0
      %v3971 = vsel %vm1646, %v2806, 0
      %v3974 = vsel %vm1646, %v2807, 0
      %v3977 = vsel %vm1646, %v2808, 0
      %v3980 = vsel %vm1646, %v2809, 0
      %v3983 = vsel %vm1646, %v2810, 0
      %v3986 = vsel %vm1646, %v2811, 0
      %v3989 = vsel %vm1646, %v2812, 0
      %v3992 = vsel %vm1646, %v2813, 0
      %v3995 = vsel %vm1646, %v2814, 0
      %v3998 = vsel %vm1646, %v2815, 0
      %v4001 = vsel %vm1646, %v2816, 0
      %4003 = vmatprep.subr.mxu0 0.0
      %4004 = vmatpush1.msra.mxu0 %v3882
      %4005 = vmatprep.subr.mxu0 0.0
      %4006 = vmatpush1.msra.mxu0 %v3883
      %4007 = vmatprep.subr.mxu0 0.0
      %4008 = vmatpush1.msra.mxu0 %v3884
      %4009 = vmatprep.subr.mxu0 0.0
      %4010 = vmatpush1.msra.mxu0 %v3885
      %4011 = vmatprep.subr.mxu0 0.0
      %4012 = vmatpush1.msra.mxu0 %v3886
      %4013 = vmatprep.subr.mxu0 0.0
      %4014 = vmatpush1.msra.mxu0 %v3887
      %4015 = vmatprep.subr.mxu0 0.0
      %4016 = vmatpush1.msra.mxu0 %v3888
      %4017 = vmatprep.subr.mxu0 0.0
      %4018 = vmatpush1.msra.mxu0 %v3889
      %4019 = vmatprep.subr.mxu0 0.0
      %4020 = vmatpush1.msra.mxu0 %v3890
      %4021 = vmatprep.subr.mxu0 0.0
      %4022 = vmatpush1.msra.mxu0 %v3891
      %4023 = vmatprep.subr.mxu0 0.0
      %4024 = vmatpush1.msra.mxu0 %v3892
      %4025 = vmatprep.subr.mxu0 0.0
      %4026 = vmatpush1.msra.mxu0 %v3893
      %4027 = vmatprep.subr.mxu0 0.0
      %4028 = vmatpush1.msra.mxu0 %v3894
      %4029 = vmatprep.subr.mxu0 0.0
      %4030 = vmatpush1.msra.mxu0 %v3895
      %4031 = vmatprep.subr.mxu0 0.0
      %4032 = vmatpush1.msra.mxu0 %v3896
      %4033 = vmatprep.subr.mxu0 0.0
      %4034 = vmatpush1.msra.mxu0 %v3897
      %4035 = vmatprep.subr.mxu0 0.0
      %4036 = vmatpush1.msra.mxu0 %v3898
      %4037 = vmatprep.subr.mxu0 0.0
      %4038 = vmatpush1.msra.mxu0 %v3899
      %4039 = vmatprep.subr.mxu0 0.0
      %4040 = vmatpush1.msra.mxu0 0.0
      %4041 = vmatprep.subr.mxu0 0.0
      %4042 = vmatpush1.msra.mxu0 0.0
      %4043 = vmatprep.subr.mxu0 0.0
      %4044 = vmatpush1.msra.mxu0 0.0
      %4045 = vmatprep.subr.mxu0 0.0
      %4046 = vmatpush1.msra.mxu0 0.0
      %4047 = vmatprep.subr.mxu0 0.0
      %4048 = vmatpush1.msra.mxu0 0.0
      %4049 = vmatprep.subr.mxu0 0.0
      %4050 = vmatpush1.msra.mxu0 0.0
      %4051 = vmatprep.subr.mxu0 0.0
      %4052 = vmatpush1.msra.mxu0 0.0
      %4053 = vmatprep.subr.mxu0 0.0
      %4054 = vmatpush1.msra.mxu0 0.0
      %4055 = vmatprep.subr.mxu0 0.0
      %4056 = vmatpush1.msra.mxu0 0.0
      %4057 = vmatprep.subr.mxu0 0.0
      %4058 = vmatpush1.msra.mxu0 0.0
      %4059 = vmatprep.subr.mxu0 0.0
      %4060 = vmatpush1.msra.mxu0 0.0
      %4061 = vmatprep.subr.mxu0 0.0
      %4062 = vmatpush1.msra.mxu0 0.0
      %4063 = vmatprep.subr.mxu0 0.0
      %4064 = vmatpush1.msra.mxu0 0.0
      %4065 = vmatprep.subr.mxu0 0.0
      %4066 = vmatpush1.msra.mxu0 0.0
      %4067 = vmatprep.mubr.f32.mxu0 %v3908
      %4068 = vmatmul.mubr.f32.gmra.mrb[0].mxu0 %v3850
      %v4069 = vpop.f32.mrb[0].mxu0
      %v4070 = vadd.f32 %v3905, %v4069
      %v4071 = vpop.f32.mrb[0].mxu0
      %4072 = vmatprep.mubr.f32.mxu0 %v3911
      %4073 = vmatmul.mubr.f32.gmra.mrb[0].mxu0 %v3851
      %v4074 = vpop.f32.mrb[0].mxu0
      %v4075 = vadd.f32 %v3905, %v4074
      %v4076 = vpop.f32.mrb[0].mxu0
      %4077 = vmatprep.mubr.f32.mxu0 %v3914
      %4078 = vmatmul.mubr.f32.gmra.mrb[0].mxu0 %v3852
      %v4079 = vpop.f32.mrb[0].mxu0
      %v4080 = vadd.f32 %v3905, %v4079
      %v4081 = vpop.f32.mrb[0].mxu0
      %4082 = vmatprep.mubr.f32.mxu0 %v3917
      %4083 = vmatmul.mubr.f32.gmra.mrb[0].mxu0 %v3853
      %v4084 = vpop.f32.mrb[0].mxu0
      %v4085 = vadd.f32 %v3905, %v4084
      %v4086 = vpop.f32.mrb[0].mxu0
      %4087 = vmatprep.mubr.f32.mxu0 %v3920
      %4088 = vmatmul.mubr.f32.gmra.mrb[0].mxu0 %v3854
      %v4089 = vpop.f32.mrb[0].mxu0
      %v4090 = vadd.f32 %v3905, %v4089
      %v4091 = vpop.f32.mrb[0].mxu0
      %4092 = vmatprep.mubr.f32.mxu0 %v3923
      %4093 = vmatmul.mubr.f32.gmra.mrb[0].mxu0 %v3855
      %v4094 = vpop.f32.mrb[0].mxu0
      %v4095 = vadd.f32 %v3905, %v4094
      %v4096 = vpop.f32.mrb[0].mxu0
      %4097 = vmatprep.mubr.f32.mxu0 %v3926
      %4098 = vmatmul.mubr.f32.gmra.mrb[0].mxu0 %v3856
      %v4099 = vpop.f32.mrb[0].mxu0
      %v4100 = vadd.f32 %v3905, %v4099
      %v4101 = vpop.f32.mrb[0].mxu0
      %4102 = vmatprep.mubr.f32.mxu0 %v3929
      %4103 = vmatmul.mubr.f32.gmra.mrb[0].mxu0 %v3857
      %v4104 = vpop.f32.mrb[0].mxu0
      %v4105 = vadd.f32 %v3905, %v4104
      %v4106 = vpop.f32.mrb[0].mxu0
      %4107 = vmatprep.mubr.f32.mxu0 %v3932
      %4108 = vmatmul.mubr.f32.gmra.mrb[0].mxu0 %v3858
      %v4109 = vpop.f32.mrb[0].mxu0
      %v4110 = vadd.f32 %v3905, %v4109
      %v4111 = vpop.f32.mrb[0].mxu0
      %4112 = vmatprep.mubr.f32.mxu0 %v3935
      %4113 = vmatmul.mubr.f32.gmra.mrb[0].mxu0 %v3859
      %v4114 = vpop.f32.mrb[0].mxu0
      %v4115 = vadd.f32 %v3905, %v4114
      %v4116 = vpop.f32.mrb[0].mxu0
      %4117 = vmatprep.mubr.f32.mxu0 %v3938
      %4118 = vmatmul.mubr.f32.gmra.mrb[0].mxu0 %v3860
      %v4119 = vpop.f32.mrb[0].mxu0
      %v4120 = vadd.f32 %v3905, %v4119
      %v4121 = vpop.f32.mrb[0].mxu0
      %4122 = vmatprep.mubr.f32.mxu0 %v3941
      %4123 = vmatmul.mubr.f32.gmra.mrb[0].mxu0 %v3861
      %v4124 = vpop.f32.mrb[0].mxu0
      %v4125 = vadd.f32 %v3905, %v4124
      %v4126 = vpop.f32.mrb[0].mxu0
      %4127 = vmatprep.mubr.f32.mxu0 %v3944
      %4128 = vmatmul.mubr.f32.gmra.mrb[0].mxu0 %v3862
      %v4129 = vpop.f32.mrb[0].mxu0
      %v4130 = vadd.f32 %v3905, %v4129
      %v4131 = vpop.f32.mrb[0].mxu0
      %4132 = vmatprep.mubr.f32.mxu0 %v3947
      %4133 = vmatmul.mubr.f32.gmra.mrb[0].mxu0 %v3863
      %v4134 = vpop.f32.mrb[0].mxu0
      %v4135 = vadd.f32 %v3905, %v4134
      %v4136 = vpop.f32.mrb[0].mxu0
      %4137 = vmatprep.mubr.f32.mxu0 %v3950
      %4138 = vmatmul.mubr.f32.gmra.mrb[0].mxu0 %v3864
      %v4139 = vpop.f32.mrb[0].mxu0
      %v4140 = vadd.f32 %v3905, %v4139
      %v4141 = vpop.f32.mrb[0].mxu0
      %4142 = vmatprep.mubr.f32.mxu0 %v3953
      %4143 = vmatmul.mubr.f32.gmra.mrb[0].mxu0 %v3865
      %v4144 = vpop.f32.mrb[0].mxu0
      %v4145 = vadd.f32 %v3905, %v4144
      %v4146 = vpop.f32.mrb[0].mxu0
      %4147 = vmatprep.mubr.f32.mxu0 %v3956
      %4148 = vmatmul.mubr.f32.gmra.mrb[0].mxu0 %v3866
      %v4149 = vpop.f32.mrb[0].mxu0
      %v4150 = vadd.f32 %v3905, %v4149
      %v4151 = vpop.f32.mrb[0].mxu0
      %4152 = vmatprep.mubr.f32.mxu0 %v3959
      %4153 = vmatmul.mubr.f32.gmra.mrb[0].mxu0 %v3867
      %v4154 = vpop.f32.mrb[0].mxu0
      %v4155 = vadd.f32 %v3905, %v4154
      %v4156 = vpop.f32.mrb[0].mxu0
      %4157 = vmatprep.mubr.f32.mxu0 %v3962
      %4158 = vmatmul.mubr.f32.gmra.mrb[0].mxu0 %v3868
      %v4159 = vpop.f32.mrb[0].mxu0
      %v4160 = vadd.f32 %v3905, %v4159
      %v4161 = vpop.f32.mrb[0].mxu0
      %4162 = vmatprep.mubr.f32.mxu0 %v3965
      %4163 = vmatmul.mubr.f32.gmra.mrb[0].mxu0 %v3869
      %v4164 = vpop.f32.mrb[0].mxu0
      %v4165 = vadd.f32 %v3905, %v4164
      %v4166 = vpop.f32.mrb[0].mxu0
      %4167 = vmatprep.mubr.f32.mxu0 %v3968
      %4168 = vmatmul.mubr.f32.gmra.mrb[0].mxu0 %v3870
      %v4169 = vpop.f32.mrb[0].mxu0
      %v4170 = vadd.f32 %v3905, %v4169
      %v4171 = vpop.f32.mrb[0].mxu0
      %4172 = vmatprep.mubr.f32.mxu0 %v3971
      %4173 = vmatmul.mubr.f32.gmra.mrb[0].mxu0 %v3871
      %v4174 = vpop.f32.mrb[0].mxu0
      %v4175 = vadd.f32 %v3905, %v4174
      %v4176 = vpop.f32.mrb[0].mxu0
      %4177 = vmatprep.mubr.f32.mxu0 %v3974
      %4178 = vmatmul.mubr.f32.gmra.mrb[0].mxu0 %v3872
      %v4179 = vpop.f32.mrb[0].mxu0
      %v4180 = vadd.f32 %v3905, %v4179
      %v4181 = vpop.f32.mrb[0].mxu0
      %4182 = vmatprep.mubr.f32.mxu0 %v3977
      %4183 = vmatmul.mubr.f32.gmra.mrb[0].mxu0 %v3873
      %v4184 = vpop.f32.mrb[0].mxu0
      %v4185 = vadd.f32 %v3905, %v4184
      %v4186 = vpop.f32.mrb[0].mxu0
      %4187 = vmatprep.mubr.f32.mxu0 %v3980
      %4188 = vmatmul.mubr.f32.gmra.mrb[0].mxu0 %v3874
      %v4189 = vpop.f32.mrb[0].mxu0
      %v4190 = vadd.f32 %v3905, %v4189
      %v4191 = vpop.f32.mrb[0].mxu0
      %4192 = vmatprep.mubr.f32.mxu0 %v3983
      %4193 = vmatmul.mubr.f32.gmra.mrb[0].mxu0 %v3875
      %v4194 = vpop.f32.mrb[0].mxu0
      %v4195 = vadd.f32 %v3905, %v4194
      %v4196 = vpop.f32.mrb[0].mxu0
      %4197 = vmatprep.mubr.f32.mxu0 %v3986
      %4198 = vmatmul.mubr.f32.gmra.mrb[0].mxu0 %v3876
      %v4199 = vpop.f32.mrb[0].mxu0
      %v4200 = vadd.f32 %v3905, %v4199
      %v4201 = vpop.f32.mrb[0].mxu0
      %4202 = vmatprep.mubr.f32.mxu0 %v3989
      %4203 = vmatmul.mubr.f32.gmra.mrb[0].mxu0 %v3877
      %v4204 = vpop.f32.mrb[0].mxu0
      %v4205 = vadd.f32 %v3905, %v4204
      %v4206 = vpop.f32.mrb[0].mxu0
      %4207 = vmatprep.mubr.f32.mxu0 %v3992
      %4208 = vmatmul.mubr.f32.gmra.mrb[0].mxu0 %v3878
      %v4209 = vpop.f32.mrb[0].mxu0
      %v4210 = vadd.f32 %v3905, %v4209
      %v4211 = vpop.f32.mrb[0].mxu0
      %4212 = vmatprep.mubr.f32.mxu0 %v3995
      %4213 = vmatmul.mubr.f32.gmra.mrb[0].mxu0 %v3879
      %v4214 = vpop.f32.mrb[0].mxu0
      %v4215 = vadd.f32 %v3905, %v4214
      %v4216 = vpop.f32.mrb[0].mxu0
      %4217 = vmatprep.mubr.f32.mxu0 %v3998
      %4218 = vmatmul.mubr.f32.gmra.mrb[0].mxu0 %v3880
      %v4219 = vpop.f32.mrb[0].mxu0
      %v4220 = vadd.f32 %v3905, %v4219
      %v4221 = vpop.f32.mrb[0].mxu0
      %4222 = vmatprep.mubr.f32.mxu0 %v4001
      %4223 = vmatmul.mubr.f32.gmra.mrb[0].mxu0 %v3881
      %v4224 = vpop.f32.mrb[0].mxu0
      %v4225 = vadd.f32 %v3905, %v4224
      %v4226 = vpop.f32.mrb[0].mxu0
      %4227 = vdwg.mxu0
      %v4228 = vmax.f32 %v4070, 0.0
      %v4229 = vmax.f32 %v4075, 0.0
      %v4230 = vmax.f32 %v4080, 0.0
      %v4231 = vmax.f32 %v4085, 0.0
      %v4232 = vmax.f32 %v4090, 0.0
      %v4233 = vmax.f32 %v4095, 0.0
      %v4234 = vmax.f32 %v4100, 0.0
      %v4235 = vmax.f32 %v4105, 0.0
      %v4236 = vmax.f32 %v4110, 0.0
      %v4237 = vmax.f32 %v4115, 0.0
      %v4238 = vmax.f32 %v4120, 0.0
      %v4239 = vmax.f32 %v4125, 0.0
      %v4240 = vmax.f32 %v4130, 0.0
      %v4241 = vmax.f32 %v4135, 0.0
      %v4242 = vmax.f32 %v4140, 0.0
      %v4243 = vmax.f32 %v4145, 0.0
      %v4244 = vmax.f32 %v4150, 0.0
      %v4245 = vmax.f32 %v4155, 0.0
      %v4246 = vmax.f32 %v4160, 0.0
      %v4247 = vmax.f32 %v4165, 0.0
      %v4248 = vmax.f32 %v4170, 0.0
      %v4249 = vmax.f32 %v4175, 0.0
      %v4250 = vmax.f32 %v4180, 0.0
      %v4251 = vmax.f32 %v4185, 0.0
      %v4252 = vmax.f32 %v4190, 0.0
      %v4253 = vmax.f32 %v4195, 0.0
      %v4254 = vmax.f32 %v4200, 0.0
      %v4255 = vmax.f32 %v4205, 0.0
      %v4256 = vmax.f32 %v4210, 0.0
      %v4257 = vmax.f32 %v4215, 0.0
      %v4258 = vmax.f32 %v4220, 0.0
      %v4259 = vmax.f32 %v4225, 0.0
      %v4260 = vmax.f32 %v4228, %v4230
      %v4261 = vmax.f32 %v4229, %v4231
      %v4262 = vmax.f32 %v4232, %v4234
      %v4263 = vmax.f32 %v4233, %v4235
      %v4264 = vmax.f32 %v4236, %v4238
      %v4265 = vmax.f32 %v4237, %v4239
      %v4266 = vmax.f32 %v4240, %v4242
      %v4267 = vmax.f32 %v4241, %v4243
      %v4268 = vmax.f32 %v4244, %v4246
      %v4269 = vmax.f32 %v4245, %v4247
      %v4270 = vmax.f32 %v4248, %v4250
      %v4271 = vmax.f32 %v4249, %v4251
      %v4272 = vmax.f32 %v4252, %v4254
      %v4273 = vmax.f32 %v4253, %v4255
      %v4274 = vmax.f32 %v4256, %v4258
      %v4275 = vmax.f32 %v4257, %v4259
      %4276 = vst.msk [vmem:[#allocation4] sm:$0xff] %vm364, %v4260
      %4277 = vst.msk [vmem:[#allocation4 + $0x8] sm:$0xff] %vm364, %v4261
      %4278 = vst.msk [vmem:[#allocation4 + $0x10] sm:$0xff] %vm364, %v4262
      %4279 = vst.msk [vmem:[#allocation4 + $0x18] sm:$0xff] %vm364, %v4263
      %4280 = vst.msk [vmem:[#allocation4 + $0x20] sm:$0xff] %vm364, %v4264
      %4281 = vst.msk [vmem:[#allocation4 + $0x28] sm:$0xff] %vm364, %v4265
      %4282 = vst.msk [vmem:[#allocation4 + $0x30] sm:$0xff] %vm364, %v4266
      %4283 = vst.msk [vmem:[#allocation4 + $0x38] sm:$0xff] %vm364, %v4267
      %4284 = vst.msk [vmem:[#allocation4 + $0x40] sm:$0xff] %vm364, %v4268
      %4285 = vst.msk [vmem:[#allocation4 + $0x48] sm:$0xff] %vm364, %v4269
      %4286 = vst.msk [vmem:[#allocation4 + $0x50] sm:$0xff] %vm364, %v4270
      %4287 = vst.msk [vmem:[#allocation4 + $0x58] sm:$0xff] %vm364, %v4271
      %4288 = vst.msk [vmem:[#allocation4 + $0x60] sm:$0xff] %vm364, %v4272
      %4289 = vst.msk [vmem:[#allocation4 + $0x68] sm:$0xff] %vm364, %v4273
      %4290 = vst.msk [vmem:[#allocation4 + $0x70] sm:$0xff] %vm364, %v4274
      %4291 = vst.msk [vmem:[#allocation4 + $0x78] sm:$0xff] %vm364, %v4275
      %v4292 = vld [vmem:[#allocation4] ss:$2 sm:$0xff]
      %s4293 = scalar_lea.vmem [#allocation4], 16
      %v4294 = vld [vmem:[%s4293] ss:$2 sm:$0xff]
      %s4295 = scalar_lea.vmem [#allocation4], 32
      %v4296 = vld [vmem:[%s4295] ss:$2 sm:$0xff]
      %s4297 = scalar_lea.vmem [#allocation4], 48
      %v4298 = vld [vmem:[%s4297] ss:$2 sm:$0xff]
      %s4299 = scalar_lea.vmem [#allocation4], 64
      %v4300 = vld [vmem:[%s4299] ss:$2 sm:$0xff]
      %s4301 = scalar_lea.vmem [#allocation4], 80
      %v4302 = vld [vmem:[%s4301] ss:$2 sm:$0xff]
      %s4303 = scalar_lea.vmem [#allocation4], 96
      %v4304 = vld [vmem:[%s4303] ss:$2 sm:$0xff]
      %s4305 = scalar_lea.vmem [#allocation4], 112
      %v4306 = vld [vmem:[%s4305] ss:$2 sm:$0xff]
      %s4307 = scalar_lea.vmem [#allocation4], 1
      %v4308 = vld [vmem:[%s4307] ss:$2 sm:$0xff]
      %s4309 = scalar_lea.vmem [#allocation4], 17
      %v4310 = vld [vmem:[%s4309] ss:$2 sm:$0xff]
      %s4311 = scalar_lea.vmem [#allocation4], 33
      %v4312 = vld [vmem:[%s4311] ss:$2 sm:$0xff]
      %s4313 = scalar_lea.vmem [#allocation4], 49
      %v4314 = vld [vmem:[%s4313] ss:$2 sm:$0xff]
      %s4315 = scalar_lea.vmem [#allocation4], 65
      %v4316 = vld [vmem:[%s4315] ss:$2 sm:$0xff]
      %s4317 = scalar_lea.vmem [#allocation4], 81
      %v4318 = vld [vmem:[%s4317] ss:$2 sm:$0xff]
      %s4319 = scalar_lea.vmem [#allocation4], 97
      %v4320 = vld [vmem:[%s4319] ss:$2 sm:$0xff]
      %s4321 = scalar_lea.vmem [#allocation4], 113
      %v4322 = vld [vmem:[%s4321] ss:$2 sm:$0xff]
      %v4323 = vmax.f32 %v4292, %v4308
      %v4324 = vmax.f32 %v4294, %v4310
      %v4325 = vmax.f32 %v4296, %v4312
      %v4326 = vmax.f32 %v4298, %v4314
      %v4327 = vmax.f32 %v4300, %v4316
      %v4328 = vmax.f32 %v4302, %v4318
      %v4329 = vmax.f32 %v4304, %v4320
      %v4330 = vmax.f32 %v4306, %v4322
      %4331 = vst.msk [vmem:[%s224] sm:$0xff] %vm364, %v4323
      %4332 = vst.msk [vmem:[%s224 + $0x8] sm:$0xff] %vm364, %v4324
      %4333 = vst.msk [vmem:[%s224 + $0x10] sm:$0xff] %vm364, %v4325
      %4334 = vst.msk [vmem:[%s224 + $0x18] sm:$0xff] %vm364, %v4326
      %4335 = vst.msk [vmem:[%s224 + $0x20] sm:$0xff] %vm364, %v4327
      %4336 = vst.msk [vmem:[%s224 + $0x28] sm:$0xff] %vm364, %v4328
      %4337 = vst.msk [vmem:[%s224 + $0x30] sm:$0xff] %vm364, %v4329
      %4338 = vst.msk [vmem:[%s224 + $0x38] sm:$0xff] %vm364, %v4330
      %p4339 = scmp.lt.s32.totalorder %s16, 1
      %s4340 = scalar_select %p4339, %s16, 1
      %s4341 = smul.addr %s4340, 8
      %s4342 = smul.addr %s4341, 8
      %s4343 = scalar_lea.vmem %s5, %s4342
      // Predicated region
      $region41: #{conv_model_forward.2} parent=39 // pred_check
        %p4344 = pneg %p144
      $region42: #{conv_model_forward.2} parent=39 // pred_check_branch
        %4346 = sbr.rel (%p4344) target = $region44
      $region43: #{conv_model_forward.2} parent=39 // pred_region
        _
      $region44: #{conv_model_forward.2} parent=39 // pred_fallthru
        _
    $region40: #{conv_model_forward.2} parent=5 // pred_fallthru
      _
    %p4347 = scmp.le.s32.totalorder 2, %s11
    // Predicated region
    $region45: #{conv_model_forward.2} parent=5 // pred_check
      %p4348 = pneg %p4347
    $region46: #{conv_model_forward.2} parent=5 // pred_check_branch
      %4350 = sbr.rel (%p4348) target = $region48
    $region47: #{conv_model_forward.2} parent=5 // pred_region
      %s4351 = ssub.s32 %s11, 2
      // Predicated region
      $region49: #{conv_model_forward.2} parent=47 // pred_check
        %p4352 = pneg %p150
      $region50: #{conv_model_forward.2} parent=47 // pred_check_branch
        %4354 = sbr.rel (%p4352) target = $region52
      $region51: #{conv_model_forward.2} parent=47 // pred_region
        %p4355 = scmp.lt.s32.totalorder %s17, 1
        %s4356 = scalar_select %p4355, %s17, 1
        %s4357 = smul.addr %s4356, 8
        %s4358 = smul.addr %s4357, 8
        %s4359 = scalar_lea.vmem %s5, %s4358
      $region52: #{conv_model_forward.2} parent=47 // pred_fallthru
        _
    $region48: #{conv_model_forward.2} parent=5 // pred_fallthru
      _
  $region6: #{conv_model_forward.2} parent=0 // loop_footer
    %s15 = sadd.s32 1, %s11
  $region7: #{conv_model_forward.2} parent=0 // loop_footer_branch
    %10 = sbr.rel target = $region3
  $region8: #{conv_model_forward.2} parent=0 // loop_exit
    _

</llo_original>
